<compile_context>
chip_gen: v5e
topology: v5e:2x2
jax: 0.10.0
libtpu: 0.0.40
codegen_flags: <defaults>
</compile_context>

<pallas_src>
import jax
import jax.numpy as jnp
import numpy as np
from jax.experimental import pallas as pl
from jax.experimental.pallas import tpu as pltpu

K = 5        # conv kernel size
S = 2        # conv stride
N_HID = 128  # fc1 width
N_PAD = 128  # lane-dense padded width of the kernel output (real logits = 3)


# ----------------------------- Pallas kernel --------------------------------

def _const_index_map(ndim):
    zeros = (0,) * ndim
    return lambda b: zeros


def _make_fused_kernel(n_layers, oh_last):
    """Kernel processing ONE image per grid step; everything stays in VMEM."""

    def kernel(*refs):
        # refs: x, speed, (selh, dmat, brow) * n_layers, w1blk, w1sp, b1, w2, b2, out
        x_ref, sp_ref = refs[0], refs[1]
        layer_refs = refs[2:2 + 3 * n_layers]
        w1blk_ref, w1sp_ref, b1_ref, w2_ref, b2_ref = refs[2 + 3 * n_layers:-1]
        o_ref = refs[-1]

        act = x_ref[0]                       # (H1, W1*C1), compute dtype
        cdt = act.dtype

        # ---- conv stack: each layer = 10 dense MXU matmuls, f32 accumulation ----
        for l in range(n_layers):
            selh_ref = layer_refs[3 * l + 0]     # (5, OH, H)
            dmat_ref = layer_refs[3 * l + 1]     # (5, W*Cin, OW*Cout)
            brow_ref = layer_refs[3 * l + 2]     # (1, OW*Cout) f32
            acc = None
            for kh in range(K):
                # Y_kh[oh, (w,ci)] = x[2*oh+kh, w, ci]   (exact 0/1 selection)
                y = jnp.dot(selh_ref[kh], act,
                            preferred_element_type=jnp.float32).astype(cdt)
                # kw-tap selection + conv weights, folded into one dense matrix
                t = jnp.dot(y, dmat_ref[kh], preferred_element_type=jnp.float32)
                acc = t if acc is None else acc + t
            act = jnp.maximum(acc + brow_ref[...], 0.0).astype(cdt)

        # ---- head: PyTorch flatten folded into w1blk row order; speed = rank-1 ----
        h = b1_ref[...] + sp_ref[0] * w1sp_ref[...]            # (1, 128) f32
        for r in range(oh_last):
            h = h + jnp.dot(act[r:r + 1, :], w1blk_ref[r],
                            preferred_element_type=jnp.float32)
        h = jnp.maximum(h, 0.0).astype(cdt)
        out = jnp.dot(h, w2_ref[...], preferred_element_type=jnp.float32)
        o_ref[0] = out + b2_ref[...]                           # (1, N_PAD) f32

    return kernel


# --------------------------- parameter preparation --------------------------

def init_params(key, img_size=(3, 40, 40)):
    """Synthetic parameters matching BCPolicy's shapes.

    Conv weights are stored as (kh, kw, cin, cout).  NOTE: real PyTorch conv
    weights are (cout, cin, kh, kw) and must be permuted (2, 3, 1, 0) before use.
    fc weights are stored as (in, out); fc1 input rows follow PyTorch's
    channel-major Flatten order (co, oh, ow), with the speed row last.
    """
    C, H, W = img_size
    chans = [C, 16, 32, 64]
    keys = jax.random.split(key, 10)
    params = {}
    h, w = H, W
    for i in range(3):
        cin, cout = chans[i], chans[i + 1]
        wi = jax.random.normal(keys[2 * i], (K, K, cin, cout), jnp.float32)
        params[f"conv{i}_w"] = wi / np.sqrt(K * K * cin)
        params[f"conv{i}_b"] = 0.01 * jax.random.normal(keys[2 * i + 1], (cout,),
                                                        jnp.float32)
        h = (h - K) // S + 1
        w = (w - K) // S + 1
    n_flat = chans[-1] * h * w
    params["fc1_w"] = (jax.random.normal(keys[6], (n_flat + 1, N_HID), jnp.float32)
                       / np.sqrt(n_flat + 1))
    params["fc1_b"] = 0.01 * jax.random.normal(keys[7], (N_HID,), jnp.float32)
    params["fc2_w"] = (jax.random.normal(keys[8], (N_HID, 3), jnp.float32)
                       / np.sqrt(N_HID))
    params["fc2_b"] = 0.01 * jax.random.normal(keys[9], (3,), jnp.float32)
    return params


def prepare_kernel_params(params, img_size=(3, 40, 40),
                          compute_dtype=jnp.bfloat16):
    """One-time restructuring of the weights into kernel-ready dense matrices."""
    C, H, W = img_size
    kp = {"dtype": compute_dtype}
    dims = []
    h, w, cin = H, W, C
    flops = 0
    for i in range(3):
        w4 = np.asarray(params[f"conv{i}_w"], np.float32)   # (5, 5, cin, cout)
        b = np.asarray(params[f"conv{i}_b"], np.float32)
        cout = w4.shape[-1]
        oh = (h - K) // S + 1
        ow = (w - K) // S + 1
        assert oh > 0 and ow > 0, "image too small for three 5x5/s2 convs"

        selh = np.zeros((K, oh, h), np.float32)
        for kh in range(K):
            selh[kh, np.arange(oh), S * np.arange(oh) + kh] = 1.0

        dmat = np.zeros((K, w * cin, ow * cout), np.float32)
        for kh in range(K):
            for ow_i in range(ow):
                for kw in range(K):
                    wc = S * ow_i + kw
                    dmat[kh, wc * cin:(wc + 1) * cin,
                         ow_i * cout:(ow_i + 1) * cout] = w4[kh, kw]

        kp[f"selh{i}"] = jnp.asarray(selh, compute_dtype)
        kp[f"dmat{i}"] = jnp.asarray(dmat, compute_dtype)
        kp[f"brow{i}"] = jnp.asarray(np.tile(b, ow).reshape(1, ow * cout),
                                     jnp.float32)
        dims.append((h, w, cin, oh, ow, cout))
        flops += K * (2 * oh * h * (w * cin) + 2 * oh * (w * cin) * (ow * cout))
        h, w, cin = oh, ow, cout

    oh3, ow3, c3 = h, w, cin
    n_flat = oh3 * ow3 * c3
    w1 = np.asarray(params["fc1_w"], np.float32)             # (n_flat+1, 128)
    # fold PyTorch channel-major flatten (co, oh, ow) into per-output-row blocks
    idx = np.empty((oh3, ow3 * c3), np.int64)
    for oh_i in range(oh3):
        for ow_i in range(ow3):
            for co in range(c3):
                idx[oh_i, ow_i * c3 + co] = co * oh3 * ow3 + oh_i * ow3 + ow_i
    kp["w1blk"] = jnp.asarray(w1[:n_flat][idx], compute_dtype)     # (oh3, ow3*c3, 128)
    kp["w1sp"] = jnp.asarray(w1[n_flat:n_flat + 1, :], jnp.float32)
    kp["b1row"] = jnp.asarray(np.asarray(params["fc1_b"],
                                         np.float32).reshape(1, N_HID), jnp.float32)

    w2 = np.asarray(params["fc2_w"], np.float32)             # (128, 3)
    n_out = w2.shape[1]
    w2p = np.zeros((N_HID, N_PAD), np.float32)
    w2p[:, :n_out] = w2
    b2p = np.zeros((1, N_PAD), np.float32)
    b2p[0, :n_out] = np.asarray(params["fc2_b"], np.float32)
    kp["w2pad"] = jnp.asarray(w2p, compute_dtype)
    kp["b2row"] = jnp.asarray(b2p, jnp.float32)

    flops += 2 * oh3 * (ow3 * c3) * N_HID + 2 * N_HID + 2 * N_HID * N_PAD
    kp["layer_dims"] = tuple(dims)
    kp["n_out"] = int(n_out)
    kp["flops_per_image"] = int(flops)
    return kp


# ------------------------------ forward pass ---------------------------------

def bc_policy_forward(kp, image_nchw, speed):
    """Fused Pallas forward; kp comes from prepare_kernel_params()."""
    cdt = kp["dtype"]
    dims = kp["layer_dims"]
    h1, w1, c1 = dims[0][0], dims[0][1], dims[0][2]
    oh3 = dims[-1][3]
    B = image_nchw.shape[0]

    # NCHW -> NHWC -> (B, H, W*C): columns ordered (w, ci) to match D matrices.
    x = jnp.transpose(image_nchw, (0, 2, 3, 1)).reshape(B, h1, w1 * c1).astype(cdt)
    sp = speed.reshape(B, 1, 1).astype(jnp.float32)

    operands = [x, sp]
    in_specs = [
        pl.BlockSpec((1, h1, w1 * c1), lambda b: (b, 0, 0)),
        pl.BlockSpec((1, 1, 1), lambda b: (b, 0, 0)),
    ]
    weight_names = []
    for i in range(len(dims)):
        weight_names += [f"selh{i}", f"dmat{i}", f"brow{i}"]
    weight_names += ["w1blk", "w1sp", "b1row", "w2pad", "b2row"]
    for name in weight_names:
        arr = kp[name]
        operands.append(arr)
        # full-array blocks with constant index map -> stay VMEM-resident
        in_specs.append(pl.BlockSpec(arr.shape, _const_index_map(arr.ndim)))

    in_bytes = sum(int(np.prod(a.shape)) * a.dtype.itemsize for a in operands)
    cost = pl.CostEstimate(flops=int(kp["flops_per_image"]) * B,
                           transcendentals=0,
                           bytes_accessed=in_bytes + B * N_PAD * 4)

    out = pl.pallas_call(
        _make_fused_kernel(len(dims), oh3),
        out_shape=jax.ShapeDtypeStruct((B, 1, N_PAD), jnp.float32),
        grid=(B,),
        in_specs=in_specs,
        out_specs=pl.BlockSpec((1, 1, N_PAD), lambda b: (b, 0, 0)),
        compiler_params=pltpu.CompilerParams(
            dimension_semantics=("parallel",)),   # batch across TCs (v7x megacore)
        cost_estimate=cost,
    )(*operands)
    return out[:, 0, :kp["n_out"]]


# ------------------------------ reference ------------------------------------

def bc_policy_reference(params, image_nchw, speed):
    """Pure-JAX reference implementing exactly PyTorch BCPolicy.forward."""
    hi = jax.lax.Precision.HIGHEST
    x = jnp.transpose(image_nchw, (0, 2, 3, 1))               # NHWC
    for i in range(3):
        x = jax.lax.conv_general_dilated(
            x, params[f"conv{i}_w"], window_strides=(S, S), padding="VALID",
            dimension_numbers=("NHWC", "HWIO", "NHWC"), precision=hi)
        x = jnp.maximum(x + params[f"conv{i}_b"], 0.0)
    flat = jnp.transpose(x, (0, 3, 1, 2)).reshape(x.shape[0], -1)  # PyTorch Flatten
    z = jnp.concatenate([flat, speed], axis=1)
    h = jnp.maximum(jnp.dot(z, params["fc1_w"], precision=hi) + params["fc1_b"], 0.0)
    return jnp.dot(h, params["fc2_w"], precision=hi) + params["fc2_b"]


# --------------------------------- demo --------------------------------------

if __name__ == "__main__":
    batch = 2
    img_size = (3, 40, 40)      # small but deep enough for three 5x5/s2 convs
    key = jax.random.PRNGKey(0)
    k_img, k_speed = jax.random.split(key)
    image = jax.random.normal(k_img, (batch,) + img_size, jnp.float32)
    speed = jax.random.normal(k_speed, (batch, 1), jnp.float32)
    params = init_params(jax.random.PRNGKey(42), img_size)

    ref = jax.block_until_ready(bc_policy_reference(params, image, speed))

    # Strict check of the fused/restructured math in f32.
    kp32 = prepare_kernel_params(params, img_size, compute_dtype=jnp.float32)
    out32 = jax.block_until_ready(bc_policy_forward(kp32, image, speed))
    assert out32.shape == (batch, 3), out32.shape
    assert bool(jnp.all(jnp.isfinite(out32)))
    np.testing.assert_allclose(np.asarray(out32), np.asarray(ref),
                               rtol=1e-2, atol=1e-2)

    # Production path: bf16 MXU operands, f32 accumulation (bf16 error budget).
    kp16 = prepare_kernel_params(params, img_size, compute_dtype=jnp.bfloat16)
    out16 = jax.block_until_ready(bc_policy_forward(kp16, image, speed))
    assert out16.shape == (batch, 3), out16.shape
    assert bool(jnp.all(jnp.isfinite(out16)))
    np.testing.assert_allclose(np.asarray(out16), np.asarray(ref),
                               rtol=5e-2, atol=5e-2)

    print("KERNEL_OK")
</pallas_src>

<mosaic_0001>
module attributes {stable_mosaic.version = 11 : i64} {
  func.func @kernel(%arg0: i32, %arg1: memref<1x40x120xf32, #tpu.memory_space<vmem>>, %arg2: memref<1x1x1xf32, #tpu.memory_space<vmem>>, %arg3: memref<5x18x40xf32, #tpu.memory_space<vmem>>, %arg4: memref<5x120x288xf32, #tpu.memory_space<vmem>>, %arg5: memref<1x288xf32, #tpu.memory_space<vmem>>, %arg6: memref<5x7x18xf32, #tpu.memory_space<vmem>>, %arg7: memref<5x288x224xf32, #tpu.memory_space<vmem>>, %arg8: memref<1x224xf32, #tpu.memory_space<vmem>>, %arg9: memref<5x2x7xf32, #tpu.memory_space<vmem>>, %arg10: memref<5x224x128xf32, #tpu.memory_space<vmem>>, %arg11: memref<1x128xf32, #tpu.memory_space<vmem>>, %arg12: memref<2x128x128xf32, #tpu.memory_space<vmem>>, %arg13: memref<1x128xf32, #tpu.memory_space<vmem>>, %arg14: memref<1x128xf32, #tpu.memory_space<vmem>>, %arg15: memref<128x128xf32, #tpu.memory_space<vmem>>, %arg16: memref<1x128xf32, #tpu.memory_space<vmem>>, %arg17: memref<1x1x128xf32, #tpu.memory_space<vmem>>) attributes {dimension_semantics = [#tpu.dimension_semantics<parallel>], iteration_bounds = array<i64: 2>, scalar_prefetch = 0 : i64, scratch_operands = 0 : i64, tpu.core_type = #tpu.core_type<tc>, window_params = [{transform_indices = @transform_0, window_bounds = array<i64: 1, 40, 120>}, {transform_indices = @transform_1, window_bounds = array<i64: 1, 1, 1>}, {pipeline_mode = #tpu.pipeline_mode<synchronous>, transform_indices = @transform_2, window_bounds = array<i64: 5, 18, 40>}, {pipeline_mode = #tpu.pipeline_mode<synchronous>, transform_indices = @transform_3, window_bounds = array<i64: 5, 120, 288>}, {pipeline_mode = #tpu.pipeline_mode<synchronous>, transform_indices = @transform_4, window_bounds = array<i64: 1, 288>}, {pipeline_mode = #tpu.pipeline_mode<synchronous>, transform_indices = @transform_5, window_bounds = array<i64: 5, 7, 18>}, {pipeline_mode = #tpu.pipeline_mode<synchronous>, transform_indices = @transform_6, window_bounds = array<i64: 5, 288, 224>}, {pipeline_mode = #tpu.pipeline_mode<synchronous>, transform_indices = @transform_7, window_bounds = array<i64: 1, 224>}, {pipeline_mode = #tpu.pipeline_mode<synchronous>, transform_indices = @transform_8, window_bounds = array<i64: 5, 2, 7>}, {pipeline_mode = #tpu.pipeline_mode<synchronous>, transform_indices = @transform_9, window_bounds = array<i64: 5, 224, 128>}, {pipeline_mode = #tpu.pipeline_mode<synchronous>, transform_indices = @transform_10, window_bounds = array<i64: 1, 128>}, {pipeline_mode = #tpu.pipeline_mode<synchronous>, transform_indices = @transform_11, window_bounds = array<i64: 2, 128, 128>}, {pipeline_mode = #tpu.pipeline_mode<synchronous>, transform_indices = @transform_12, window_bounds = array<i64: 1, 128>}, {pipeline_mode = #tpu.pipeline_mode<synchronous>, transform_indices = @transform_13, window_bounds = array<i64: 1, 128>}, {pipeline_mode = #tpu.pipeline_mode<synchronous>, transform_indices = @transform_14, window_bounds = array<i64: 128, 128>}, {pipeline_mode = #tpu.pipeline_mode<synchronous>, transform_indices = @transform_15, window_bounds = array<i64: 1, 128>}, {transform_indices = @transform_16, window_bounds = array<i64: 1, 1, 128>}]} {
    %c0 = arith.constant 0 : index
    %c0_0 = arith.constant 0 : index
    %c0_1 = arith.constant 0 : index
    %0 = vector.load %arg1[%c0, %c0_0, %c0_1] : memref<1x40x120xf32, #tpu.memory_space<vmem>>, vector<1x40x120xf32>
    %1 = vector.shape_cast %0 : vector<1x40x120xf32> to vector<40x120xf32>
    %c0_2 = arith.constant 0 : index
    %c0_3 = arith.constant 0 : index
    %c0_4 = arith.constant 0 : index
    %2 = vector.load %arg3[%c0_2, %c0_3, %c0_4] : memref<5x18x40xf32, #tpu.memory_space<vmem>>, vector<1x18x40xf32>
    %3 = vector.shape_cast %2 : vector<1x18x40xf32> to vector<18x40xf32>
    %cst = arith.constant dense<0.000000e+00> : vector<18x120xf32>
    %4 = tpu.matmul %3, %1, %cst {dimension_numbers = #tpu.dot_dimension_numbers<[1], [0], [0], [1], [0, 0, 1, 1], [], []>} : vector<18x40xf32>, vector<40x120xf32>, vector<18x120xf32> -> vector<18x120xf32>
    %c0_5 = arith.constant 0 : index
    %c0_6 = arith.constant 0 : index
    %c0_7 = arith.constant 0 : index
    %5 = vector.load %arg4[%c0_5, %c0_6, %c0_7] : memref<5x120x288xf32, #tpu.memory_space<vmem>>, vector<1x120x288xf32>
    %6 = vector.shape_cast %5 : vector<1x120x288xf32> to vector<120x288xf32>
    %cst_8 = arith.constant dense<0.000000e+00> : vector<18x288xf32>
    %7 = tpu.matmul %4, %6, %cst_8 {dimension_numbers = #tpu.dot_dimension_numbers<[1], [0], [0], [1], [0, 0, 1, 1], [], []>} : vector<18x120xf32>, vector<120x288xf32>, vector<18x288xf32> -> vector<18x288xf32>
    %c1 = arith.constant 1 : index
    %c0_9 = arith.constant 0 : index
    %c0_10 = arith.constant 0 : index
    %8 = vector.load %arg3[%c1, %c0_9, %c0_10] : memref<5x18x40xf32, #tpu.memory_space<vmem>>, vector<1x18x40xf32>
    %9 = vector.shape_cast %8 : vector<1x18x40xf32> to vector<18x40xf32>
    %cst_11 = arith.constant dense<0.000000e+00> : vector<18x120xf32>
    %10 = tpu.matmul %9, %1, %cst_11 {dimension_numbers = #tpu.dot_dimension_numbers<[1], [0], [0], [1], [0, 0, 1, 1], [], []>} : vector<18x40xf32>, vector<40x120xf32>, vector<18x120xf32> -> vector<18x120xf32>
    %c1_12 = arith.constant 1 : index
    %c0_13 = arith.constant 0 : index
    %c0_14 = arith.constant 0 : index
    %11 = vector.load %arg4[%c1_12, %c0_13, %c0_14] : memref<5x120x288xf32, #tpu.memory_space<vmem>>, vector<1x120x288xf32>
    %12 = vector.shape_cast %11 : vector<1x120x288xf32> to vector<120x288xf32>
    %cst_15 = arith.constant dense<0.000000e+00> : vector<18x288xf32>
    %13 = tpu.matmul %10, %12, %cst_15 {dimension_numbers = #tpu.dot_dimension_numbers<[1], [0], [0], [1], [0, 0, 1, 1], [], []>} : vector<18x120xf32>, vector<120x288xf32>, vector<18x288xf32> -> vector<18x288xf32>
    %14 = arith.addf %7, %13 : vector<18x288xf32>
    %c2 = arith.constant 2 : index
    %c0_16 = arith.constant 0 : index
    %c0_17 = arith.constant 0 : index
    %15 = vector.load %arg3[%c2, %c0_16, %c0_17] : memref<5x18x40xf32, #tpu.memory_space<vmem>>, vector<1x18x40xf32>
    %16 = vector.shape_cast %15 : vector<1x18x40xf32> to vector<18x40xf32>
    %cst_18 = arith.constant dense<0.000000e+00> : vector<18x120xf32>
    %17 = tpu.matmul %16, %1, %cst_18 {dimension_numbers = #tpu.dot_dimension_numbers<[1], [0], [0], [1], [0, 0, 1, 1], [], []>} : vector<18x40xf32>, vector<40x120xf32>, vector<18x120xf32> -> vector<18x120xf32>
    %c2_19 = arith.constant 2 : index
    %c0_20 = arith.constant 0 : index
    %c0_21 = arith.constant 0 : index
    %18 = vector.load %arg4[%c2_19, %c0_20, %c0_21] : memref<5x120x288xf32, #tpu.memory_space<vmem>>, vector<1x120x288xf32>
    %19 = vector.shape_cast %18 : vector<1x120x288xf32> to vector<120x288xf32>
    %cst_22 = arith.constant dense<0.000000e+00> : vector<18x288xf32>
    %20 = tpu.matmul %17, %19, %cst_22 {dimension_numbers = #tpu.dot_dimension_numbers<[1], [0], [0], [1], [0, 0, 1, 1], [], []>} : vector<18x120xf32>, vector<120x288xf32>, vector<18x288xf32> -> vector<18x288xf32>
    %21 = arith.addf %14, %20 : vector<18x288xf32>
    %c3 = arith.constant 3 : index
    %c0_23 = arith.constant 0 : index
    %c0_24 = arith.constant 0 : index
    %22 = vector.load %arg3[%c3, %c0_23, %c0_24] : memref<5x18x40xf32, #tpu.memory_space<vmem>>, vector<1x18x40xf32>
    %23 = vector.shape_cast %22 : vector<1x18x40xf32> to vector<18x40xf32>
    %cst_25 = arith.constant dense<0.000000e+00> : vector<18x120xf32>
    %24 = tpu.matmul %23, %1, %cst_25 {dimension_numbers = #tpu.dot_dimension_numbers<[1], [0], [0], [1], [0, 0, 1, 1], [], []>} : vector<18x40xf32>, vector<40x120xf32>, vector<18x120xf32> -> vector<18x120xf32>
    %c3_26 = arith.constant 3 : index
    %c0_27 = arith.constant 0 : index
    %c0_28 = arith.constant 0 : index
    %25 = vector.load %arg4[%c3_26, %c0_27, %c0_28] : memref<5x120x288xf32, #tpu.memory_space<vmem>>, vector<1x120x288xf32>
    %26 = vector.shape_cast %25 : vector<1x120x288xf32> to vector<120x288xf32>
    %cst_29 = arith.constant dense<0.000000e+00> : vector<18x288xf32>
    %27 = tpu.matmul %24, %26, %cst_29 {dimension_numbers = #tpu.dot_dimension_numbers<[1], [0], [0], [1], [0, 0, 1, 1], [], []>} : vector<18x120xf32>, vector<120x288xf32>, vector<18x288xf32> -> vector<18x288xf32>
    %28 = arith.addf %21, %27 : vector<18x288xf32>
    %c4 = arith.constant 4 : index
    %c0_30 = arith.constant 0 : index
    %c0_31 = arith.constant 0 : index
    %29 = vector.load %arg3[%c4, %c0_30, %c0_31] : memref<5x18x40xf32, #tpu.memory_space<vmem>>, vector<1x18x40xf32>
    %30 = vector.shape_cast %29 : vector<1x18x40xf32> to vector<18x40xf32>
    %cst_32 = arith.constant dense<0.000000e+00> : vector<18x120xf32>
    %31 = tpu.matmul %30, %1, %cst_32 {dimension_numbers = #tpu.dot_dimension_numbers<[1], [0], [0], [1], [0, 0, 1, 1], [], []>} : vector<18x40xf32>, vector<40x120xf32>, vector<18x120xf32> -> vector<18x120xf32>
    %c4_33 = arith.constant 4 : index
    %c0_34 = arith.constant 0 : index
    %c0_35 = arith.constant 0 : index
    %32 = vector.load %arg4[%c4_33, %c0_34, %c0_35] : memref<5x120x288xf32, #tpu.memory_space<vmem>>, vector<1x120x288xf32>
    %33 = vector.shape_cast %32 : vector<1x120x288xf32> to vector<120x288xf32>
    %cst_36 = arith.constant dense<0.000000e+00> : vector<18x288xf32>
    %34 = tpu.matmul %31, %33, %cst_36 {dimension_numbers = #tpu.dot_dimension_numbers<[1], [0], [0], [1], [0, 0, 1, 1], [], []>} : vector<18x120xf32>, vector<120x288xf32>, vector<18x288xf32> -> vector<18x288xf32>
    %35 = arith.addf %28, %34 : vector<18x288xf32>
    %c0_37 = arith.constant 0 : index
    %c0_38 = arith.constant 0 : index
    %36 = vector.load %arg5[%c0_37, %c0_38] : memref<1x288xf32, #tpu.memory_space<vmem>>, vector<1x288xf32>
    %37 = vector.broadcast %36 : vector<1x288xf32> to vector<18x288xf32>
    %38 = arith.addf %35, %37 : vector<18x288xf32>
    %cst_39 = arith.constant 0.000000e+00 : f32
    %39 = vector.broadcast %cst_39 : f32 to vector<18x288xf32>
    %40 = arith.maximumf %38, %39 : vector<18x288xf32>
    %c0_40 = arith.constant 0 : index
    %c0_41 = arith.constant 0 : index
    %c0_42 = arith.constant 0 : index
    %41 = vector.load %arg6[%c0_40, %c0_41, %c0_42] : memref<5x7x18xf32, #tpu.memory_space<vmem>>, vector<1x7x18xf32>
    %42 = vector.shape_cast %41 : vector<1x7x18xf32> to vector<7x18xf32>
    %cst_43 = arith.constant dense<0.000000e+00> : vector<7x288xf32>
    %43 = tpu.matmul %42, %40, %cst_43 {dimension_numbers = #tpu.dot_dimension_numbers<[1], [0], [0], [1], [0, 0, 1, 1], [], []>} : vector<7x18xf32>, vector<18x288xf32>, vector<7x288xf32> -> vector<7x288xf32>
    %c0_44 = arith.constant 0 : index
    %c0_45 = arith.constant 0 : index
    %c0_46 = arith.constant 0 : index
    %44 = vector.load %arg7[%c0_44, %c0_45, %c0_46] : memref<5x288x224xf32, #tpu.memory_space<vmem>>, vector<1x288x224xf32>
    %45 = vector.shape_cast %44 : vector<1x288x224xf32> to vector<288x224xf32>
    %cst_47 = arith.constant dense<0.000000e+00> : vector<7x224xf32>
    %46 = tpu.matmul %43, %45, %cst_47 {dimension_numbers = #tpu.dot_dimension_numbers<[1], [0], [0], [1], [0, 0, 1, 1], [], []>} : vector<7x288xf32>, vector<288x224xf32>, vector<7x224xf32> -> vector<7x224xf32>
    %c1_48 = arith.constant 1 : index
    %c0_49 = arith.constant 0 : index
    %c0_50 = arith.constant 0 : index
    %47 = vector.load %arg6[%c1_48, %c0_49, %c0_50] : memref<5x7x18xf32, #tpu.memory_space<vmem>>, vector<1x7x18xf32>
    %48 = vector.shape_cast %47 : vector<1x7x18xf32> to vector<7x18xf32>
    %cst_51 = arith.constant dense<0.000000e+00> : vector<7x288xf32>
    %49 = tpu.matmul %48, %40, %cst_51 {dimension_numbers = #tpu.dot_dimension_numbers<[1], [0], [0], [1], [0, 0, 1, 1], [], []>} : vector<7x18xf32>, vector<18x288xf32>, vector<7x288xf32> -> vector<7x288xf32>
    %c1_52 = arith.constant 1 : index
    %c0_53 = arith.constant 0 : index
    %c0_54 = arith.constant 0 : index
    %50 = vector.load %arg7[%c1_52, %c0_53, %c0_54] : memref<5x288x224xf32, #tpu.memory_space<vmem>>, vector<1x288x224xf32>
    %51 = vector.shape_cast %50 : vector<1x288x224xf32> to vector<288x224xf32>
    %cst_55 = arith.constant dense<0.000000e+00> : vector<7x224xf32>
    %52 = tpu.matmul %49, %51, %cst_55 {dimension_numbers = #tpu.dot_dimension_numbers<[1], [0], [0], [1], [0, 0, 1, 1], [], []>} : vector<7x288xf32>, vector<288x224xf32>, vector<7x224xf32> -> vector<7x224xf32>
    %53 = arith.addf %46, %52 : vector<7x224xf32>
    %c2_56 = arith.constant 2 : index
    %c0_57 = arith.constant 0 : index
    %c0_58 = arith.constant 0 : index
    %54 = vector.load %arg6[%c2_56, %c0_57, %c0_58] : memref<5x7x18xf32, #tpu.memory_space<vmem>>, vector<1x7x18xf32>
    %55 = vector.shape_cast %54 : vector<1x7x18xf32> to vector<7x18xf32>
    %cst_59 = arith.constant dense<0.000000e+00> : vector<7x288xf32>
    %56 = tpu.matmul %55, %40, %cst_59 {dimension_numbers = #tpu.dot_dimension_numbers<[1], [0], [0], [1], [0, 0, 1, 1], [], []>} : vector<7x18xf32>, vector<18x288xf32>, vector<7x288xf32> -> vector<7x288xf32>
    %c2_60 = arith.constant 2 : index
    %c0_61 = arith.constant 0 : index
    %c0_62 = arith.constant 0 : index
    %57 = vector.load %arg7[%c2_60, %c0_61, %c0_62] : memref<5x288x224xf32, #tpu.memory_space<vmem>>, vector<1x288x224xf32>
    %58 = vector.shape_cast %57 : vector<1x288x224xf32> to vector<288x224xf32>
    %cst_63 = arith.constant dense<0.000000e+00> : vector<7x224xf32>
    %59 = tpu.matmul %56, %58, %cst_63 {dimension_numbers = #tpu.dot_dimension_numbers<[1], [0], [0], [1], [0, 0, 1, 1], [], []>} : vector<7x288xf32>, vector<288x224xf32>, vector<7x224xf32> -> vector<7x224xf32>
    %60 = arith.addf %53, %59 : vector<7x224xf32>
    %c3_64 = arith.constant 3 : index
    %c0_65 = arith.constant 0 : index
    %c0_66 = arith.constant 0 : index
    %61 = vector.load %arg6[%c3_64, %c0_65, %c0_66] : memref<5x7x18xf32, #tpu.memory_space<vmem>>, vector<1x7x18xf32>
    %62 = vector.shape_cast %61 : vector<1x7x18xf32> to vector<7x18xf32>
    %cst_67 = arith.constant dense<0.000000e+00> : vector<7x288xf32>
    %63 = tpu.matmul %62, %40, %cst_67 {dimension_numbers = #tpu.dot_dimension_numbers<[1], [0], [0], [1], [0, 0, 1, 1], [], []>} : vector<7x18xf32>, vector<18x288xf32>, vector<7x288xf32> -> vector<7x288xf32>
    %c3_68 = arith.constant 3 : index
    %c0_69 = arith.constant 0 : index
    %c0_70 = arith.constant 0 : index
    %64 = vector.load %arg7[%c3_68, %c0_69, %c0_70] : memref<5x288x224xf32, #tpu.memory_space<vmem>>, vector<1x288x224xf32>
    %65 = vector.shape_cast %64 : vector<1x288x224xf32> to vector<288x224xf32>
    %cst_71 = arith.constant dense<0.000000e+00> : vector<7x224xf32>
    %66 = tpu.matmul %63, %65, %cst_71 {dimension_numbers = #tpu.dot_dimension_numbers<[1], [0], [0], [1], [0, 0, 1, 1], [], []>} : vector<7x288xf32>, vector<288x224xf32>, vector<7x224xf32> -> vector<7x224xf32>
    %67 = arith.addf %60, %66 : vector<7x224xf32>
    %c4_72 = arith.constant 4 : index
    %c0_73 = arith.constant 0 : index
    %c0_74 = arith.constant 0 : index
    %68 = vector.load %arg6[%c4_72, %c0_73, %c0_74] : memref<5x7x18xf32, #tpu.memory_space<vmem>>, vector<1x7x18xf32>
    %69 = vector.shape_cast %68 : vector<1x7x18xf32> to vector<7x18xf32>
    %cst_75 = arith.constant dense<0.000000e+00> : vector<7x288xf32>
    %70 = tpu.matmul %69, %40, %cst_75 {dimension_numbers = #tpu.dot_dimension_numbers<[1], [0], [0], [1], [0, 0, 1, 1], [], []>} : vector<7x18xf32>, vector<18x288xf32>, vector<7x288xf32> -> vector<7x288xf32>
    %c4_76 = arith.constant 4 : index
    %c0_77 = arith.constant 0 : index
    %c0_78 = arith.constant 0 : index
    %71 = vector.load %arg7[%c4_76, %c0_77, %c0_78] : memref<5x288x224xf32, #tpu.memory_space<vmem>>, vector<1x288x224xf32>
    %72 = vector.shape_cast %71 : vector<1x288x224xf32> to vector<288x224xf32>
    %cst_79 = arith.constant dense<0.000000e+00> : vector<7x224xf32>
    %73 = tpu.matmul %70, %72, %cst_79 {dimension_numbers = #tpu.dot_dimension_numbers<[1], [0], [0], [1], [0, 0, 1, 1], [], []>} : vector<7x288xf32>, vector<288x224xf32>, vector<7x224xf32> -> vector<7x224xf32>
    %74 = arith.addf %67, %73 : vector<7x224xf32>
    %c0_80 = arith.constant 0 : index
    %c0_81 = arith.constant 0 : index
    %75 = vector.load %arg8[%c0_80, %c0_81] : memref<1x224xf32, #tpu.memory_space<vmem>>, vector<1x224xf32>
    %76 = vector.broadcast %75 : vector<1x224xf32> to vector<7x224xf32>
    %77 = arith.addf %74, %76 : vector<7x224xf32>
    %cst_82 = arith.constant 0.000000e+00 : f32
    %78 = vector.broadcast %cst_82 : f32 to vector<7x224xf32>
    %79 = arith.maximumf %77, %78 : vector<7x224xf32>
    %c0_83 = arith.constant 0 : index
    %c0_84 = arith.constant 0 : index
    %c0_85 = arith.constant 0 : index
    %80 = vector.load %arg9[%c0_83, %c0_84, %c0_85] : memref<5x2x7xf32, #tpu.memory_space<vmem>>, vector<1x2x7xf32>
    %81 = vector.shape_cast %80 : vector<1x2x7xf32> to vector<2x7xf32>
    %cst_86 = arith.constant dense<0.000000e+00> : vector<2x224xf32>
    %82 = tpu.matmul %81, %79, %cst_86 {dimension_numbers = #tpu.dot_dimension_numbers<[1], [0], [0], [1], [0, 0, 1, 1], [], []>} : vector<2x7xf32>, vector<7x224xf32>, vector<2x224xf32> -> vector<2x224xf32>
    %c0_87 = arith.constant 0 : index
    %c0_88 = arith.constant 0 : index
    %c0_89 = arith.constant 0 : index
    %83 = vector.load %arg10[%c0_87, %c0_88, %c0_89] : memref<5x224x128xf32, #tpu.memory_space<vmem>>, vector<1x224x128xf32>
    %84 = vector.shape_cast %83 : vector<1x224x128xf32> to vector<224x128xf32>
    %cst_90 = arith.constant dense<0.000000e+00> : vector<2x128xf32>
    %85 = tpu.matmul %82, %84, %cst_90 {dimension_numbers = #tpu.dot_dimension_numbers<[1], [0], [0], [1], [0, 0, 1, 1], [], []>} : vector<2x224xf32>, vector<224x128xf32>, vector<2x128xf32> -> vector<2x128xf32>
    %c1_91 = arith.constant 1 : index
    %c0_92 = arith.constant 0 : index
    %c0_93 = arith.constant 0 : index
    %86 = vector.load %arg9[%c1_91, %c0_92, %c0_93] : memref<5x2x7xf32, #tpu.memory_space<vmem>>, vector<1x2x7xf32>
    %87 = vector.shape_cast %86 : vector<1x2x7xf32> to vector<2x7xf32>
    %cst_94 = arith.constant dense<0.000000e+00> : vector<2x224xf32>
    %88 = tpu.matmul %87, %79, %cst_94 {dimension_numbers = #tpu.dot_dimension_numbers<[1], [0], [0], [1], [0, 0, 1, 1], [], []>} : vector<2x7xf32>, vector<7x224xf32>, vector<2x224xf32> -> vector<2x224xf32>
    %c1_95 = arith.constant 1 : index
    %c0_96 = arith.constant 0 : index
    %c0_97 = arith.constant 0 : index
    %89 = vector.load %arg10[%c1_95, %c0_96, %c0_97] : memref<5x224x128xf32, #tpu.memory_space<vmem>>, vector<1x224x128xf32>
    %90 = vector.shape_cast %89 : vector<1x224x128xf32> to vector<224x128xf32>
    %cst_98 = arith.constant dense<0.000000e+00> : vector<2x128xf32>
    %91 = tpu.matmul %88, %90, %cst_98 {dimension_numbers = #tpu.dot_dimension_numbers<[1], [0], [0], [1], [0, 0, 1, 1], [], []>} : vector<2x224xf32>, vector<224x128xf32>, vector<2x128xf32> -> vector<2x128xf32>
    %92 = arith.addf %85, %91 : vector<2x128xf32>
    %c2_99 = arith.constant 2 : index
    %c0_100 = arith.constant 0 : index
    %c0_101 = arith.constant 0 : index
    %93 = vector.load %arg9[%c2_99, %c0_100, %c0_101] : memref<5x2x7xf32, #tpu.memory_space<vmem>>, vector<1x2x7xf32>
    %94 = vector.shape_cast %93 : vector<1x2x7xf32> to vector<2x7xf32>
    %cst_102 = arith.constant dense<0.000000e+00> : vector<2x224xf32>
    %95 = tpu.matmul %94, %79, %cst_102 {dimension_numbers = #tpu.dot_dimension_numbers<[1], [0], [0], [1], [0, 0, 1, 1], [], []>} : vector<2x7xf32>, vector<7x224xf32>, vector<2x224xf32> -> vector<2x224xf32>
    %c2_103 = arith.constant 2 : index
    %c0_104 = arith.constant 0 : index
    %c0_105 = arith.constant 0 : index
    %96 = vector.load %arg10[%c2_103, %c0_104, %c0_105] : memref<5x224x128xf32, #tpu.memory_space<vmem>>, vector<1x224x128xf32>
    %97 = vector.shape_cast %96 : vector<1x224x128xf32> to vector<224x128xf32>
    %cst_106 = arith.constant dense<0.000000e+00> : vector<2x128xf32>
    %98 = tpu.matmul %95, %97, %cst_106 {dimension_numbers = #tpu.dot_dimension_numbers<[1], [0], [0], [1], [0, 0, 1, 1], [], []>} : vector<2x224xf32>, vector<224x128xf32>, vector<2x128xf32> -> vector<2x128xf32>
    %99 = arith.addf %92, %98 : vector<2x128xf32>
    %c3_107 = arith.constant 3 : index
    %c0_108 = arith.constant 0 : index
    %c0_109 = arith.constant 0 : index
    %100 = vector.load %arg9[%c3_107, %c0_108, %c0_109] : memref<5x2x7xf32, #tpu.memory_space<vmem>>, vector<1x2x7xf32>
    %101 = vector.shape_cast %100 : vector<1x2x7xf32> to vector<2x7xf32>
    %cst_110 = arith.constant dense<0.000000e+00> : vector<2x224xf32>
    %102 = tpu.matmul %101, %79, %cst_110 {dimension_numbers = #tpu.dot_dimension_numbers<[1], [0], [0], [1], [0, 0, 1, 1], [], []>} : vector<2x7xf32>, vector<7x224xf32>, vector<2x224xf32> -> vector<2x224xf32>
    %c3_111 = arith.constant 3 : index
    %c0_112 = arith.constant 0 : index
    %c0_113 = arith.constant 0 : index
    %103 = vector.load %arg10[%c3_111, %c0_112, %c0_113] : memref<5x224x128xf32, #tpu.memory_space<vmem>>, vector<1x224x128xf32>
    %104 = vector.shape_cast %103 : vector<1x224x128xf32> to vector<224x128xf32>
    %cst_114 = arith.constant dense<0.000000e+00> : vector<2x128xf32>
    %105 = tpu.matmul %102, %104, %cst_114 {dimension_numbers = #tpu.dot_dimension_numbers<[1], [0], [0], [1], [0, 0, 1, 1], [], []>} : vector<2x224xf32>, vector<224x128xf32>, vector<2x128xf32> -> vector<2x128xf32>
    %106 = arith.addf %99, %105 : vector<2x128xf32>
    %c4_115 = arith.constant 4 : index
    %c0_116 = arith.constant 0 : index
    %c0_117 = arith.constant 0 : index
    %107 = vector.load %arg9[%c4_115, %c0_116, %c0_117] : memref<5x2x7xf32, #tpu.memory_space<vmem>>, vector<1x2x7xf32>
    %108 = vector.shape_cast %107 : vector<1x2x7xf32> to vector<2x7xf32>
    %cst_118 = arith.constant dense<0.000000e+00> : vector<2x224xf32>
    %109 = tpu.matmul %108, %79, %cst_118 {dimension_numbers = #tpu.dot_dimension_numbers<[1], [0], [0], [1], [0, 0, 1, 1], [], []>} : vector<2x7xf32>, vector<7x224xf32>, vector<2x224xf32> -> vector<2x224xf32>
    %c4_119 = arith.constant 4 : index
    %c0_120 = arith.constant 0 : index
    %c0_121 = arith.constant 0 : index
    %110 = vector.load %arg10[%c4_119, %c0_120, %c0_121] : memref<5x224x128xf32, #tpu.memory_space<vmem>>, vector<1x224x128xf32>
    %111 = vector.shape_cast %110 : vector<1x224x128xf32> to vector<224x128xf32>
    %cst_122 = arith.constant dense<0.000000e+00> : vector<2x128xf32>
    %112 = tpu.matmul %109, %111, %cst_122 {dimension_numbers = #tpu.dot_dimension_numbers<[1], [0], [0], [1], [0, 0, 1, 1], [], []>} : vector<2x224xf32>, vector<224x128xf32>, vector<2x128xf32> -> vector<2x128xf32>
    %113 = arith.addf %106, %112 : vector<2x128xf32>
    %c0_123 = arith.constant 0 : index
    %c0_124 = arith.constant 0 : index
    %114 = vector.load %arg11[%c0_123, %c0_124] : memref<1x128xf32, #tpu.memory_space<vmem>>, vector<1x128xf32>
    %115 = vector.broadcast %114 : vector<1x128xf32> to vector<2x128xf32>
    %116 = arith.addf %113, %115 : vector<2x128xf32>
    %cst_125 = arith.constant 0.000000e+00 : f32
    %117 = vector.broadcast %cst_125 : f32 to vector<2x128xf32>
    %118 = arith.maximumf %116, %117 : vector<2x128xf32>
    %c0_126 = arith.constant 0 : index
    %c0_127 = arith.constant 0 : index
    %119 = vector.load %arg14[%c0_126, %c0_127] : memref<1x128xf32, #tpu.memory_space<vmem>>, vector<1x128xf32>
    %c0_128 = arith.constant 0 : index
    %c0_129 = arith.constant 0 : index
    %c0_130 = arith.constant 0 : index
    %120 = vector.load %arg2[%c0_128, %c0_129, %c0_130] : memref<1x1x1xf32, #tpu.memory_space<vmem>>, vector<1x1x1xf32>
    %121 = vector.shape_cast %120 : vector<1x1x1xf32> to vector<1x1xf32>
    %c0_131 = arith.constant 0 : index
    %c0_132 = arith.constant 0 : index
    %122 = vector.load %arg13[%c0_131, %c0_132] : memref<1x128xf32, #tpu.memory_space<vmem>>, vector<1x128xf32>
    %123 = vector.broadcast %121 : vector<1x1xf32> to vector<1x128xf32>
    %124 = arith.mulf %123, %122 : vector<1x128xf32>
    %125 = arith.addf %119, %124 : vector<1x128xf32>
    %126 = vector.extract_strided_slice %118 {offsets = [0, 0], sizes = [1, 128], strides = [1, 1]} : vector<2x128xf32> to vector<1x128xf32>
    %c0_133 = arith.constant 0 : index
    %c0_134 = arith.constant 0 : index
    %c0_135 = arith.constant 0 : index
    %127 = vector.load %arg12[%c0_133, %c0_134, %c0_135] : memref<2x128x128xf32, #tpu.memory_space<vmem>>, vector<1x128x128xf32>
    %128 = vector.shape_cast %127 : vector<1x128x128xf32> to vector<128x128xf32>
    %cst_136 = arith.constant dense<0.000000e+00> : vector<1x128xf32>
    %129 = tpu.matmul %126, %128, %cst_136 {dimension_numbers = #tpu.dot_dimension_numbers<[1], [0], [0], [1], [0, 0, 1, 1], [], []>} : vector<1x128xf32>, vector<128x128xf32>, vector<1x128xf32> -> vector<1x128xf32>
    %130 = arith.addf %125, %129 : vector<1x128xf32>
    %131 = vector.extract_strided_slice %118 {offsets = [1, 0], sizes = [1, 128], strides = [1, 1]} : vector<2x128xf32> to vector<1x128xf32>
    %c1_137 = arith.constant 1 : index
    %c0_138 = arith.constant 0 : index
    %c0_139 = arith.constant 0 : index
    %132 = vector.load %arg12[%c1_137, %c0_138, %c0_139] : memref<2x128x128xf32, #tpu.memory_space<vmem>>, vector<1x128x128xf32>
    %133 = vector.shape_cast %132 : vector<1x128x128xf32> to vector<128x128xf32>
    %cst_140 = arith.constant dense<0.000000e+00> : vector<1x128xf32>
    %134 = tpu.matmul %131, %133, %cst_140 {dimension_numbers = #tpu.dot_dimension_numbers<[1], [0], [0], [1], [0, 0, 1, 1], [], []>} : vector<1x128xf32>, vector<128x128xf32>, vector<1x128xf32> -> vector<1x128xf32>
    %135 = arith.addf %130, %134 : vector<1x128xf32>
    %cst_141 = arith.constant 0.000000e+00 : f32
    %136 = vector.broadcast %cst_141 : f32 to vector<1x128xf32>
    %137 = arith.maximumf %135, %136 : vector<1x128xf32>
    %c0_142 = arith.constant 0 : index
    %c0_143 = arith.constant 0 : index
    %138 = vector.load %arg15[%c0_142, %c0_143] : memref<128x128xf32, #tpu.memory_space<vmem>>, vector<128x128xf32>
    %cst_144 = arith.constant dense<0.000000e+00> : vector<1x128xf32>
    %139 = tpu.matmul %137, %138, %cst_144 {dimension_numbers = #tpu.dot_dimension_numbers<[1], [0], [0], [1], [0, 0, 1, 1], [], []>} : vector<1x128xf32>, vector<128x128xf32>, vector<1x128xf32> -> vector<1x128xf32>
    %c0_145 = arith.constant 0 : index
    %c0_146 = arith.constant 0 : index
    %140 = vector.load %arg16[%c0_145, %c0_146] : memref<1x128xf32, #tpu.memory_space<vmem>>, vector<1x128xf32>
    %141 = arith.addf %139, %140 : vector<1x128xf32>
    %c0_147 = arith.constant 0 : index
    %c0_148 = arith.constant 0 : index
    %c0_149 = arith.constant 0 : index
    %142 = vector.load %arg17[%c0_147, %c0_148, %c0_149] : memref<1x1x128xf32, #tpu.memory_space<vmem>>, vector<1x1x128xf32>
    %143 = vector.shape_cast %142 : vector<1x1x128xf32> to vector<1x128xf32>
    %144 = vector.shape_cast %141 : vector<1x128xf32> to vector<1x1x128xf32>
    tpu.vector_store %arg17[%c0_147, %c0_148, %c0_149], %144 {strides = array<i32>} : memref<1x1x128xf32, #tpu.memory_space<vmem>>, vector<1x1x128xf32>,
    return
  }
  func.func @transform_0(%arg0: i32) -> (i32, i32, i32) {
    %c0_i32 = arith.constant 0 : i32
    %c0_i32_0 = arith.constant 0 : i32
    %c0_i32_1 = arith.constant 0 : i32
    return %arg0, %c0_i32, %c0_i32_0 : i32, i32, i32
  }
  func.func @transform_1(%arg0: i32) -> (i32, i32, i32) {
    %c0_i32 = arith.constant 0 : i32
    %c0_i32_0 = arith.constant 0 : i32
    %c0_i32_1 = arith.constant 0 : i32
    return %arg0, %c0_i32, %c0_i32_0 : i32, i32, i32
  }
  func.func @transform_2(%arg0: i32) -> (i32, i32, i32) {
    %c0_i32 = arith.constant 0 : i32
    %c0_i32_0 = arith.constant 0 : i32
    %c0_i32_1 = arith.constant 0 : i32
    %c0_i32_2 = arith.constant 0 : i32
    return %c0_i32, %c0_i32_0, %c0_i32_1 : i32, i32, i32
  }
  func.func @transform_3(%arg0: i32) -> (i32, i32, i32) {
    %c0_i32 = arith.constant 0 : i32
    %c0_i32_0 = arith.constant 0 : i32
    %c0_i32_1 = arith.constant 0 : i32
    %c0_i32_2 = arith.constant 0 : i32
    return %c0_i32, %c0_i32_0, %c0_i32_1 : i32, i32, i32
  }
  func.func @transform_4(%arg0: i32) -> (i32, i32) {
    %c0_i32 = arith.constant 0 : i32
    %c0_i32_0 = arith.constant 0 : i32
    %c0_i32_1 = arith.constant 0 : i32
    return %c0_i32, %c0_i32_0 : i32, i32
  }
  func.func @transform_5(%arg0: i32) -> (i32, i32, i32) {
    %c0_i32 = arith.constant 0 : i32
    %c0_i32_0 = arith.constant 0 : i32
    %c0_i32_1 = arith.constant 0 : i32
    %c0_i32_2 = arith.constant 0 : i32
    return %c0_i32, %c0_i32_0, %c0_i32_1 : i32, i32, i32
  }
  func.func @transform_6(%arg0: i32) -> (i32, i32, i32) {
    %c0_i32 = arith.constant 0 : i32
    %c0_i32_0 = arith.constant 0 : i32
    %c0_i32_1 = arith.constant 0 : i32
    %c0_i32_2 = arith.constant 0 : i32
    return %c0_i32, %c0_i32_0, %c0_i32_1 : i32, i32, i32
  }
  func.func @transform_7(%arg0: i32) -> (i32, i32) {
    %c0_i32 = arith.constant 0 : i32
    %c0_i32_0 = arith.constant 0 : i32
    %c0_i32_1 = arith.constant 0 : i32
    return %c0_i32, %c0_i32_0 : i32, i32
  }
  func.func @transform_8(%arg0: i32) -> (i32, i32, i32) {
    %c0_i32 = arith.constant 0 : i32
    %c0_i32_0 = arith.constant 0 : i32
    %c0_i32_1 = arith.constant 0 : i32
    %c0_i32_2 = arith.constant 0 : i32
    return %c0_i32, %c0_i32_0, %c0_i32_1 : i32, i32, i32
  }
  func.func @transform_9(%arg0: i32) -> (i32, i32, i32) {
    %c0_i32 = arith.constant 0 : i32
    %c0_i32_0 = arith.constant 0 : i32
    %c0_i32_1 = arith.constant 0 : i32
    %c0_i32_2 = arith.constant 0 : i32
    return %c0_i32, %c0_i32_0, %c0_i32_1 : i32, i32, i32
  }
  func.func @transform_10(%arg0: i32) -> (i32, i32) {
    %c0_i32 = arith.constant 0 : i32
    %c0_i32_0 = arith.constant 0 : i32
    %c0_i32_1 = arith.constant 0 : i32
    return %c0_i32, %c0_i32_0 : i32, i32
  }
  func.func @transform_11(%arg0: i32) -> (i32, i32, i32) {
    %c0_i32 = arith.constant 0 : i32
    %c0_i32_0 = arith.constant 0 : i32
    %c0_i32_1 = arith.constant 0 : i32
    %c0_i32_2 = arith.constant 0 : i32
    return %c0_i32, %c0_i32_0, %c0_i32_1 : i32, i32, i32
  }
  func.func @transform_12(%arg0: i32) -> (i32, i32) {
    %c0_i32 = arith.constant 0 : i32
    %c0_i32_0 = arith.constant 0 : i32
    %c0_i32_1 = arith.constant 0 : i32
    return %c0_i32, %c0_i32_0 : i32, i32
  }
  func.func @transform_13(%arg0: i32) -> (i32, i32) {
    %c0_i32 = arith.constant 0 : i32
    %c0_i32_0 = arith.constant 0 : i32
    %c0_i32_1 = arith.constant 0 : i32
    return %c0_i32, %c0_i32_0 : i32, i32
  }
  func.func @transform_14(%arg0: i32) -> (i32, i32) {
    %c0_i32 = arith.constant 0 : i32
    %c0_i32_0 = arith.constant 0 : i32
    %c0_i32_1 = arith.constant 0 : i32
    return %c0_i32, %c0_i32_0 : i32, i32
  }
  func.func @transform_15(%arg0: i32) -> (i32, i32) {
    %c0_i32 = arith.constant 0 : i32
    %c0_i32_0 = arith.constant 0 : i32
    %c0_i32_1 = arith.constant 0 : i32
    return %c0_i32, %c0_i32_0 : i32, i32
  }
  func.func @transform_16(%arg0: i32) -> (i32, i32, i32) {
    %c0_i32 = arith.constant 0 : i32
    %c0_i32_0 = arith.constant 0 : i32
    %c0_i32_1 = arith.constant 0 : i32
    return %arg0, %c0_i32, %c0_i32_0 : i32, i32, i32
  }
}

</mosaic_0001>

<llo_original>
// kernel: tpu_custom_call.1
$region0: #{tpu_custom_call.1}
  #allocation0 [shape = 'u32[]', space=smem, size = 0x4, offset = 0x4, fixed_abs, tag = 'smem constant byte address 0x4 - core index']
  #allocation1 [shape = 'u32[72,128]{1,0:T(1,128)}', space=vmem, size = 0x9000, scoped, tag = 'internal scratch']
  %s0 = inlined_call_operand.vmem [shape: f32[2,40,120], index: 0, kind: input, shape index: {}]
  %s1 = inlined_call_operand.vmem [shape: f32[2,1,1], index: 1, kind: input, shape index: {}]
  %s2 = inlined_call_operand.hbm [shape: f32[5,18,40], index: 2, kind: input, shape index: {}]
  %s3 = inlined_call_operand.vmem [shape: f32[5,120,288], index: 3, kind: input, shape index: {}]
  %s4 = inlined_call_operand.vmem [shape: f32[1,288], index: 4, kind: input, shape index: {}]
  %s5 = inlined_call_operand.hbm [shape: f32[5,7,18], index: 5, kind: input, shape index: {}]
  %s6 = inlined_call_operand.vmem [shape: f32[5,288,224], index: 6, kind: input, shape index: {}]
  %s7 = inlined_call_operand.vmem [shape: f32[1,224], index: 7, kind: input, shape index: {}]
  %s8 = inlined_call_operand.vmem [shape: f32[5,2,7], index: 8, kind: input, shape index: {}]
  %s9 = inlined_call_operand.hbm [shape: f32[5,224,128], index: 9, kind: input, shape index: {}]
  %s10 = inlined_call_operand.vmem [shape: f32[1,128], index: 10, kind: input, shape index: {}]
  %s11 = inlined_call_operand.vmem [shape: f32[2,128,128], index: 11, kind: input, shape index: {}]
  %s12 = inlined_call_operand.vmem [shape: f32[1,128], index: 12, kind: input, shape index: {}]
  %s13 = inlined_call_operand.vmem [shape: f32[1,128], index: 13, kind: input, shape index: {}]
  %s14 = inlined_call_operand.hbm [shape: f32[128,128], index: 14, kind: input, shape index: {}]
  %s15 = inlined_call_operand.vmem [shape: f32[1,128], index: 15, kind: input, shape index: {}]
  %s16 = inlined_call_operand.hbm [shape: f32[2,1,128], index: 16, kind: output, shape index: {}]
  %s17 = sld [smem:[#allocation0]]
  $region113: #{tpu_custom_call.1} parent=0
    _
  %s19 = ssub.s32 1, %s17
  %s20 = scalar_select 0, %s19, %s17
  $region1: #{tpu_custom_call.1} parent=0
    #allocation2 [shape = 'u8[61440]{0}', space=vmem, size = 0xf000, scoped, tag = 'input window, operand 2, single buffered']
    #allocation3 [shape = 's32[2]{0}', space=sflag, size = 0x8, scoped, tag = 'scoped memory for tpu_custom_call.1']
    #allocation4 [shape = 's32[2]{0}', space=sflag, size = 0x8, scoped, tag = 'scoped memory for tpu_custom_call.1']
    #allocation5 [shape = 'u8[20480]{0}', space=vmem, size = 0x5000, scoped, tag = 'input window, operand 5, single buffered']
    #allocation6 [shape = 's32[1]{0}', space=sflag, size = 0x4, scoped, tag = 'scoped memory for tpu_custom_call.1']
    #allocation7 [shape = 'u8[573440]{0}', space=vmem, size = 0x8c000, scoped, tag = 'input window, operand 9, single buffered']
    #allocation8 [shape = 'u8[65536]{0}', space=vmem, size = 0x10000, scoped, tag = 'input window, operand 14, single buffered']
    #allocation9 [shape = 's32[1]{0}', space=sflag, size = 0x4, scoped, tag = 'scoped memory for tpu_custom_call.1']
    #allocation10 [shape = 'u8[1024]{0}', space=vmem, size = 0x400, scoped, tag = 'output window, operand 0']
    %21 = vsyncpa [#allocation3], 0
    %22 = vsyncpa [#allocation6], 0
    %23 = vsyncpa [#allocation9], 0
    %24 = vsyncpa [#allocation4], 0
    %s25 = scalar_lea.sflag [#allocation4], 1
    %26 = vsyncpa %s25, 0
    loop: start=0, step=1, limit=4
    $region2: #{tpu_custom_call.1} parent=1 // loop_pre_header
      _
    $region3: #{tpu_custom_call.1} parent=1 // loop_header
      %s28 = sphi 0, %s32
      %p29 = scmp.ge.s32.totalorder %s28, 4
      %s38 = sphi 0, %s40
      %s41 = sphi 0, %s38
      %s42 = sphi 0, %s41
      %s58 = sphi 0, %s42
      %s64 = sphi 0, %s66
      %s67 = sphi 0, %s64
      %s68 = sphi 0, %s67
      %s84 = sphi 0, %s68
      %s88 = sphi 0, %s88
      %s90 = sphi 0, %s88
      %s91 = sphi 0, %s90
      %s105 = sphi 0, %s91
      %s109 = sphi 0, %s109
      %s111 = sphi 0, %s109
      %s112 = sphi 0, %s111
      %s126 = sphi 0, %s112
      %s130 = sphi 0, %s130
      %s132 = sphi 0, %s130
      %s133 = sphi 0, %s132
      %s147 = sphi 0, %s133
      %s151 = sphi 0, %s151
      %s153 = sphi 0, %s151
      %s154 = sphi 0, %s153
      %s168 = sphi 0, %s154
      %s172 = sphi 0, %s172
      %s174 = sphi 0, %s172
      %s175 = sphi 0, %s174
      %s189 = sphi 0, %s175
      %s193 = sphi 0, %s193
      %s195 = sphi 0, %s193
      %s196 = sphi 0, %s195
      %s210 = sphi 0, %s196
      %s214 = sphi 0, %s214
      %s216 = sphi 0, %s214
      %s217 = sphi 0, %s216
      %s231 = sphi 0, %s217
      %s235 = sphi 0, %s235
      %s237 = sphi 0, %s235
      %s238 = sphi 0, %s237
      %s252 = sphi 0, %s238
      %s256 = sphi 0, %s256
      %s258 = sphi 0, %s256
      %s259 = sphi 0, %s258
      %s273 = sphi 0, %s259
      %s277 = sphi 0, %s277
      %s279 = sphi 0, %s277
      %s280 = sphi 0, %s279
      %s294 = sphi 0, %s280
      %s298 = sphi 0, %s298
      %s300 = sphi 0, %s298
      %s301 = sphi 0, %s300
      %s315 = sphi 0, %s301
      %s319 = sphi 0, %s319
      %s321 = sphi 0, %s319
      %s322 = sphi 0, %s321
      %s336 = sphi 0, %s322
      %s340 = sphi 0, %s340
      %s342 = sphi 0, %s340
      %s343 = sphi 0, %s342
      %s357 = sphi 0, %s343
      %s361 = sphi 0, %s361
      %s363 = sphi 0, %s361
      %s364 = sphi 0, %s363
      %s378 = sphi 0, %s364
      %s384 = sphi 0, %s386
      %s387 = sphi 0, %s384
      %s388 = sphi 0, %s387
      %s404 = sphi 0, %s388
    $region4: #{tpu_custom_call.1} parent=1 // loop_header_branch
      %31 = sbr.rel (%p29) target = $region8
    $region5: #{tpu_custom_call.1} parent=1 // loop_body
      %s33 = ssub.s32 %s28, 1
      %s34 = ssub.s32 %s28, 2
      %s35 = sadd.s32 %s28, 1
      %s36 = ssub.s32 %s28, %s35
      %p37 = scmp.eq.s32.totalorder %s36, 0
      %s39 = sadd.s32 %s38, 1
      %s40 = scalar_select %p37, %s38, %s39
      %p43 = pneg %p37
      %p44 = scmp.eq.s32.totalorder %s28, 1
      %p45 = por %p43, %p44
      %p46 = scmp.ne.s32.totalorder %s38, %s41
      %p47 = scmp.eq.s32.totalorder %s28, 0
      %p48 = por %p46, %p47
      %p49 = scmp.ne.s32.totalorder %s38, %s41
      %p50 = scmp.eq.s32.totalorder %s33, 1
      %p51 = por %p49, %p50
      %p52 = scmp.ne.s32.totalorder %s41, %s42
      %p53 = scmp.eq.s32.totalorder %s33, 0
      %p54 = por %p52, %p53
      %p55 = scmp.ne.s32.totalorder %s41, %s42
      %p56 = scmp.eq.s32.totalorder %s34, 1
      %p57 = por %p55, %p56
      %p59 = scmp.ne.s32.totalorder %s42, %s58
      %p60 = scmp.eq.s32.totalorder %s34, 0
      %p61 = por %p59, %p60
      %s62 = ssub.s32 %s28, %s35
      %p63 = scmp.eq.s32.totalorder %s62, 0
      %s65 = sadd.s32 %s64, 1
      %s66 = scalar_select %p63, %s64, %s65
      %p69 = pneg %p63
      %p70 = scmp.eq.s32.totalorder %s28, 1
      %p71 = por %p69, %p70
      %p72 = scmp.ne.s32.totalorder %s64, %s67
      %p73 = scmp.eq.s32.totalorder %s28, 0
      %p74 = por %p72, %p73
      %p75 = scmp.ne.s32.totalorder %s64, %s67
      %p76 = scmp.eq.s32.totalorder %s33, 1
      %p77 = por %p75, %p76
      %p78 = scmp.ne.s32.totalorder %s67, %s68
      %p79 = scmp.eq.s32.totalorder %s33, 0
      %p80 = por %p78, %p79
      %p81 = scmp.ne.s32.totalorder %s67, %s68
      %p82 = scmp.eq.s32.totalorder %s34, 1
      %p83 = por %p81, %p82
      %p85 = scmp.ne.s32.totalorder %s68, %s84
      %p86 = scmp.eq.s32.totalorder %s34, 0
      %p87 = por %p85, %p86
      %s89 = sadd.s32 %s88, 1
      %p92 = scmp.eq.s32.totalorder %s28, 1
      %p93 = scmp.ne.s32.totalorder %s88, %s90
      %p94 = scmp.eq.s32.totalorder %s28, 0
      %p95 = por %p93, %p94
      %p96 = scmp.ne.s32.totalorder %s88, %s90
      %p97 = scmp.eq.s32.totalorder %s33, 1
      %p98 = por %p96, %p97
      %p99 = scmp.ne.s32.totalorder %s90, %s91
      %p100 = scmp.eq.s32.totalorder %s33, 0
      %p101 = por %p99, %p100
      %p102 = scmp.ne.s32.totalorder %s90, %s91
      %p103 = scmp.eq.s32.totalorder %s34, 1
      %p104 = por %p102, %p103
      %p106 = scmp.ne.s32.totalorder %s91, %s105
      %p107 = scmp.eq.s32.totalorder %s34, 0
      %p108 = por %p106, %p107
      %s110 = sadd.s32 %s109, 1
      %p113 = scmp.eq.s32.totalorder %s28, 1
      %p114 = scmp.ne.s32.totalorder %s109, %s111
      %p115 = scmp.eq.s32.totalorder %s28, 0
      %p116 = por %p114, %p115
      %p117 = scmp.ne.s32.totalorder %s109, %s111
      %p118 = scmp.eq.s32.totalorder %s33, 1
      %p119 = por %p117, %p118
      %p120 = scmp.ne.s32.totalorder %s111, %s112
      %p121 = scmp.eq.s32.totalorder %s33, 0
      %p122 = por %p120, %p121
      %p123 = scmp.ne.s32.totalorder %s111, %s112
      %p124 = scmp.eq.s32.totalorder %s34, 1
      %p125 = por %p123, %p124
      %p127 = scmp.ne.s32.totalorder %s112, %s126
      %p128 = scmp.eq.s32.totalorder %s34, 0
      %p129 = por %p127, %p128
      %s131 = sadd.s32 %s130, 1
      %p134 = scmp.eq.s32.totalorder %s28, 1
      %p135 = scmp.ne.s32.totalorder %s130, %s132
      %p136 = scmp.eq.s32.totalorder %s28, 0
      %p137 = por %p135, %p136
      %p138 = scmp.ne.s32.totalorder %s130, %s132
      %p139 = scmp.eq.s32.totalorder %s33, 1
      %p140 = por %p138, %p139
      %p141 = scmp.ne.s32.totalorder %s132, %s133
      %p142 = scmp.eq.s32.totalorder %s33, 0
      %p143 = por %p141, %p142
      %p144 = scmp.ne.s32.totalorder %s132, %s133
      %p145 = scmp.eq.s32.totalorder %s34, 1
      %p146 = por %p144, %p145
      %p148 = scmp.ne.s32.totalorder %s133, %s147
      %p149 = scmp.eq.s32.totalorder %s34, 0
      %p150 = por %p148, %p149
      %s152 = sadd.s32 %s151, 1
      %p155 = scmp.eq.s32.totalorder %s28, 1
      %p156 = scmp.ne.s32.totalorder %s151, %s153
      %p157 = scmp.eq.s32.totalorder %s28, 0
      %p158 = por %p156, %p157
      %p159 = scmp.ne.s32.totalorder %s151, %s153
      %p160 = scmp.eq.s32.totalorder %s33, 1
      %p161 = por %p159, %p160
      %p162 = scmp.ne.s32.totalorder %s153, %s154
      %p163 = scmp.eq.s32.totalorder %s33, 0
      %p164 = por %p162, %p163
      %p165 = scmp.ne.s32.totalorder %s153, %s154
      %p166 = scmp.eq.s32.totalorder %s34, 1
      %p167 = por %p165, %p166
      %p169 = scmp.ne.s32.totalorder %s154, %s168
      %p170 = scmp.eq.s32.totalorder %s34, 0
      %p171 = por %p169, %p170
      %s173 = sadd.s32 %s172, 1
      %p176 = scmp.eq.s32.totalorder %s28, 1
      %p177 = scmp.ne.s32.totalorder %s172, %s174
      %p178 = scmp.eq.s32.totalorder %s28, 0
      %p179 = por %p177, %p178
      %p180 = scmp.ne.s32.totalorder %s172, %s174
      %p181 = scmp.eq.s32.totalorder %s33, 1
      %p182 = por %p180, %p181
      %p183 = scmp.ne.s32.totalorder %s174, %s175
      %p184 = scmp.eq.s32.totalorder %s33, 0
      %p185 = por %p183, %p184
      %p186 = scmp.ne.s32.totalorder %s174, %s175
      %p187 = scmp.eq.s32.totalorder %s34, 1
      %p188 = por %p186, %p187
      %p190 = scmp.ne.s32.totalorder %s175, %s189
      %p191 = scmp.eq.s32.totalorder %s34, 0
      %p192 = por %p190, %p191
      %s194 = sadd.s32 %s193, 1
      %p197 = scmp.eq.s32.totalorder %s28, 1
      %p198 = scmp.ne.s32.totalorder %s193, %s195
      %p199 = scmp.eq.s32.totalorder %s28, 0
      %p200 = por %p198, %p199
      %p201 = scmp.ne.s32.totalorder %s193, %s195
      %p202 = scmp.eq.s32.totalorder %s33, 1
      %p203 = por %p201, %p202
      %p204 = scmp.ne.s32.totalorder %s195, %s196
      %p205 = scmp.eq.s32.totalorder %s33, 0
      %p206 = por %p204, %p205
      %p207 = scmp.ne.s32.totalorder %s195, %s196
      %p208 = scmp.eq.s32.totalorder %s34, 1
      %p209 = por %p207, %p208
      %p211 = scmp.ne.s32.totalorder %s196, %s210
      %p212 = scmp.eq.s32.totalorder %s34, 0
      %p213 = por %p211, %p212
      %s215 = sadd.s32 %s214, 1
      %p218 = scmp.eq.s32.totalorder %s28, 1
      %p219 = scmp.ne.s32.totalorder %s214, %s216
      %p220 = scmp.eq.s32.totalorder %s28, 0
      %p221 = por %p219, %p220
      %p222 = scmp.ne.s32.totalorder %s214, %s216
      %p223 = scmp.eq.s32.totalorder %s33, 1
      %p224 = por %p222, %p223
      %p225 = scmp.ne.s32.totalorder %s216, %s217
      %p226 = scmp.eq.s32.totalorder %s33, 0
      %p227 = por %p225, %p226
      %p228 = scmp.ne.s32.totalorder %s216, %s217
      %p229 = scmp.eq.s32.totalorder %s34, 1
      %p230 = por %p228, %p229
      %p232 = scmp.ne.s32.totalorder %s217, %s231
      %p233 = scmp.eq.s32.totalorder %s34, 0
      %p234 = por %p232, %p233
      %s236 = sadd.s32 %s235, 1
      %p239 = scmp.eq.s32.totalorder %s28, 1
      %p240 = scmp.ne.s32.totalorder %s235, %s237
      %p241 = scmp.eq.s32.totalorder %s28, 0
      %p242 = por %p240, %p241
      %p243 = scmp.ne.s32.totalorder %s235, %s237
      %p244 = scmp.eq.s32.totalorder %s33, 1
      %p245 = por %p243, %p244
      %p246 = scmp.ne.s32.totalorder %s237, %s238
      %p247 = scmp.eq.s32.totalorder %s33, 0
      %p248 = por %p246, %p247
      %p249 = scmp.ne.s32.totalorder %s237, %s238
      %p250 = scmp.eq.s32.totalorder %s34, 1
      %p251 = por %p249, %p250
      %p253 = scmp.ne.s32.totalorder %s238, %s252
      %p254 = scmp.eq.s32.totalorder %s34, 0
      %p255 = por %p253, %p254
      %s257 = sadd.s32 %s256, 1
      %p260 = scmp.eq.s32.totalorder %s28, 1
      %p261 = scmp.ne.s32.totalorder %s256, %s258
      %p262 = scmp.eq.s32.totalorder %s28, 0
      %p263 = por %p261, %p262
      %p264 = scmp.ne.s32.totalorder %s256, %s258
      %p265 = scmp.eq.s32.totalorder %s33, 1
      %p266 = por %p264, %p265
      %p267 = scmp.ne.s32.totalorder %s258, %s259
      %p268 = scmp.eq.s32.totalorder %s33, 0
      %p269 = por %p267, %p268
      %p270 = scmp.ne.s32.totalorder %s258, %s259
      %p271 = scmp.eq.s32.totalorder %s34, 1
      %p272 = por %p270, %p271
      %p274 = scmp.ne.s32.totalorder %s259, %s273
      %p275 = scmp.eq.s32.totalorder %s34, 0
      %p276 = por %p274, %p275
      %s278 = sadd.s32 %s277, 1
      %p281 = scmp.eq.s32.totalorder %s28, 1
      %p282 = scmp.ne.s32.totalorder %s277, %s279
      %p283 = scmp.eq.s32.totalorder %s28, 0
      %p284 = por %p282, %p283
      %p285 = scmp.ne.s32.totalorder %s277, %s279
      %p286 = scmp.eq.s32.totalorder %s33, 1
      %p287 = por %p285, %p286
      %p288 = scmp.ne.s32.totalorder %s279, %s280
      %p289 = scmp.eq.s32.totalorder %s33, 0
      %p290 = por %p288, %p289
      %p291 = scmp.ne.s32.totalorder %s279, %s280
      %p292 = scmp.eq.s32.totalorder %s34, 1
      %p293 = por %p291, %p292
      %p295 = scmp.ne.s32.totalorder %s280, %s294
      %p296 = scmp.eq.s32.totalorder %s34, 0
      %p297 = por %p295, %p296
      %s299 = sadd.s32 %s298, 1
      %p302 = scmp.eq.s32.totalorder %s28, 1
      %p303 = scmp.ne.s32.totalorder %s298, %s300
      %p304 = scmp.eq.s32.totalorder %s28, 0
      %p305 = por %p303, %p304
      %p306 = scmp.ne.s32.totalorder %s298, %s300
      %p307 = scmp.eq.s32.totalorder %s33, 1
      %p308 = por %p306, %p307
      %p309 = scmp.ne.s32.totalorder %s300, %s301
      %p310 = scmp.eq.s32.totalorder %s33, 0
      %p311 = por %p309, %p310
      %p312 = scmp.ne.s32.totalorder %s300, %s301
      %p313 = scmp.eq.s32.totalorder %s34, 1
      %p314 = por %p312, %p313
      %p316 = scmp.ne.s32.totalorder %s301, %s315
      %p317 = scmp.eq.s32.totalorder %s34, 0
      %p318 = por %p316, %p317
      %s320 = sadd.s32 %s319, 1
      %p323 = scmp.eq.s32.totalorder %s28, 1
      %p324 = scmp.ne.s32.totalorder %s319, %s321
      %p325 = scmp.eq.s32.totalorder %s28, 0
      %p326 = por %p324, %p325
      %p327 = scmp.ne.s32.totalorder %s319, %s321
      %p328 = scmp.eq.s32.totalorder %s33, 1
      %p329 = por %p327, %p328
      %p330 = scmp.ne.s32.totalorder %s321, %s322
      %p331 = scmp.eq.s32.totalorder %s33, 0
      %p332 = por %p330, %p331
      %p333 = scmp.ne.s32.totalorder %s321, %s322
      %p334 = scmp.eq.s32.totalorder %s34, 1
      %p335 = por %p333, %p334
      %p337 = scmp.ne.s32.totalorder %s322, %s336
      %p338 = scmp.eq.s32.totalorder %s34, 0
      %p339 = por %p337, %p338
      %s341 = sadd.s32 %s340, 1
      %p344 = scmp.eq.s32.totalorder %s28, 1
      %p345 = scmp.ne.s32.totalorder %s340, %s342
      %p346 = scmp.eq.s32.totalorder %s28, 0
      %p347 = por %p345, %p346
      %p348 = scmp.ne.s32.totalorder %s340, %s342
      %p349 = scmp.eq.s32.totalorder %s33, 1
      %p350 = por %p348, %p349
      %p351 = scmp.ne.s32.totalorder %s342, %s343
      %p352 = scmp.eq.s32.totalorder %s33, 0
      %p353 = por %p351, %p352
      %p354 = scmp.ne.s32.totalorder %s342, %s343
      %p355 = scmp.eq.s32.totalorder %s34, 1
      %p356 = por %p354, %p355
      %p358 = scmp.ne.s32.totalorder %s343, %s357
      %p359 = scmp.eq.s32.totalorder %s34, 0
      %p360 = por %p358, %p359
      %s362 = sadd.s32 %s361, 1
      %p365 = scmp.eq.s32.totalorder %s28, 1
      %p366 = scmp.ne.s32.totalorder %s361, %s363
      %p367 = scmp.eq.s32.totalorder %s28, 0
      %p368 = por %p366, %p367
      %p369 = scmp.ne.s32.totalorder %s361, %s363
      %p370 = scmp.eq.s32.totalorder %s33, 1
      %p371 = por %p369, %p370
      %p372 = scmp.ne.s32.totalorder %s363, %s364
      %p373 = scmp.eq.s32.totalorder %s33, 0
      %p374 = por %p372, %p373
      %p375 = scmp.ne.s32.totalorder %s363, %s364
      %p376 = scmp.eq.s32.totalorder %s34, 1
      %p377 = por %p375, %p376
      %p379 = scmp.ne.s32.totalorder %s364, %s378
      %p380 = scmp.eq.s32.totalorder %s34, 0
      %p381 = por %p379, %p380
      %s382 = ssub.s32 %s28, %s35
      %p383 = scmp.eq.s32.totalorder %s382, 0
      %s385 = sadd.s32 %s384, 1
      %s386 = scalar_select %p383, %s384, %s385
      %p389 = pneg %p383
      %p390 = scmp.eq.s32.totalorder %s28, 1
      %p391 = por %p389, %p390
      %p392 = scmp.ne.s32.totalorder %s384, %s387
      %p393 = scmp.eq.s32.totalorder %s28, 0
      %p394 = por %p392, %p393
      %p395 = scmp.ne.s32.totalorder %s384, %s387
      %p396 = scmp.eq.s32.totalorder %s33, 1
      %p397 = por %p395, %p396
      %p398 = scmp.ne.s32.totalorder %s387, %s388
      %p399 = scmp.eq.s32.totalorder %s33, 0
      %p400 = por %p398, %p399
      %p401 = scmp.ne.s32.totalorder %s387, %s388
      %p402 = scmp.eq.s32.totalorder %s34, 1
      %p403 = por %p401, %p402
      %p405 = scmp.ne.s32.totalorder %s388, %s404
      %p406 = scmp.eq.s32.totalorder %s34, 0
      %p407 = por %p405, %p406
      %p408 = scmp.le.s32.totalorder 1, %s28
      %p409 = scmp.lt.s32.totalorder %s28, 3
      %p410 = pnand %p408, %p409
      %p411 = pneg %p410
      // Predicated region
      $region9: #{tpu_custom_call.1} parent=5 // pred_check
        _
      $region10: #{tpu_custom_call.1} parent=5 // pred_check_branch
        %413 = sbr.rel (%p410) target = $region12
      $region11: #{tpu_custom_call.1} parent=5 // pred_region
        %s414 = ssub.s32 %s28, 1
        // Predicated region
        $region13: #{tpu_custom_call.1} parent=11 // pred_check
          %p415 = pneg %p101
        $region14: #{tpu_custom_call.1} parent=11 // pred_check_branch
          %417 = sbr.rel (%p415) target = $region16
        $region15: #{tpu_custom_call.1} parent=11 // pred_region
          %419 = vsyncadd [#allocation3], 0
          %s420 = sshll.u32 %s2, 4
          %s421 = int_to_ptr.hbm [resolvable:$true] %s420
          %s422 = sshll.u32 [#allocation2], 4
          %s423 = int_to_ptr.vmem [resolvable:$true] %s422
          %428 = dma.hbm_to_vmem [thread:$0]  %s421, 1920, %s423, [#allocation3], 128, 128, 8
        $region16: #{tpu_custom_call.1} parent=11 // pred_fallthru
          _
        // Predicated region
        $region17: #{tpu_custom_call.1} parent=11 // pred_check
          %p429 = pneg %p122
        $region18: #{tpu_custom_call.1} parent=11 // pred_check_branch
          %431 = sbr.rel (%p429) target = $region20
        $region19: #{tpu_custom_call.1} parent=11 // pred_region
          _
        $region20: #{tpu_custom_call.1} parent=11 // pred_fallthru
          _
        // Predicated region
        $region21: #{tpu_custom_call.1} parent=11 // pred_check
          %p432 = pneg %p143
        $region22: #{tpu_custom_call.1} parent=11 // pred_check_branch
          %434 = sbr.rel (%p432) target = $region24
        $region23: #{tpu_custom_call.1} parent=11 // pred_region
          _
        $region24: #{tpu_custom_call.1} parent=11 // pred_fallthru
          _
        // Predicated region
        $region25: #{tpu_custom_call.1} parent=11 // pred_check
          %p435 = pneg %p164
        $region26: #{tpu_custom_call.1} parent=11 // pred_check_branch
          %437 = sbr.rel (%p435) target = $region28
        $region27: #{tpu_custom_call.1} parent=11 // pred_region
          %439 = vsyncadd [#allocation6], 0
          %s440 = sshll.u32 %s5, 4
          %s441 = int_to_ptr.hbm [resolvable:$true] %s440
          %s442 = sshll.u32 [#allocation5], 4
          %s443 = int_to_ptr.vmem [resolvable:$true] %s442
          %448 = dma.hbm_to_vmem [thread:$0]  %s441, 640, %s443, [#allocation6], 128, 128, 8
        $region28: #{tpu_custom_call.1} parent=11 // pred_fallthru
          _
        // Predicated region
        $region29: #{tpu_custom_call.1} parent=11 // pred_check
          %p449 = pneg %p185
        $region30: #{tpu_custom_call.1} parent=11 // pred_check_branch
          %451 = sbr.rel (%p449) target = $region32
        $region31: #{tpu_custom_call.1} parent=11 // pred_region
          _
        $region32: #{tpu_custom_call.1} parent=11 // pred_fallthru
          _
        // Predicated region
        $region33: #{tpu_custom_call.1} parent=11 // pred_check
          %p452 = pneg %p206
        $region34: #{tpu_custom_call.1} parent=11 // pred_check_branch
          %454 = sbr.rel (%p452) target = $region36
        $region35: #{tpu_custom_call.1} parent=11 // pred_region
          _
        $region36: #{tpu_custom_call.1} parent=11 // pred_fallthru
          _
        // Predicated region
        $region37: #{tpu_custom_call.1} parent=11 // pred_check
          %p455 = pneg %p227
        $region38: #{tpu_custom_call.1} parent=11 // pred_check_branch
          %457 = sbr.rel (%p455) target = $region40
        $region39: #{tpu_custom_call.1} parent=11 // pred_region
          _
        $region40: #{tpu_custom_call.1} parent=11 // pred_fallthru
          _
        // Predicated region
        $region41: #{tpu_custom_call.1} parent=11 // pred_check
          %p458 = pneg %p248
        $region42: #{tpu_custom_call.1} parent=11 // pred_check_branch
          %460 = sbr.rel (%p458) target = $region44
        $region43: #{tpu_custom_call.1} parent=11 // pred_region
          %462 = vsyncadd [#allocation6], 0
          %s463 = sshll.u32 %s9, 4
          %s464 = int_to_ptr.hbm [resolvable:$true] %s463
          %s465 = sshll.u32 [#allocation7], 4
          %s466 = int_to_ptr.vmem [resolvable:$true] %s465
          %471 = dma.hbm_to_vmem [thread:$0]  %s464, 17920, %s466, [#allocation6], 128, 128, 8
        $region44: #{tpu_custom_call.1} parent=11 // pred_fallthru
          _
        // Predicated region
        $region45: #{tpu_custom_call.1} parent=11 // pred_check
          %p472 = pneg %p269
        $region46: #{tpu_custom_call.1} parent=11 // pred_check_branch
          %474 = sbr.rel (%p472) target = $region48
        $region47: #{tpu_custom_call.1} parent=11 // pred_region
          _
        $region48: #{tpu_custom_call.1} parent=11 // pred_fallthru
          _
        // Predicated region
        $region49: #{tpu_custom_call.1} parent=11 // pred_check
          %p475 = pneg %p290
        $region50: #{tpu_custom_call.1} parent=11 // pred_check_branch
          %477 = sbr.rel (%p475) target = $region52
        $region51: #{tpu_custom_call.1} parent=11 // pred_region
          _
        $region52: #{tpu_custom_call.1} parent=11 // pred_fallthru
          _
        // Predicated region
        $region53: #{tpu_custom_call.1} parent=11 // pred_check
          %p478 = pneg %p311
        $region54: #{tpu_custom_call.1} parent=11 // pred_check_branch
          %480 = sbr.rel (%p478) target = $region56
        $region55: #{tpu_custom_call.1} parent=11 // pred_region
          _
        $region56: #{tpu_custom_call.1} parent=11 // pred_fallthru
          _
        // Predicated region
        $region57: #{tpu_custom_call.1} parent=11 // pred_check
          %p481 = pneg %p332
        $region58: #{tpu_custom_call.1} parent=11 // pred_check_branch
          %483 = sbr.rel (%p481) target = $region60
        $region59: #{tpu_custom_call.1} parent=11 // pred_region
          _
        $region60: #{tpu_custom_call.1} parent=11 // pred_fallthru
          _
        // Predicated region
        $region61: #{tpu_custom_call.1} parent=11 // pred_check
          %p484 = pneg %p353
        $region62: #{tpu_custom_call.1} parent=11 // pred_check_branch
          %486 = sbr.rel (%p484) target = $region64
        $region63: #{tpu_custom_call.1} parent=11 // pred_region
          %488 = vsyncadd [#allocation9], 0
          %s489 = sshll.u32 %s14, 4
          %s490 = int_to_ptr.hbm [resolvable:$true] %s489
          %s491 = sshll.u32 [#allocation8], 4
          %s492 = int_to_ptr.vmem [resolvable:$true] %s491
          %497 = dma.hbm_to_vmem [thread:$0]  %s490, 2048, %s492, [#allocation9], 128, 128, 8
        $region64: #{tpu_custom_call.1} parent=11 // pred_fallthru
          _
        // Predicated region
        $region65: #{tpu_custom_call.1} parent=11 // pred_check
          %p498 = pneg %p374
        $region66: #{tpu_custom_call.1} parent=11 // pred_check_branch
          %500 = sbr.rel (%p498) target = $region68
        $region67: #{tpu_custom_call.1} parent=11 // pred_region
          _
        $region68: #{tpu_custom_call.1} parent=11 // pred_fallthru
          _
      $region12: #{tpu_custom_call.1} parent=5 // pred_fallthru
        _
      %p501 = scmp.lt.s32.totalorder %s28, 2
      // Predicated region
      $region69: #{tpu_custom_call.1} parent=5 // pred_check
        %p502 = pneg %p501
      $region70: #{tpu_custom_call.1} parent=5 // pred_check_branch
        %504 = sbr.rel (%p502) target = $region72
      $region71: #{tpu_custom_call.1} parent=5 // pred_region
        // Predicated region
        $region73: #{tpu_custom_call.1} parent=71 // pred_check
          %p505 = pneg %p48
        $region74: #{tpu_custom_call.1} parent=71 // pred_check_branch
          %507 = sbr.rel (%p505) target = $region76
        $region75: #{tpu_custom_call.1} parent=71 // pred_region
          %p508 = scmp.lt.s32.totalorder %s28, 1
          %s509 = scalar_select %p508, %s28, 1
          %s510 = smul.addr %s509, 5
          %s511 = smul.addr %s510, 8
          %s512 = scalar_lea.vmem %s0, %s511
        $region76: #{tpu_custom_call.1} parent=71 // pred_fallthru
          _
        // Predicated region
        $region77: #{tpu_custom_call.1} parent=71 // pred_check
          %p513 = pneg %p74
        $region78: #{tpu_custom_call.1} parent=71 // pred_check_branch
          %515 = sbr.rel (%p513) target = $region80
        $region79: #{tpu_custom_call.1} parent=71 // pred_region
          %p516 = scmp.lt.s32.totalorder %s28, 1
          %s517 = scalar_select %p516, %s28, 1
          %s518 = scalar_lea.vmem %s1, %s517
        $region80: #{tpu_custom_call.1} parent=71 // pred_fallthru
          _
      $region72: #{tpu_custom_call.1} parent=5 // pred_fallthru
        _
      %p519 = scmp.le.s32.totalorder 1, %s28
      %p520 = scmp.lt.s32.totalorder %s28, 3
      %p521 = pnand %p519, %p520
      %p522 = pneg %p521
      // Predicated region
      $region81: #{tpu_custom_call.1} parent=5 // pred_check
        _
      $region82: #{tpu_custom_call.1} parent=5 // pred_check_branch
        %524 = sbr.rel (%p521) target = $region84
      $region83: #{tpu_custom_call.1} parent=5 // pred_region
        %s525 = ssub.s32 %s28, 1
        // Predicated region
        $region85: #{tpu_custom_call.1} parent=83 // pred_check
          %p526 = pneg %p101
        $region86: #{tpu_custom_call.1} parent=83 // pred_check_branch
          %528 = sbr.rel (%p526) target = $region88
        $region87: #{tpu_custom_call.1} parent=83 // pred_region
          %530 = dma.done [#allocation3], 1920
        $region88: #{tpu_custom_call.1} parent=83 // pred_fallthru
          _
        // Predicated region
        $region89: #{tpu_custom_call.1} parent=83 // pred_check
          %p531 = pneg %p164
        $region90: #{tpu_custom_call.1} parent=83 // pred_check_branch
          %533 = sbr.rel (%p531) target = $region92
        $region91: #{tpu_custom_call.1} parent=83 // pred_region
          %535 = dma.done [#allocation6], 640
        $region92: #{tpu_custom_call.1} parent=83 // pred_fallthru
          _
        // Predicated region
        $region93: #{tpu_custom_call.1} parent=83 // pred_check
          %p536 = pneg %p248
        $region94: #{tpu_custom_call.1} parent=83 // pred_check_branch
          %538 = sbr.rel (%p536) target = $region96
        $region95: #{tpu_custom_call.1} parent=83 // pred_region
          %540 = dma.done [#allocation6], 17920
        $region96: #{tpu_custom_call.1} parent=83 // pred_fallthru
          _
        // Predicated region
        $region97: #{tpu_custom_call.1} parent=83 // pred_check
          %p541 = pneg %p353
        $region98: #{tpu_custom_call.1} parent=83 // pred_check_branch
          %543 = sbr.rel (%p541) target = $region100
        $region99: #{tpu_custom_call.1} parent=83 // pred_region
          %545 = dma.done [#allocation9], 2048
        $region100: #{tpu_custom_call.1} parent=83 // pred_fallthru
          _
        %p546 = scmp.lt.s32.totalorder %s33, 1
        %s547 = scalar_select %p546, %s33, 1
        %s548 = smul.addr %s547, 5
        %s549 = smul.addr %s548, 8
        %s550 = scalar_lea.vmem %s0, %s549
        %p551 = pneg %p54
        %p552 = pneg %p51
        %p553 = scmp.lt.s32.totalorder %s33, 1
        %s554 = scalar_select %p553, %s33, 1
        %s555 = scalar_lea.vmem %s1, %s554
        %p556 = pneg %p80
        %p557 = pneg %p77
        %p558 = pneg %p101
        %p559 = pneg %p98
        %p560 = pneg %p122
        %p561 = pneg %p119
        %p562 = pneg %p143
        %p563 = pneg %p140
        %p564 = pneg %p164
        %p565 = pneg %p161
        %p566 = pneg %p185
        %p567 = pneg %p182
        %p568 = pneg %p206
        %p569 = pneg %p203
        %p570 = pneg %p227
        %p571 = pneg %p224
        %p572 = pneg %p248
        %p573 = pneg %p245
        %p574 = pneg %p269
        %p575 = pneg %p266
        %p576 = pneg %p290
        %p577 = pneg %p287
        %p578 = pneg %p311
        %p579 = pneg %p308
        %p580 = pneg %p332
        %p581 = pneg %p329
        %p582 = pneg %p353
        %p583 = pneg %p350
        %p584 = pneg %p374
        %p585 = pneg %p371
        %p586 = pneg %p400
        %p587 = pneg %p397
        %s588 = sand.u32 %s387, 1
        %s589 = scalar_lea.sflag [#allocation4], %s588
        %s590 = sand.u32 %s387, 1
        %s591 = scalar_lea.vmem [#allocation10], %s590
        %p592 = scmp.lt.s32.totalorder %s33, 1
        %s593 = scalar_select %p592, %s33, 1
        %s594 = smul.addr %s593, 5
        %s595 = smul.addr %s594, 8
        %s596 = scalar_lea.vmem %s0, %s595
        %p597 = scmp.lt.s32.totalorder %s33, 1
        %s598 = scalar_select %p597, %s33, 1
        %s599 = scalar_lea.vmem %s1, %s598
        %v600 = vld [vmem:[%s596] sm:$0xff]
        %v601 = vld [vmem:[%s596 + $0x8] sm:$0xff]
        %v602 = vld [vmem:[%s596 + $0x10] sm:$0xff]
        %v603 = vld [vmem:[%s596 + $0x18] sm:$0xff]
        %v604 = vld [vmem:[%s596 + $0x20] sm:$0xff]
        %v605 = vld [vmem:[#allocation2] sm:$0xff]
        %v606 = vld [vmem:[#allocation2 + $0x8] sm:$0xff]
        %v607 = vld [vmem:[#allocation2 + $0x10] sm:$0x3]
        %vm608 = vcmask 326656
        %v610 = vsel %vm608, %v605, 0
        %v613 = vsel %vm608, %v606, 0
        %v616 = vsel %vm608, %v607, 0
        %618 = vmatpush.msra.mxu0 0.0
        %619 = vmatpush.msra.mxu0 0.0
        %620 = vmatpush.msra.mxu0 0.0
        %621 = vmatpush.msra.mxu0 0.0
        %622 = vmatpush.msra.mxu0 0.0
        %623 = vmatpush.msra.mxu0 0.0
        %624 = vmatpush.msra.mxu0 0.0
        %625 = vmatpush.msra.mxu0 0.0
        %626 = vmatpush.msra.mxu0 0.0
        %627 = vmatpush.msra.mxu0 0.0
        %628 = vmatpush.msra.mxu0 0.0
        %629 = vmatpush.msra.mxu0 %v604
        %630 = vmatpush.msra.mxu0 %v603
        %631 = vmatpush.msra.mxu0 %v602
        %632 = vmatpush.msra.mxu0 %v601
        %633 = vmatpush.msra.mxu0 %v600
        %634 = vmatmul.f32.gmra.mxu0 %v610
        %v635 = vpop.f32.mrf.mxu0
        %v636 = vadd.f32 0.0, %v635
        %637 = vmatmul.f32.gmra.mxu0 %v613
        %v638 = vpop.f32.mrf.mxu0
        %v639 = vadd.f32 0.0, %v638
        %640 = vmatmul.f32.gmra.mxu0 %v616
        %v641 = vpop.f32.mrf.mxu0
        %v642 = vadd.f32 0.0, %v641
        %643 = vdwg.mxu0
        %v644 = vld [vmem:[%s3] sm:$0xff]
        %v645 = vld [vmem:[%s3 + $0x8] sm:$0xff]
        %v646 = vld [vmem:[%s3 + $0x10] sm:$0xff]
        %v647 = vld [vmem:[%s3 + $0x18] sm:$0xff]
        %v648 = vld [vmem:[%s3 + $0x20] sm:$0xff]
        %v649 = vld [vmem:[%s3 + $0x28] sm:$0xff]
        %v650 = vld [vmem:[%s3 + $0x30] sm:$0xff]
        %v651 = vld [vmem:[%s3 + $0x38] sm:$0xff]
        %v652 = vld [vmem:[%s3 + $0x40] sm:$0xff]
        %v653 = vld [vmem:[%s3 + $0x48] sm:$0xff]
        %v654 = vld [vmem:[%s3 + $0x50] sm:$0xff]
        %v655 = vld [vmem:[%s3 + $0x58] sm:$0xff]
        %v656 = vld [vmem:[%s3 + $0x60] sm:$0xff]
        %v657 = vld [vmem:[%s3 + $0x68] sm:$0xff]
        %v658 = vld [vmem:[%s3 + $0x70] sm:$0xff]
        %v659 = vld [vmem:[%s3 + $0x78] sm:$0xff]
        %v660 = vld [vmem:[%s3 + $0x80] sm:$0xff]
        %v661 = vld [vmem:[%s3 + $0x88] sm:$0xff]
        %v662 = vld [vmem:[%s3 + $0x90] sm:$0xff]
        %v663 = vld [vmem:[%s3 + $0x98] sm:$0xff]
        %v664 = vld [vmem:[%s3 + $0xa0] sm:$0xff]
        %v665 = vld [vmem:[%s3 + $0xa8] sm:$0xff]
        %v666 = vld [vmem:[%s3 + $0xb0] sm:$0xff]
        %v667 = vld [vmem:[%s3 + $0xb8] sm:$0xff]
        %v668 = vld [vmem:[%s3 + $0xc0] sm:$0xff]
        %v669 = vld [vmem:[%s3 + $0xc8] sm:$0xff]
        %v670 = vld [vmem:[%s3 + $0xd0] sm:$0xff]
        %v671 = vld [vmem:[%s3 + $0xd8] sm:$0xff]
        %v672 = vld [vmem:[%s3 + $0xe0] sm:$0xff]
        %v673 = vld [vmem:[%s3 + $0xe8] sm:$0xff]
        %v674 = vld [vmem:[%s3 + $0xf0] sm:$0xff]
        %v675 = vld [vmem:[%s3 + $0xf8] sm:$0xff]
        %v676 = vld [vmem:[%s3 + $0x100] sm:$0xff]
        %v677 = vld [vmem:[%s3 + $0x108] sm:$0xff]
        %v678 = vld [vmem:[%s3 + $0x110] sm:$0xff]
        %v679 = vld [vmem:[%s3 + $0x118] sm:$0xff]
        %v680 = vld [vmem:[%s3 + $0x120] sm:$0xff]
        %v681 = vld [vmem:[%s3 + $0x128] sm:$0xff]
        %v682 = vld [vmem:[%s3 + $0x130] sm:$0xff]
        %v683 = vld [vmem:[%s3 + $0x138] sm:$0xff]
        %v684 = vld [vmem:[%s3 + $0x140] sm:$0xff]
        %v685 = vld [vmem:[%s3 + $0x148] sm:$0xff]
        %v686 = vld [vmem:[%s3 + $0x150] sm:$0xff]
        %v687 = vld [vmem:[%s3 + $0x158] sm:$0xff]
        %v688 = vld [vmem:[%s3 + $0x160] sm:$0xff]
        %s689 = scalar_lea.vmem [#allocation2], 24
        %v690 = vld [vmem:[%s689] sm:$0xff]
        %v691 = vld [vmem:[%s689 + $0x8] sm:$0xff]
        %v692 = vld [vmem:[%s689 + $0x10] sm:$0x3]
        %v694 = vsel %vm608, %v690, 0
        %v697 = vsel %vm608, %v691, 0
        %v700 = vsel %vm608, %v692, 0
        %702 = vmatpush.msra.mxu0 0.0
        %703 = vmatpush.msra.mxu0 0.0
        %704 = vmatpush.msra.mxu0 0.0
        %705 = vmatpush.msra.mxu0 0.0
        %706 = vmatpush.msra.mxu0 0.0
        %707 = vmatpush.msra.mxu0 0.0
        %708 = vmatpush.msra.mxu0 0.0
        %709 = vmatpush.msra.mxu0 0.0
        %710 = vmatpush.msra.mxu0 0.0
        %711 = vmatpush.msra.mxu0 0.0
        %712 = vmatpush.msra.mxu0 0.0
        %713 = vmatpush.msra.mxu0 %v604
        %714 = vmatpush.msra.mxu0 %v603
        %715 = vmatpush.msra.mxu0 %v602
        %716 = vmatpush.msra.mxu0 %v601
        %717 = vmatpush.msra.mxu0 %v600
        %718 = vmatmul.f32.gmra.mxu0 %v694
        %v719 = vpop.f32.mrf.mxu0
        %v720 = vadd.f32 0.0, %v719
        %721 = vmatmul.f32.gmra.mxu0 %v697
        %v722 = vpop.f32.mrf.mxu0
        %v723 = vadd.f32 0.0, %v722
        %724 = vmatmul.f32.gmra.mxu0 %v700
        %v725 = vpop.f32.mrf.mxu0
        %v726 = vadd.f32 0.0, %v725
        %727 = vdwg.mxu0
        %s728 = scalar_lea.vmem %s3, 360
        %v729 = vld [vmem:[%s728] sm:$0xff]
        %v730 = vld [vmem:[%s728 + $0x8] sm:$0xff]
        %v731 = vld [vmem:[%s728 + $0x10] sm:$0xff]
        %v732 = vld [vmem:[%s728 + $0x18] sm:$0xff]
        %v733 = vld [vmem:[%s728 + $0x20] sm:$0xff]
        %v734 = vld [vmem:[%s728 + $0x28] sm:$0xff]
        %v735 = vld [vmem:[%s728 + $0x30] sm:$0xff]
        %v736 = vld [vmem:[%s728 + $0x38] sm:$0xff]
        %v737 = vld [vmem:[%s728 + $0x40] sm:$0xff]
        %v738 = vld [vmem:[%s728 + $0x48] sm:$0xff]
        %v739 = vld [vmem:[%s728 + $0x50] sm:$0xff]
        %v740 = vld [vmem:[%s728 + $0x58] sm:$0xff]
        %v741 = vld [vmem:[%s728 + $0x60] sm:$0xff]
        %v742 = vld [vmem:[%s728 + $0x68] sm:$0xff]
        %v743 = vld [vmem:[%s728 + $0x70] sm:$0xff]
        %v744 = vld [vmem:[%s728 + $0x78] sm:$0xff]
        %v745 = vld [vmem:[%s728 + $0x80] sm:$0xff]
        %v746 = vld [vmem:[%s728 + $0x88] sm:$0xff]
        %v747 = vld [vmem:[%s728 + $0x90] sm:$0xff]
        %v748 = vld [vmem:[%s728 + $0x98] sm:$0xff]
        %v749 = vld [vmem:[%s728 + $0xa0] sm:$0xff]
        %v750 = vld [vmem:[%s728 + $0xa8] sm:$0xff]
        %v751 = vld [vmem:[%s728 + $0xb0] sm:$0xff]
        %v752 = vld [vmem:[%s728 + $0xb8] sm:$0xff]
        %v753 = vld [vmem:[%s728 + $0xc0] sm:$0xff]
        %v754 = vld [vmem:[%s728 + $0xc8] sm:$0xff]
        %v755 = vld [vmem:[%s728 + $0xd0] sm:$0xff]
        %v756 = vld [vmem:[%s728 + $0xd8] sm:$0xff]
        %v757 = vld [vmem:[%s728 + $0xe0] sm:$0xff]
        %v758 = vld [vmem:[%s728 + $0xe8] sm:$0xff]
        %v759 = vld [vmem:[%s728 + $0xf0] sm:$0xff]
        %v760 = vld [vmem:[%s728 + $0xf8] sm:$0xff]
        %v761 = vld [vmem:[%s728 + $0x100] sm:$0xff]
        %v762 = vld [vmem:[%s728 + $0x108] sm:$0xff]
        %v763 = vld [vmem:[%s728 + $0x110] sm:$0xff]
        %v764 = vld [vmem:[%s728 + $0x118] sm:$0xff]
        %v765 = vld [vmem:[%s728 + $0x120] sm:$0xff]
        %v766 = vld [vmem:[%s728 + $0x128] sm:$0xff]
        %v767 = vld [vmem:[%s728 + $0x130] sm:$0xff]
        %v768 = vld [vmem:[%s728 + $0x138] sm:$0xff]
        %v769 = vld [vmem:[%s728 + $0x140] sm:$0xff]
        %v770 = vld [vmem:[%s728 + $0x148] sm:$0xff]
        %v771 = vld [vmem:[%s728 + $0x150] sm:$0xff]
        %v772 = vld [vmem:[%s728 + $0x158] sm:$0xff]
        %v773 = vld [vmem:[%s728 + $0x160] sm:$0xff]
        %vm774 = vcmask 982016
        %v776 = vsel %vm774, %v720, 0
        %v779 = vsel %vm774, %v723, 0
        %v782 = vsel %vm774, %v726, 0
        %784 = vmatpush.msra.mxu0 0.0
        %785 = vmatpush.msra.mxu0 %v771
        %786 = vmatpush.msra.mxu0 %v768
        %787 = vmatpush.msra.mxu0 %v765
        %788 = vmatpush.msra.mxu0 %v762
        %789 = vmatpush.msra.mxu0 %v759
        %790 = vmatpush.msra.mxu0 %v756
        %791 = vmatpush.msra.mxu0 %v753
        %792 = vmatpush.msra.mxu0 %v750
        %793 = vmatpush.msra.mxu0 %v747
        %794 = vmatpush.msra.mxu0 %v744
        %795 = vmatpush.msra.mxu0 %v741
        %796 = vmatpush.msra.mxu0 %v738
        %797 = vmatpush.msra.mxu0 %v735
        %798 = vmatpush.msra.mxu0 %v732
        %799 = vmatpush.msra.mxu0 %v729
        %800 = vmatmul.f32.gmra.mxu0 %v776
        %v801 = vpop.f32.mrf.mxu0
        %v802 = vadd.f32 0.0, %v801
        %803 = vmatmul.f32.gmra.mxu0 %v779
        %v804 = vpop.f32.mrf.mxu0
        %v805 = vadd.f32 0.0, %v804
        %806 = vmatmul.f32.gmra.mxu0 %v782
        %v807 = vpop.f32.mrf.mxu0
        %v808 = vadd.f32 0.0, %v807
        %809 = vdwg.mxu0
        %810 = vmatpush.msra.mxu0 0.0
        %811 = vmatpush.msra.mxu0 %v772
        %812 = vmatpush.msra.mxu0 %v769
        %813 = vmatpush.msra.mxu0 %v766
        %814 = vmatpush.msra.mxu0 %v763
        %815 = vmatpush.msra.mxu0 %v760
        %816 = vmatpush.msra.mxu0 %v757
        %817 = vmatpush.msra.mxu0 %v754
        %818 = vmatpush.msra.mxu0 %v751
        %819 = vmatpush.msra.mxu0 %v748
        %820 = vmatpush.msra.mxu0 %v745
        %821 = vmatpush.msra.mxu0 %v742
        %822 = vmatpush.msra.mxu0 %v739
        %823 = vmatpush.msra.mxu0 %v736
        %824 = vmatpush.msra.mxu0 %v733
        %825 = vmatpush.msra.mxu0 %v730
        %826 = vmatmul.f32.gmra.mxu0 %v776
        %v827 = vpop.f32.mrf.mxu0
        %v828 = vadd.f32 0.0, %v827
        %829 = vmatmul.f32.gmra.mxu0 %v779
        %v830 = vpop.f32.mrf.mxu0
        %v831 = vadd.f32 0.0, %v830
        %832 = vmatmul.f32.gmra.mxu0 %v782
        %v833 = vpop.f32.mrf.mxu0
        %v834 = vadd.f32 0.0, %v833
        %835 = vdwg.mxu0
        %836 = vmatpush.msra.mxu0 0.0
        %837 = vmatpush.msra.mxu0 %v773
        %838 = vmatpush.msra.mxu0 %v770
        %839 = vmatpush.msra.mxu0 %v767
        %840 = vmatpush.msra.mxu0 %v764
        %841 = vmatpush.msra.mxu0 %v761
        %842 = vmatpush.msra.mxu0 %v758
        %843 = vmatpush.msra.mxu0 %v755
        %844 = vmatpush.msra.mxu0 %v752
        %845 = vmatpush.msra.mxu0 %v749
        %846 = vmatpush.msra.mxu0 %v746
        %847 = vmatpush.msra.mxu0 %v743
        %848 = vmatpush.msra.mxu0 %v740
        %849 = vmatpush.msra.mxu0 %v737
        %850 = vmatpush.msra.mxu0 %v734
        %851 = vmatpush.msra.mxu0 %v731
        %852 = vmatmul.f32.gmra.mxu0 %v776
        %v853 = vpop.f32.mrf.mxu0
        %v854 = vadd.f32 0.0, %v853
        %855 = vmatmul.f32.gmra.mxu0 %v779
        %v856 = vpop.f32.mrf.mxu0
        %v857 = vadd.f32 0.0, %v856
        %858 = vmatmul.f32.gmra.mxu0 %v782
        %v859 = vpop.f32.mrf.mxu0
        %v860 = vadd.f32 0.0, %v859
        %861 = vdwg.mxu0
        %v863 = vsel %vm774, %v636, 0
        %v866 = vsel %vm774, %v639, 0
        %v869 = vsel %vm774, %v642, 0
        %871 = vmatpush.msra.mxu0 0.0
        %872 = vmatpush.msra.mxu0 %v686
        %873 = vmatpush.msra.mxu0 %v683
        %874 = vmatpush.msra.mxu0 %v680
        %875 = vmatpush.msra.mxu0 %v677
        %876 = vmatpush.msra.mxu0 %v674
        %877 = vmatpush.msra.mxu0 %v671
        %878 = vmatpush.msra.mxu0 %v668
        %879 = vmatpush.msra.mxu0 %v665
        %880 = vmatpush.msra.mxu0 %v662
        %881 = vmatpush.msra.mxu0 %v659
        %882 = vmatpush.msra.mxu0 %v656
        %883 = vmatpush.msra.mxu0 %v653
        %884 = vmatpush.msra.mxu0 %v650
        %885 = vmatpush.msra.mxu0 %v647
        %886 = vmatpush.msra.mxu0 %v644
        %887 = vmatmul.f32.gmra.mxu0 %v863
        %v888 = vpop.f32.mrf.mxu0
        %v889 = vadd.f32 %v802, %v888
        %890 = vmatmul.f32.gmra.mxu0 %v866
        %v891 = vpop.f32.mrf.mxu0
        %v892 = vadd.f32 %v805, %v891
        %893 = vmatmul.f32.gmra.mxu0 %v869
        %v894 = vpop.f32.mrf.mxu0
        %v895 = vadd.f32 %v808, %v894
        %896 = vdwg.mxu0
        %897 = vmatpush.msra.mxu0 0.0
        %898 = vmatpush.msra.mxu0 %v687
        %899 = vmatpush.msra.mxu0 %v684
        %900 = vmatpush.msra.mxu0 %v681
        %901 = vmatpush.msra.mxu0 %v678
        %902 = vmatpush.msra.mxu0 %v675
        %903 = vmatpush.msra.mxu0 %v672
        %904 = vmatpush.msra.mxu0 %v669
        %905 = vmatpush.msra.mxu0 %v666
        %906 = vmatpush.msra.mxu0 %v663
        %907 = vmatpush.msra.mxu0 %v660
        %908 = vmatpush.msra.mxu0 %v657
        %909 = vmatpush.msra.mxu0 %v654
        %910 = vmatpush.msra.mxu0 %v651
        %911 = vmatpush.msra.mxu0 %v648
        %912 = vmatpush.msra.mxu0 %v645
        %913 = vmatmul.f32.gmra.mxu0 %v863
        %v914 = vpop.f32.mrf.mxu0
        %v915 = vadd.f32 %v828, %v914
        %916 = vmatmul.f32.gmra.mxu0 %v866
        %v917 = vpop.f32.mrf.mxu0
        %v918 = vadd.f32 %v831, %v917
        %919 = vmatmul.f32.gmra.mxu0 %v869
        %v920 = vpop.f32.mrf.mxu0
        %v921 = vadd.f32 %v834, %v920
        %922 = vdwg.mxu0
        %923 = vmatpush.msra.mxu0 0.0
        %924 = vmatpush.msra.mxu0 %v688
        %925 = vmatpush.msra.mxu0 %v685
        %926 = vmatpush.msra.mxu0 %v682
        %927 = vmatpush.msra.mxu0 %v679
        %928 = vmatpush.msra.mxu0 %v676
        %929 = vmatpush.msra.mxu0 %v673
        %930 = vmatpush.msra.mxu0 %v670
        %931 = vmatpush.msra.mxu0 %v667
        %932 = vmatpush.msra.mxu0 %v664
        %933 = vmatpush.msra.mxu0 %v661
        %934 = vmatpush.msra.mxu0 %v658
        %935 = vmatpush.msra.mxu0 %v655
        %936 = vmatpush.msra.mxu0 %v652
        %937 = vmatpush.msra.mxu0 %v649
        %938 = vmatpush.msra.mxu0 %v646
        %939 = vmatmul.f32.gmra.mxu0 %v863
        %v940 = vpop.f32.mrf.mxu0
        %v941 = vadd.f32 %v854, %v940
        %942 = vmatmul.f32.gmra.mxu0 %v866
        %v943 = vpop.f32.mrf.mxu0
        %v944 = vadd.f32 %v857, %v943
        %945 = vmatmul.f32.gmra.mxu0 %v869
        %v946 = vpop.f32.mrf.mxu0
        %v947 = vadd.f32 %v860, %v946
        %948 = vdwg.mxu0
        %s949 = scalar_lea.vmem [#allocation2], 48
        %v950 = vld [vmem:[%s949] sm:$0xff]
        %v951 = vld [vmem:[%s949 + $0x8] sm:$0xff]
        %v952 = vld [vmem:[%s949 + $0x10] sm:$0x3]
        %v954 = vsel %vm608, %v950, 0
        %v957 = vsel %vm608, %v951, 0
        %v960 = vsel %vm608, %v952, 0
        %962 = vmatpush.msra.mxu0 0.0
        %963 = vmatpush.msra.mxu0 0.0
        %964 = vmatpush.msra.mxu0 0.0
        %965 = vmatpush.msra.mxu0 0.0
        %966 = vmatpush.msra.mxu0 0.0
        %967 = vmatpush.msra.mxu0 0.0
        %968 = vmatpush.msra.mxu0 0.0
        %969 = vmatpush.msra.mxu0 0.0
        %970 = vmatpush.msra.mxu0 0.0
        %971 = vmatpush.msra.mxu0 0.0
        %972 = vmatpush.msra.mxu0 0.0
        %973 = vmatpush.msra.mxu0 %v604
        %974 = vmatpush.msra.mxu0 %v603
        %975 = vmatpush.msra.mxu0 %v602
        %976 = vmatpush.msra.mxu0 %v601
        %977 = vmatpush.msra.mxu0 %v600
        %978 = vmatmul.f32.gmra.mxu0 %v954
        %v979 = vpop.f32.mrf.mxu0
        %v980 = vadd.f32 0.0, %v979
        %981 = vmatmul.f32.gmra.mxu0 %v957
        %v982 = vpop.f32.mrf.mxu0
        %v983 = vadd.f32 0.0, %v982
        %984 = vmatmul.f32.gmra.mxu0 %v960
        %v985 = vpop.f32.mrf.mxu0
        %v986 = vadd.f32 0.0, %v985
        %987 = vdwg.mxu0
        %s988 = scalar_lea.vmem %s3, 720
        %v989 = vld [vmem:[%s988] sm:$0xff]
        %v990 = vld [vmem:[%s988 + $0x8] sm:$0xff]
        %v991 = vld [vmem:[%s988 + $0x10] sm:$0xff]
        %v992 = vld [vmem:[%s988 + $0x18] sm:$0xff]
        %v993 = vld [vmem:[%s988 + $0x20] sm:$0xff]
        %v994 = vld [vmem:[%s988 + $0x28] sm:$0xff]
        %v995 = vld [vmem:[%s988 + $0x30] sm:$0xff]
        %v996 = vld [vmem:[%s988 + $0x38] sm:$0xff]
        %v997 = vld [vmem:[%s988 + $0x40] sm:$0xff]
        %v998 = vld [vmem:[%s988 + $0x48] sm:$0xff]
        %v999 = vld [vmem:[%s988 + $0x50] sm:$0xff]
        %v1000 = vld [vmem:[%s988 + $0x58] sm:$0xff]
        %v1001 = vld [vmem:[%s988 + $0x60] sm:$0xff]
        %v1002 = vld [vmem:[%s988 + $0x68] sm:$0xff]
        %v1003 = vld [vmem:[%s988 + $0x70] sm:$0xff]
        %v1004 = vld [vmem:[%s988 + $0x78] sm:$0xff]
        %v1005 = vld [vmem:[%s988 + $0x80] sm:$0xff]
        %v1006 = vld [vmem:[%s988 + $0x88] sm:$0xff]
        %v1007 = vld [vmem:[%s988 + $0x90] sm:$0xff]
        %v1008 = vld [vmem:[%s988 + $0x98] sm:$0xff]
        %v1009 = vld [vmem:[%s988 + $0xa0] sm:$0xff]
        %v1010 = vld [vmem:[%s988 + $0xa8] sm:$0xff]
        %v1011 = vld [vmem:[%s988 + $0xb0] sm:$0xff]
        %v1012 = vld [vmem:[%s988 + $0xb8] sm:$0xff]
        %v1013 = vld [vmem:[%s988 + $0xc0] sm:$0xff]
        %v1014 = vld [vmem:[%s988 + $0xc8] sm:$0xff]
        %v1015 = vld [vmem:[%s988 + $0xd0] sm:$0xff]
        %v1016 = vld [vmem:[%s988 + $0xd8] sm:$0xff]
        %v1017 = vld [vmem:[%s988 + $0xe0] sm:$0xff]
        %v1018 = vld [vmem:[%s988 + $0xe8] sm:$0xff]
        %v1019 = vld [vmem:[%s988 + $0xf0] sm:$0xff]
        %v1020 = vld [vmem:[%s988 + $0xf8] sm:$0xff]
        %v1021 = vld [vmem:[%s988 + $0x100] sm:$0xff]
        %v1022 = vld [vmem:[%s988 + $0x108] sm:$0xff]
        %v1023 = vld [vmem:[%s988 + $0x110] sm:$0xff]
        %v1024 = vld [vmem:[%s988 + $0x118] sm:$0xff]
        %v1025 = vld [vmem:[%s988 + $0x120] sm:$0xff]
        %v1026 = vld [vmem:[%s988 + $0x128] sm:$0xff]
        %v1027 = vld [vmem:[%s988 + $0x130] sm:$0xff]
        %v1028 = vld [vmem:[%s988 + $0x138] sm:$0xff]
        %v1029 = vld [vmem:[%s988 + $0x140] sm:$0xff]
        %v1030 = vld [vmem:[%s988 + $0x148] sm:$0xff]
        %v1031 = vld [vmem:[%s988 + $0x150] sm:$0xff]
        %v1032 = vld [vmem:[%s988 + $0x158] sm:$0xff]
        %v1033 = vld [vmem:[%s988 + $0x160] sm:$0xff]
        %v1035 = vsel %vm774, %v980, 0
        %v1038 = vsel %vm774, %v983, 0
        %v1041 = vsel %vm774, %v986, 0
        %1043 = vmatpush.msra.mxu0 0.0
        %1044 = vmatpush.msra.mxu0 %v1031
        %1045 = vmatpush.msra.mxu0 %v1028
        %1046 = vmatpush.msra.mxu0 %v1025
        %1047 = vmatpush.msra.mxu0 %v1022
        %1048 = vmatpush.msra.mxu0 %v1019
        %1049 = vmatpush.msra.mxu0 %v1016
        %1050 = vmatpush.msra.mxu0 %v1013
        %1051 = vmatpush.msra.mxu0 %v1010
        %1052 = vmatpush.msra.mxu0 %v1007
        %1053 = vmatpush.msra.mxu0 %v1004
        %1054 = vmatpush.msra.mxu0 %v1001
        %1055 = vmatpush.msra.mxu0 %v998
        %1056 = vmatpush.msra.mxu0 %v995
        %1057 = vmatpush.msra.mxu0 %v992
        %1058 = vmatpush.msra.mxu0 %v989
        %1059 = vmatmul.f32.gmra.mxu0 %v1035
        %v1060 = vpop.f32.mrf.mxu0
        %v1061 = vadd.f32 0.0, %v1060
        %1062 = vmatmul.f32.gmra.mxu0 %v1038
        %v1063 = vpop.f32.mrf.mxu0
        %v1064 = vadd.f32 0.0, %v1063
        %1065 = vmatmul.f32.gmra.mxu0 %v1041
        %v1066 = vpop.f32.mrf.mxu0
        %v1067 = vadd.f32 0.0, %v1066
        %1068 = vdwg.mxu0
        %1069 = vmatpush.msra.mxu0 0.0
        %1070 = vmatpush.msra.mxu0 %v1032
        %1071 = vmatpush.msra.mxu0 %v1029
        %1072 = vmatpush.msra.mxu0 %v1026
        %1073 = vmatpush.msra.mxu0 %v1023
        %1074 = vmatpush.msra.mxu0 %v1020
        %1075 = vmatpush.msra.mxu0 %v1017
        %1076 = vmatpush.msra.mxu0 %v1014
        %1077 = vmatpush.msra.mxu0 %v1011
        %1078 = vmatpush.msra.mxu0 %v1008
        %1079 = vmatpush.msra.mxu0 %v1005
        %1080 = vmatpush.msra.mxu0 %v1002
        %1081 = vmatpush.msra.mxu0 %v999
        %1082 = vmatpush.msra.mxu0 %v996
        %1083 = vmatpush.msra.mxu0 %v993
        %1084 = vmatpush.msra.mxu0 %v990
        %1085 = vmatmul.f32.gmra.mxu0 %v1035
        %v1086 = vpop.f32.mrf.mxu0
        %v1087 = vadd.f32 0.0, %v1086
        %1088 = vmatmul.f32.gmra.mxu0 %v1038
        %v1089 = vpop.f32.mrf.mxu0
        %v1090 = vadd.f32 0.0, %v1089
        %1091 = vmatmul.f32.gmra.mxu0 %v1041
        %v1092 = vpop.f32.mrf.mxu0
        %v1093 = vadd.f32 0.0, %v1092
        %1094 = vdwg.mxu0
        %1095 = vmatpush.msra.mxu0 0.0
        %1096 = vmatpush.msra.mxu0 %v1033
        %1097 = vmatpush.msra.mxu0 %v1030
        %1098 = vmatpush.msra.mxu0 %v1027
        %1099 = vmatpush.msra.mxu0 %v1024
        %1100 = vmatpush.msra.mxu0 %v1021
        %1101 = vmatpush.msra.mxu0 %v1018
        %1102 = vmatpush.msra.mxu0 %v1015
        %1103 = vmatpush.msra.mxu0 %v1012
        %1104 = vmatpush.msra.mxu0 %v1009
        %1105 = vmatpush.msra.mxu0 %v1006
        %1106 = vmatpush.msra.mxu0 %v1003
        %1107 = vmatpush.msra.mxu0 %v1000
        %1108 = vmatpush.msra.mxu0 %v997
        %1109 = vmatpush.msra.mxu0 %v994
        %1110 = vmatpush.msra.mxu0 %v991
        %1111 = vmatmul.f32.gmra.mxu0 %v1035
        %v1112 = vpop.f32.mrf.mxu0
        %v1113 = vadd.f32 0.0, %v1112
        %1114 = vmatmul.f32.gmra.mxu0 %v1038
        %v1115 = vpop.f32.mrf.mxu0
        %v1116 = vadd.f32 0.0, %v1115
        %1117 = vmatmul.f32.gmra.mxu0 %v1041
        %v1118 = vpop.f32.mrf.mxu0
        %v1119 = vadd.f32 0.0, %v1118
        %1120 = vdwg.mxu0
        %v1121 = vadd.f32 %v889, %v1061
        %v1122 = vadd.f32 %v915, %v1087
        %v1123 = vadd.f32 %v941, %v1113
        %v1124 = vadd.f32 %v892, %v1064
        %v1125 = vadd.f32 %v918, %v1090
        %v1126 = vadd.f32 %v944, %v1116
        %v1127 = vadd.f32 %v895, %v1067
        %v1128 = vadd.f32 %v921, %v1093
        %v1129 = vadd.f32 %v947, %v1119
        %s1130 = scalar_lea.vmem [#allocation2], 72
        %v1131 = vld [vmem:[%s1130] sm:$0xff]
        %v1132 = vld [vmem:[%s1130 + $0x8] sm:$0xff]
        %v1133 = vld [vmem:[%s1130 + $0x10] sm:$0x3]
        %v1135 = vsel %vm608, %v1131, 0
        %v1138 = vsel %vm608, %v1132, 0
        %v1141 = vsel %vm608, %v1133, 0
        %1143 = vmatpush.msra.mxu0 0.0
        %1144 = vmatpush.msra.mxu0 0.0
        %1145 = vmatpush.msra.mxu0 0.0
        %1146 = vmatpush.msra.mxu0 0.0
        %1147 = vmatpush.msra.mxu0 0.0
        %1148 = vmatpush.msra.mxu0 0.0
        %1149 = vmatpush.msra.mxu0 0.0
        %1150 = vmatpush.msra.mxu0 0.0
        %1151 = vmatpush.msra.mxu0 0.0
        %1152 = vmatpush.msra.mxu0 0.0
        %1153 = vmatpush.msra.mxu0 0.0
        %1154 = vmatpush.msra.mxu0 %v604
        %1155 = vmatpush.msra.mxu0 %v603
        %1156 = vmatpush.msra.mxu0 %v602
        %1157 = vmatpush.msra.mxu0 %v601
        %1158 = vmatpush.msra.mxu0 %v600
        %1159 = vmatmul.f32.gmra.mxu0 %v1135
        %v1160 = vpop.f32.mrf.mxu0
        %v1161 = vadd.f32 0.0, %v1160
        %1162 = vmatmul.f32.gmra.mxu0 %v1138
        %v1163 = vpop.f32.mrf.mxu0
        %v1164 = vadd.f32 0.0, %v1163
        %1165 = vmatmul.f32.gmra.mxu0 %v1141
        %v1166 = vpop.f32.mrf.mxu0
        %v1167 = vadd.f32 0.0, %v1166
        %1168 = vdwg.mxu0
        %s1169 = scalar_lea.vmem %s3, 1080
        %v1170 = vld [vmem:[%s1169] sm:$0xff]
        %v1171 = vld [vmem:[%s1169 + $0x8] sm:$0xff]
        %v1172 = vld [vmem:[%s1169 + $0x10] sm:$0xff]
        %v1173 = vld [vmem:[%s1169 + $0x18] sm:$0xff]
        %v1174 = vld [vmem:[%s1169 + $0x20] sm:$0xff]
        %v1175 = vld [vmem:[%s1169 + $0x28] sm:$0xff]
        %v1176 = vld [vmem:[%s1169 + $0x30] sm:$0xff]
        %v1177 = vld [vmem:[%s1169 + $0x38] sm:$0xff]
        %v1178 = vld [vmem:[%s1169 + $0x40] sm:$0xff]
        %v1179 = vld [vmem:[%s1169 + $0x48] sm:$0xff]
        %v1180 = vld [vmem:[%s1169 + $0x50] sm:$0xff]
        %v1181 = vld [vmem:[%s1169 + $0x58] sm:$0xff]
        %v1182 = vld [vmem:[%s1169 + $0x60] sm:$0xff]
        %v1183 = vld [vmem:[%s1169 + $0x68] sm:$0xff]
        %v1184 = vld [vmem:[%s1169 + $0x70] sm:$0xff]
        %v1185 = vld [vmem:[%s1169 + $0x78] sm:$0xff]
        %v1186 = vld [vmem:[%s1169 + $0x80] sm:$0xff]
        %v1187 = vld [vmem:[%s1169 + $0x88] sm:$0xff]
        %v1188 = vld [vmem:[%s1169 + $0x90] sm:$0xff]
        %v1189 = vld [vmem:[%s1169 + $0x98] sm:$0xff]
        %v1190 = vld [vmem:[%s1169 + $0xa0] sm:$0xff]
        %v1191 = vld [vmem:[%s1169 + $0xa8] sm:$0xff]
        %v1192 = vld [vmem:[%s1169 + $0xb0] sm:$0xff]
        %v1193 = vld [vmem:[%s1169 + $0xb8] sm:$0xff]
        %v1194 = vld [vmem:[%s1169 + $0xc0] sm:$0xff]
        %v1195 = vld [vmem:[%s1169 + $0xc8] sm:$0xff]
        %v1196 = vld [vmem:[%s1169 + $0xd0] sm:$0xff]
        %v1197 = vld [vmem:[%s1169 + $0xd8] sm:$0xff]
        %v1198 = vld [vmem:[%s1169 + $0xe0] sm:$0xff]
        %v1199 = vld [vmem:[%s1169 + $0xe8] sm:$0xff]
        %v1200 = vld [vmem:[%s1169 + $0xf0] sm:$0xff]
        %v1201 = vld [vmem:[%s1169 + $0xf8] sm:$0xff]
        %v1202 = vld [vmem:[%s1169 + $0x100] sm:$0xff]
        %v1203 = vld [vmem:[%s1169 + $0x108] sm:$0xff]
        %v1204 = vld [vmem:[%s1169 + $0x110] sm:$0xff]
        %v1205 = vld [vmem:[%s1169 + $0x118] sm:$0xff]
        %v1206 = vld [vmem:[%s1169 + $0x120] sm:$0xff]
        %v1207 = vld [vmem:[%s1169 + $0x128] sm:$0xff]
        %v1208 = vld [vmem:[%s1169 + $0x130] sm:$0xff]
        %v1209 = vld [vmem:[%s1169 + $0x138] sm:$0xff]
        %v1210 = vld [vmem:[%s1169 + $0x140] sm:$0xff]
        %v1211 = vld [vmem:[%s1169 + $0x148] sm:$0xff]
        %v1212 = vld [vmem:[%s1169 + $0x150] sm:$0xff]
        %v1213 = vld [vmem:[%s1169 + $0x158] sm:$0xff]
        %v1214 = vld [vmem:[%s1169 + $0x160] sm:$0xff]
        %v1216 = vsel %vm774, %v1161, 0
        %v1219 = vsel %vm774, %v1164, 0
        %v1222 = vsel %vm774, %v1167, 0
        %1224 = vmatpush.msra.mxu0 0.0
        %1225 = vmatpush.msra.mxu0 %v1212
        %1226 = vmatpush.msra.mxu0 %v1209
        %1227 = vmatpush.msra.mxu0 %v1206
        %1228 = vmatpush.msra.mxu0 %v1203
        %1229 = vmatpush.msra.mxu0 %v1200
        %1230 = vmatpush.msra.mxu0 %v1197
        %1231 = vmatpush.msra.mxu0 %v1194
        %1232 = vmatpush.msra.mxu0 %v1191
        %1233 = vmatpush.msra.mxu0 %v1188
        %1234 = vmatpush.msra.mxu0 %v1185
        %1235 = vmatpush.msra.mxu0 %v1182
        %1236 = vmatpush.msra.mxu0 %v1179
        %1237 = vmatpush.msra.mxu0 %v1176
        %1238 = vmatpush.msra.mxu0 %v1173
        %1239 = vmatpush.msra.mxu0 %v1170
        %1240 = vmatmul.f32.gmra.mxu0 %v1216
        %v1241 = vpop.f32.mrf.mxu0
        %v1242 = vadd.f32 0.0, %v1241
        %1243 = vmatmul.f32.gmra.mxu0 %v1219
        %v1244 = vpop.f32.mrf.mxu0
        %v1245 = vadd.f32 0.0, %v1244
        %1246 = vmatmul.f32.gmra.mxu0 %v1222
        %v1247 = vpop.f32.mrf.mxu0
        %v1248 = vadd.f32 0.0, %v1247
        %1249 = vdwg.mxu0
        %1250 = vmatpush.msra.mxu0 0.0
        %1251 = vmatpush.msra.mxu0 %v1213
        %1252 = vmatpush.msra.mxu0 %v1210
        %1253 = vmatpush.msra.mxu0 %v1207
        %1254 = vmatpush.msra.mxu0 %v1204
        %1255 = vmatpush.msra.mxu0 %v1201
        %1256 = vmatpush.msra.mxu0 %v1198
        %1257 = vmatpush.msra.mxu0 %v1195
        %1258 = vmatpush.msra.mxu0 %v1192
        %1259 = vmatpush.msra.mxu0 %v1189
        %1260 = vmatpush.msra.mxu0 %v1186
        %1261 = vmatpush.msra.mxu0 %v1183
        %1262 = vmatpush.msra.mxu0 %v1180
        %1263 = vmatpush.msra.mxu0 %v1177
        %1264 = vmatpush.msra.mxu0 %v1174
        %1265 = vmatpush.msra.mxu0 %v1171
        %1266 = vmatmul.f32.gmra.mxu0 %v1216
        %v1267 = vpop.f32.mrf.mxu0
        %v1268 = vadd.f32 0.0, %v1267
        %1269 = vmatmul.f32.gmra.mxu0 %v1219
        %v1270 = vpop.f32.mrf.mxu0
        %v1271 = vadd.f32 0.0, %v1270
        %1272 = vmatmul.f32.gmra.mxu0 %v1222
        %v1273 = vpop.f32.mrf.mxu0
        %v1274 = vadd.f32 0.0, %v1273
        %1275 = vdwg.mxu0
        %1276 = vmatpush.msra.mxu0 0.0
        %1277 = vmatpush.msra.mxu0 %v1214
        %1278 = vmatpush.msra.mxu0 %v1211
        %1279 = vmatpush.msra.mxu0 %v1208
        %1280 = vmatpush.msra.mxu0 %v1205
        %1281 = vmatpush.msra.mxu0 %v1202
        %1282 = vmatpush.msra.mxu0 %v1199
        %1283 = vmatpush.msra.mxu0 %v1196
        %1284 = vmatpush.msra.mxu0 %v1193
        %1285 = vmatpush.msra.mxu0 %v1190
        %1286 = vmatpush.msra.mxu0 %v1187
        %1287 = vmatpush.msra.mxu0 %v1184
        %1288 = vmatpush.msra.mxu0 %v1181
        %1289 = vmatpush.msra.mxu0 %v1178
        %1290 = vmatpush.msra.mxu0 %v1175
        %1291 = vmatpush.msra.mxu0 %v1172
        %1292 = vmatmul.f32.gmra.mxu0 %v1216
        %v1293 = vpop.f32.mrf.mxu0
        %v1294 = vadd.f32 0.0, %v1293
        %1295 = vmatmul.f32.gmra.mxu0 %v1219
        %v1296 = vpop.f32.mrf.mxu0
        %v1297 = vadd.f32 0.0, %v1296
        %1298 = vmatmul.f32.gmra.mxu0 %v1222
        %v1299 = vpop.f32.mrf.mxu0
        %v1300 = vadd.f32 0.0, %v1299
        %1301 = vdwg.mxu0
        %v1302 = vadd.f32 %v1121, %v1242
        %v1303 = vadd.f32 %v1122, %v1268
        %v1304 = vadd.f32 %v1123, %v1294
        %v1305 = vadd.f32 %v1124, %v1245
        %v1306 = vadd.f32 %v1125, %v1271
        %v1307 = vadd.f32 %v1126, %v1297
        %v1308 = vadd.f32 %v1127, %v1248
        %v1309 = vadd.f32 %v1128, %v1274
        %v1310 = vadd.f32 %v1129, %v1300
        %s1311 = scalar_lea.vmem [#allocation2], 96
        %v1312 = vld [vmem:[%s1311] sm:$0xff]
        %v1313 = vld [vmem:[%s1311 + $0x8] sm:$0xff]
        %v1314 = vld [vmem:[%s1311 + $0x10] sm:$0x3]
        %v1316 = vsel %vm608, %v1312, 0
        %v1319 = vsel %vm608, %v1313, 0
        %v1322 = vsel %vm608, %v1314, 0
        %1324 = vmatpush.msra.mxu0 0.0
        %1325 = vmatpush.msra.mxu0 0.0
        %1326 = vmatpush.msra.mxu0 0.0
        %1327 = vmatpush.msra.mxu0 0.0
        %1328 = vmatpush.msra.mxu0 0.0
        %1329 = vmatpush.msra.mxu0 0.0
        %1330 = vmatpush.msra.mxu0 0.0
        %1331 = vmatpush.msra.mxu0 0.0
        %1332 = vmatpush.msra.mxu0 0.0
        %1333 = vmatpush.msra.mxu0 0.0
        %1334 = vmatpush.msra.mxu0 0.0
        %1335 = vmatpush.msra.mxu0 %v604
        %1336 = vmatpush.msra.mxu0 %v603
        %1337 = vmatpush.msra.mxu0 %v602
        %1338 = vmatpush.msra.mxu0 %v601
        %1339 = vmatpush.msra.mxu0 %v600
        %1340 = vmatmul.f32.gmra.mxu0 %v1316
        %v1341 = vpop.f32.mrf.mxu0
        %v1342 = vadd.f32 0.0, %v1341
        %1343 = vmatmul.f32.gmra.mxu0 %v1319
        %v1344 = vpop.f32.mrf.mxu0
        %v1345 = vadd.f32 0.0, %v1344
        %1346 = vmatmul.f32.gmra.mxu0 %v1322
        %v1347 = vpop.f32.mrf.mxu0
        %v1348 = vadd.f32 0.0, %v1347
        %1349 = vdwg.mxu0
        %s1350 = scalar_lea.vmem %s3, 1440
        %v1351 = vld [vmem:[%s1350] sm:$0xff]
        %v1352 = vld [vmem:[%s1350 + $0x8] sm:$0xff]
        %v1353 = vld [vmem:[%s1350 + $0x10] sm:$0xff]
        %v1354 = vld [vmem:[%s1350 + $0x18] sm:$0xff]
        %v1355 = vld [vmem:[%s1350 + $0x20] sm:$0xff]
        %v1356 = vld [vmem:[%s1350 + $0x28] sm:$0xff]
        %v1357 = vld [vmem:[%s1350 + $0x30] sm:$0xff]
        %v1358 = vld [vmem:[%s1350 + $0x38] sm:$0xff]
        %v1359 = vld [vmem:[%s1350 + $0x40] sm:$0xff]
        %v1360 = vld [vmem:[%s1350 + $0x48] sm:$0xff]
        %v1361 = vld [vmem:[%s1350 + $0x50] sm:$0xff]
        %v1362 = vld [vmem:[%s1350 + $0x58] sm:$0xff]
        %v1363 = vld [vmem:[%s1350 + $0x60] sm:$0xff]
        %v1364 = vld [vmem:[%s1350 + $0x68] sm:$0xff]
        %v1365 = vld [vmem:[%s1350 + $0x70] sm:$0xff]
        %v1366 = vld [vmem:[%s1350 + $0x78] sm:$0xff]
        %v1367 = vld [vmem:[%s1350 + $0x80] sm:$0xff]
        %v1368 = vld [vmem:[%s1350 + $0x88] sm:$0xff]
        %v1369 = vld [vmem:[%s1350 + $0x90] sm:$0xff]
        %v1370 = vld [vmem:[%s1350 + $0x98] sm:$0xff]
        %v1371 = vld [vmem:[%s1350 + $0xa0] sm:$0xff]
        %v1372 = vld [vmem:[%s1350 + $0xa8] sm:$0xff]
        %v1373 = vld [vmem:[%s1350 + $0xb0] sm:$0xff]
        %v1374 = vld [vmem:[%s1350 + $0xb8] sm:$0xff]
        %v1375 = vld [vmem:[%s1350 + $0xc0] sm:$0xff]
        %v1376 = vld [vmem:[%s1350 + $0xc8] sm:$0xff]
        %v1377 = vld [vmem:[%s1350 + $0xd0] sm:$0xff]
        %v1378 = vld [vmem:[%s1350 + $0xd8] sm:$0xff]
        %v1379 = vld [vmem:[%s1350 + $0xe0] sm:$0xff]
        %v1380 = vld [vmem:[%s1350 + $0xe8] sm:$0xff]
        %v1381 = vld [vmem:[%s1350 + $0xf0] sm:$0xff]
        %v1382 = vld [vmem:[%s1350 + $0xf8] sm:$0xff]
        %v1383 = vld [vmem:[%s1350 + $0x100] sm:$0xff]
        %v1384 = vld [vmem:[%s1350 + $0x108] sm:$0xff]
        %v1385 = vld [vmem:[%s1350 + $0x110] sm:$0xff]
        %v1386 = vld [vmem:[%s1350 + $0x118] sm:$0xff]
        %v1387 = vld [vmem:[%s1350 + $0x120] sm:$0xff]
        %v1388 = vld [vmem:[%s1350 + $0x128] sm:$0xff]
        %v1389 = vld [vmem:[%s1350 + $0x130] sm:$0xff]
        %v1390 = vld [vmem:[%s1350 + $0x138] sm:$0xff]
        %v1391 = vld [vmem:[%s1350 + $0x140] sm:$0xff]
        %v1392 = vld [vmem:[%s1350 + $0x148] sm:$0xff]
        %v1393 = vld [vmem:[%s1350 + $0x150] sm:$0xff]
        %v1394 = vld [vmem:[%s1350 + $0x158] sm:$0xff]
        %v1395 = vld [vmem:[%s1350 + $0x160] sm:$0xff]
        %v1397 = vsel %vm774, %v1342, 0
        %v1400 = vsel %vm774, %v1345, 0
        %v1403 = vsel %vm774, %v1348, 0
        %1405 = vmatpush.msra.mxu0 0.0
        %1406 = vmatpush.msra.mxu0 %v1393
        %1407 = vmatpush.msra.mxu0 %v1390
        %1408 = vmatpush.msra.mxu0 %v1387
        %1409 = vmatpush.msra.mxu0 %v1384
        %1410 = vmatpush.msra.mxu0 %v1381
        %1411 = vmatpush.msra.mxu0 %v1378
        %1412 = vmatpush.msra.mxu0 %v1375
        %1413 = vmatpush.msra.mxu0 %v1372
        %1414 = vmatpush.msra.mxu0 %v1369
        %1415 = vmatpush.msra.mxu0 %v1366
        %1416 = vmatpush.msra.mxu0 %v1363
        %1417 = vmatpush.msra.mxu0 %v1360
        %1418 = vmatpush.msra.mxu0 %v1357
        %1419 = vmatpush.msra.mxu0 %v1354
        %1420 = vmatpush.msra.mxu0 %v1351
        %1421 = vmatmul.f32.gmra.mxu0 %v1397
        %v1422 = vpop.f32.mrf.mxu0
        %v1423 = vadd.f32 0.0, %v1422
        %1424 = vmatmul.f32.gmra.mxu0 %v1400
        %v1425 = vpop.f32.mrf.mxu0
        %v1426 = vadd.f32 0.0, %v1425
        %1427 = vmatmul.f32.gmra.mxu0 %v1403
        %v1428 = vpop.f32.mrf.mxu0
        %v1429 = vadd.f32 0.0, %v1428
        %1430 = vdwg.mxu0
        %1431 = vmatpush.msra.mxu0 0.0
        %1432 = vmatpush.msra.mxu0 %v1394
        %1433 = vmatpush.msra.mxu0 %v1391
        %1434 = vmatpush.msra.mxu0 %v1388
        %1435 = vmatpush.msra.mxu0 %v1385
        %1436 = vmatpush.msra.mxu0 %v1382
        %1437 = vmatpush.msra.mxu0 %v1379
        %1438 = vmatpush.msra.mxu0 %v1376
        %1439 = vmatpush.msra.mxu0 %v1373
        %1440 = vmatpush.msra.mxu0 %v1370
        %1441 = vmatpush.msra.mxu0 %v1367
        %1442 = vmatpush.msra.mxu0 %v1364
        %1443 = vmatpush.msra.mxu0 %v1361
        %1444 = vmatpush.msra.mxu0 %v1358
        %1445 = vmatpush.msra.mxu0 %v1355
        %1446 = vmatpush.msra.mxu0 %v1352
        %1447 = vmatmul.f32.gmra.mxu0 %v1397
        %v1448 = vpop.f32.mrf.mxu0
        %v1449 = vadd.f32 0.0, %v1448
        %1450 = vmatmul.f32.gmra.mxu0 %v1400
        %v1451 = vpop.f32.mrf.mxu0
        %v1452 = vadd.f32 0.0, %v1451
        %1453 = vmatmul.f32.gmra.mxu0 %v1403
        %v1454 = vpop.f32.mrf.mxu0
        %v1455 = vadd.f32 0.0, %v1454
        %1456 = vdwg.mxu0
        %1457 = vmatpush.msra.mxu0 0.0
        %1458 = vmatpush.msra.mxu0 %v1395
        %1459 = vmatpush.msra.mxu0 %v1392
        %1460 = vmatpush.msra.mxu0 %v1389
        %1461 = vmatpush.msra.mxu0 %v1386
        %1462 = vmatpush.msra.mxu0 %v1383
        %1463 = vmatpush.msra.mxu0 %v1380
        %1464 = vmatpush.msra.mxu0 %v1377
        %1465 = vmatpush.msra.mxu0 %v1374
        %1466 = vmatpush.msra.mxu0 %v1371
        %1467 = vmatpush.msra.mxu0 %v1368
        %1468 = vmatpush.msra.mxu0 %v1365
        %1469 = vmatpush.msra.mxu0 %v1362
        %1470 = vmatpush.msra.mxu0 %v1359
        %1471 = vmatpush.msra.mxu0 %v1356
        %1472 = vmatpush.msra.mxu0 %v1353
        %1473 = vmatmul.f32.gmra.mxu0 %v1397
        %v1474 = vpop.f32.mrf.mxu0
        %v1475 = vadd.f32 0.0, %v1474
        %1476 = vmatmul.f32.gmra.mxu0 %v1400
        %v1477 = vpop.f32.mrf.mxu0
        %v1478 = vadd.f32 0.0, %v1477
        %1479 = vmatmul.f32.gmra.mxu0 %v1403
        %v1480 = vpop.f32.mrf.mxu0
        %v1481 = vadd.f32 0.0, %v1480
        %1482 = vdwg.mxu0
        %v1483 = vadd.f32 %v1302, %v1423
        %v1484 = vadd.f32 %v1303, %v1449
        %v1485 = vadd.f32 %v1304, %v1475
        %v1486 = vadd.f32 %v1305, %v1426
        %v1487 = vadd.f32 %v1306, %v1452
        %v1488 = vadd.f32 %v1307, %v1478
        %v1489 = vadd.f32 %v1308, %v1429
        %v1490 = vadd.f32 %v1309, %v1455
        %v1491 = vadd.f32 %v1310, %v1481
        %v1492 = vld [vmem:[%s4] sm:$0x7]
        %v1494 = vperm.slane %v1492, 0
        %v1495 = vperm.slane %v1492, 1
        %v1496 = vperm.slane %v1492, 2
        %v1500 = vadd.f32 %v1483, %v1494
        %v1501 = vadd.f32 %v1484, %v1495
        %v1502 = vadd.f32 %v1485, %v1496
        %v1503 = vadd.f32 %v1486, %v1494
        %v1504 = vadd.f32 %v1487, %v1495
        %v1505 = vadd.f32 %v1488, %v1496
        %v1506 = vadd.f32 %v1489, %v1494
        %v1507 = vadd.f32 %v1490, %v1495
        %v1508 = vadd.f32 %v1491, %v1496
        %v1509 = vmax.f32 %v1500, 0.0
        %v1510 = vmax.f32 %v1501, 0.0
        %v1511 = vmax.f32 %v1502, 0.0
        %v1512 = vmax.f32 %v1503, 0.0
        %v1513 = vmax.f32 %v1504, 0.0
        %v1514 = vmax.f32 %v1505, 0.0
        %v1515 = vmax.f32 %v1506, 0.0
        %v1516 = vmax.f32 %v1507, 0.0
        %v1517 = vmax.f32 %v1508, 0.0
        %v1518 = vld [vmem:[#allocation5] sm:$0x7f]
        %vm1519 = vcmask 146432
        %v1521 = vsel %vm1519, %v1518, 0
        %vm1523 = vcmask 1041408
        %v1525 = vsel %vm1523, %v1515, 0
        %v1528 = vsel %vm1523, %v1516, 0
        %v1531 = vsel %vm1523, %v1517, 0
        %1533 = vmatpush.msra.mxu0 0.0
        %1534 = vmatpush.msra.mxu0 0.0
        %1535 = vmatpush.msra.mxu0 0.0
        %1536 = vmatpush.msra.mxu0 0.0
        %1537 = vmatpush.msra.mxu0 0.0
        %1538 = vmatpush.msra.mxu0 0.0
        %1539 = vmatpush.msra.mxu0 0.0
        %1540 = vmatpush.msra.mxu0 0.0
        %1541 = vmatpush.msra.mxu0 0.0
        %1542 = vmatpush.msra.mxu0 0.0
        %1543 = vmatpush.msra.mxu0 0.0
        %1544 = vmatpush.msra.mxu0 0.0
        %1545 = vmatpush.msra.mxu0 0.0
        %1546 = vmatpush.msra.mxu0 %v1525
        %1547 = vmatpush.msra.mxu0 %v1512
        %1548 = vmatpush.msra.mxu0 %v1509
        %1549 = vmatmul.f32.gmra.mxu0 %v1521
        %v1550 = vpop.f32.mrf.mxu0
        %v1551 = vadd.f32 0.0, %v1550
        %1552 = vdwg.mxu0
        %1553 = vmatpush.msra.mxu0 0.0
        %1554 = vmatpush.msra.mxu0 0.0
        %1555 = vmatpush.msra.mxu0 0.0
        %1556 = vmatpush.msra.mxu0 0.0
        %1557 = vmatpush.msra.mxu0 0.0
        %1558 = vmatpush.msra.mxu0 0.0
        %1559 = vmatpush.msra.mxu0 0.0
        %1560 = vmatpush.msra.mxu0 0.0
        %1561 = vmatpush.msra.mxu0 0.0
        %1562 = vmatpush.msra.mxu0 0.0
        %1563 = vmatpush.msra.mxu0 0.0
        %1564 = vmatpush.msra.mxu0 0.0
        %1565 = vmatpush.msra.mxu0 0.0
        %1566 = vmatpush.msra.mxu0 %v1528
        %1567 = vmatpush.msra.mxu0 %v1513
        %1568 = vmatpush.msra.mxu0 %v1510
        %1569 = vmatmul.f32.gmra.mxu0 %v1521
        %v1570 = vpop.f32.mrf.mxu0
        %v1571 = vadd.f32 0.0, %v1570
        %1572 = vdwg.mxu0
        %1573 = vmatpush.msra.mxu0 0.0
        %1574 = vmatpush.msra.mxu0 0.0
        %1575 = vmatpush.msra.mxu0 0.0
        %1576 = vmatpush.msra.mxu0 0.0
        %1577 = vmatpush.msra.mxu0 0.0
        %1578 = vmatpush.msra.mxu0 0.0
        %1579 = vmatpush.msra.mxu0 0.0
        %1580 = vmatpush.msra.mxu0 0.0
        %1581 = vmatpush.msra.mxu0 0.0
        %1582 = vmatpush.msra.mxu0 0.0
        %1583 = vmatpush.msra.mxu0 0.0
        %1584 = vmatpush.msra.mxu0 0.0
        %1585 = vmatpush.msra.mxu0 0.0
        %1586 = vmatpush.msra.mxu0 %v1531
        %1587 = vmatpush.msra.mxu0 %v1514
        %1588 = vmatpush.msra.mxu0 %v1511
        %1589 = vmatmul.f32.gmra.mxu0 %v1521
        %v1590 = vpop.f32.mrf.mxu0
        %v1591 = vadd.f32 0.0, %v1590
        %1592 = vdwg.mxu0
        %v1593 = vld [vmem:[%s6] sm:$0xff]
        %v1594 = vld [vmem:[%s6 + $0x8] sm:$0xff]
        %v1595 = vld [vmem:[%s6 + $0x10] sm:$0xff]
        %v1596 = vld [vmem:[%s6 + $0x18] sm:$0xff]
        %v1597 = vld [vmem:[%s6 + $0x20] sm:$0xff]
        %v1598 = vld [vmem:[%s6 + $0x28] sm:$0xff]
        %v1599 = vld [vmem:[%s6 + $0x30] sm:$0xff]
        %v1600 = vld [vmem:[%s6 + $0x38] sm:$0xff]
        %v1601 = vld [vmem:[%s6 + $0x40] sm:$0xff]
        %v1602 = vld [vmem:[%s6 + $0x48] sm:$0xff]
        %v1603 = vld [vmem:[%s6 + $0x50] sm:$0xff]
        %v1604 = vld [vmem:[%s6 + $0x58] sm:$0xff]
        %v1605 = vld [vmem:[%s6 + $0x60] sm:$0xff]
        %v1606 = vld [vmem:[%s6 + $0x68] sm:$0xff]
        %v1607 = vld [vmem:[%s6 + $0x70] sm:$0xff]
        %v1608 = vld [vmem:[%s6 + $0x78] sm:$0xff]
        %v1609 = vld [vmem:[%s6 + $0x80] sm:$0xff]
        %v1610 = vld [vmem:[%s6 + $0x88] sm:$0xff]
        %v1611 = vld [vmem:[%s6 + $0x90] sm:$0xff]
        %v1612 = vld [vmem:[%s6 + $0x98] sm:$0xff]
        %v1613 = vld [vmem:[%s6 + $0xa0] sm:$0xff]
        %v1614 = vld [vmem:[%s6 + $0xa8] sm:$0xff]
        %v1615 = vld [vmem:[%s6 + $0xb0] sm:$0xff]
        %v1616 = vld [vmem:[%s6 + $0xb8] sm:$0xff]
        %v1617 = vld [vmem:[%s6 + $0xc0] sm:$0xff]
        %v1618 = vld [vmem:[%s6 + $0xc8] sm:$0xff]
        %v1619 = vld [vmem:[%s6 + $0xd0] sm:$0xff]
        %v1620 = vld [vmem:[%s6 + $0xd8] sm:$0xff]
        %v1621 = vld [vmem:[%s6 + $0xe0] sm:$0xff]
        %v1622 = vld [vmem:[%s6 + $0xe8] sm:$0xff]
        %v1623 = vld [vmem:[%s6 + $0xf0] sm:$0xff]
        %v1624 = vld [vmem:[%s6 + $0xf8] sm:$0xff]
        %v1625 = vld [vmem:[%s6 + $0x100] sm:$0xff]
        %v1626 = vld [vmem:[%s6 + $0x108] sm:$0xff]
        %v1627 = vld [vmem:[%s6 + $0x110] sm:$0xff]
        %v1628 = vld [vmem:[%s6 + $0x118] sm:$0xff]
        %v1629 = vld [vmem:[%s6 + $0x120] sm:$0xff]
        %v1630 = vld [vmem:[%s6 + $0x128] sm:$0xff]
        %v1631 = vld [vmem:[%s6 + $0x130] sm:$0xff]
        %v1632 = vld [vmem:[%s6 + $0x138] sm:$0xff]
        %v1633 = vld [vmem:[%s6 + $0x140] sm:$0xff]
        %v1634 = vld [vmem:[%s6 + $0x148] sm:$0xff]
        %v1635 = vld [vmem:[%s6 + $0x150] sm:$0xff]
        %v1636 = vld [vmem:[%s6 + $0x158] sm:$0xff]
        %v1637 = vld [vmem:[%s6 + $0x160] sm:$0xff]
        %v1638 = vld [vmem:[%s6 + $0x168] sm:$0xff]
        %v1639 = vld [vmem:[%s6 + $0x170] sm:$0xff]
        %v1640 = vld [vmem:[%s6 + $0x178] sm:$0xff]
        %v1641 = vld [vmem:[%s6 + $0x180] sm:$0xff]
        %v1642 = vld [vmem:[%s6 + $0x188] sm:$0xff]
        %v1643 = vld [vmem:[%s6 + $0x190] sm:$0xff]
        %v1644 = vld [vmem:[%s6 + $0x198] sm:$0xff]
        %v1645 = vld [vmem:[%s6 + $0x1a0] sm:$0xff]
        %v1646 = vld [vmem:[%s6 + $0x1a8] sm:$0xff]
        %v1647 = vld [vmem:[%s6 + $0x1b0] sm:$0xff]
        %v1648 = vld [vmem:[%s6 + $0x1b8] sm:$0xff]
        %v1649 = vld [vmem:[%s6 + $0x1c0] sm:$0xff]
        %v1650 = vld [vmem:[%s6 + $0x1c8] sm:$0xff]
        %v1651 = vld [vmem:[%s6 + $0x1d0] sm:$0xff]
        %v1652 = vld [vmem:[%s6 + $0x1d8] sm:$0xff]
        %v1653 = vld [vmem:[%s6 + $0x1e0] sm:$0xff]
        %v1654 = vld [vmem:[%s6 + $0x1e8] sm:$0xff]
        %v1655 = vld [vmem:[%s6 + $0x1f0] sm:$0xff]
        %v1656 = vld [vmem:[%s6 + $0x1f8] sm:$0xff]
        %v1657 = vld [vmem:[%s6 + $0x200] sm:$0xff]
        %v1658 = vld [vmem:[%s6 + $0x208] sm:$0xff]
        %v1659 = vld [vmem:[%s6 + $0x210] sm:$0xff]
        %v1660 = vld [vmem:[%s6 + $0x218] sm:$0xff]
        %v1661 = vld [vmem:[%s6 + $0x220] sm:$0xff]
        %v1662 = vld [vmem:[%s6 + $0x228] sm:$0xff]
        %v1663 = vld [vmem:[%s6 + $0x230] sm:$0xff]
        %v1664 = vld [vmem:[%s6 + $0x238] sm:$0xff]
        %s1665 = scalar_lea.vmem [#allocation5], 8
        %v1666 = vld [vmem:[%s1665] sm:$0x7f]
        %v1668 = vsel %vm1519, %v1666, 0
        %1670 = vmatpush.msra.mxu0 0.0
        %1671 = vmatpush.msra.mxu0 0.0
        %1672 = vmatpush.msra.mxu0 0.0
        %1673 = vmatpush.msra.mxu0 0.0
        %1674 = vmatpush.msra.mxu0 0.0
        %1675 = vmatpush.msra.mxu0 0.0
        %1676 = vmatpush.msra.mxu0 0.0
        %1677 = vmatpush.msra.mxu0 0.0
        %1678 = vmatpush.msra.mxu0 0.0
        %1679 = vmatpush.msra.mxu0 0.0
        %1680 = vmatpush.msra.mxu0 0.0
        %1681 = vmatpush.msra.mxu0 0.0
        %1682 = vmatpush.msra.mxu0 0.0
        %1683 = vmatpush.msra.mxu0 %v1525
        %1684 = vmatpush.msra.mxu0 %v1512
        %1685 = vmatpush.msra.mxu0 %v1509
        %1686 = vmatmul.f32.gmra.mxu0 %v1668
        %v1687 = vpop.f32.mrf.mxu0
        %v1688 = vadd.f32 0.0, %v1687
        %1689 = vdwg.mxu0
        %1690 = vmatpush.msra.mxu0 0.0
        %1691 = vmatpush.msra.mxu0 0.0
        %1692 = vmatpush.msra.mxu0 0.0
        %1693 = vmatpush.msra.mxu0 0.0
        %1694 = vmatpush.msra.mxu0 0.0
        %1695 = vmatpush.msra.mxu0 0.0
        %1696 = vmatpush.msra.mxu0 0.0
        %1697 = vmatpush.msra.mxu0 0.0
        %1698 = vmatpush.msra.mxu0 0.0
        %1699 = vmatpush.msra.mxu0 0.0
        %1700 = vmatpush.msra.mxu0 0.0
        %1701 = vmatpush.msra.mxu0 0.0
        %1702 = vmatpush.msra.mxu0 0.0
        %1703 = vmatpush.msra.mxu0 %v1528
        %1704 = vmatpush.msra.mxu0 %v1513
        %1705 = vmatpush.msra.mxu0 %v1510
        %1706 = vmatmul.f32.gmra.mxu0 %v1668
        %v1707 = vpop.f32.mrf.mxu0
        %v1708 = vadd.f32 0.0, %v1707
        %1709 = vdwg.mxu0
        %1710 = vmatpush.msra.mxu0 0.0
        %1711 = vmatpush.msra.mxu0 0.0
        %1712 = vmatpush.msra.mxu0 0.0
        %1713 = vmatpush.msra.mxu0 0.0
        %1714 = vmatpush.msra.mxu0 0.0
        %1715 = vmatpush.msra.mxu0 0.0
        %1716 = vmatpush.msra.mxu0 0.0
        %1717 = vmatpush.msra.mxu0 0.0
        %1718 = vmatpush.msra.mxu0 0.0
        %1719 = vmatpush.msra.mxu0 0.0
        %1720 = vmatpush.msra.mxu0 0.0
        %1721 = vmatpush.msra.mxu0 0.0
        %1722 = vmatpush.msra.mxu0 0.0
        %1723 = vmatpush.msra.mxu0 %v1531
        %1724 = vmatpush.msra.mxu0 %v1514
        %1725 = vmatpush.msra.mxu0 %v1511
        %1726 = vmatmul.f32.gmra.mxu0 %v1668
        %v1727 = vpop.f32.mrf.mxu0
        %v1728 = vadd.f32 0.0, %v1727
        %1729 = vdwg.mxu0
        %s1730 = scalar_lea.vmem %s6, 576
        %v1731 = vld [vmem:[%s1730] sm:$0xff]
        %v1732 = vld [vmem:[%s1730 + $0x8] sm:$0xff]
        %v1733 = vld [vmem:[%s1730 + $0x10] sm:$0xff]
        %v1734 = vld [vmem:[%s1730 + $0x18] sm:$0xff]
        %v1735 = vld [vmem:[%s1730 + $0x20] sm:$0xff]
        %v1736 = vld [vmem:[%s1730 + $0x28] sm:$0xff]
        %v1737 = vld [vmem:[%s1730 + $0x30] sm:$0xff]
        %v1738 = vld [vmem:[%s1730 + $0x38] sm:$0xff]
        %v1739 = vld [vmem:[%s1730 + $0x40] sm:$0xff]
        %v1740 = vld [vmem:[%s1730 + $0x48] sm:$0xff]
        %v1741 = vld [vmem:[%s1730 + $0x50] sm:$0xff]
        %v1742 = vld [vmem:[%s1730 + $0x58] sm:$0xff]
        %v1743 = vld [vmem:[%s1730 + $0x60] sm:$0xff]
        %v1744 = vld [vmem:[%s1730 + $0x68] sm:$0xff]
        %v1745 = vld [vmem:[%s1730 + $0x70] sm:$0xff]
        %v1746 = vld [vmem:[%s1730 + $0x78] sm:$0xff]
        %v1747 = vld [vmem:[%s1730 + $0x80] sm:$0xff]
        %v1748 = vld [vmem:[%s1730 + $0x88] sm:$0xff]
        %v1749 = vld [vmem:[%s1730 + $0x90] sm:$0xff]
        %v1750 = vld [vmem:[%s1730 + $0x98] sm:$0xff]
        %v1751 = vld [vmem:[%s1730 + $0xa0] sm:$0xff]
        %v1752 = vld [vmem:[%s1730 + $0xa8] sm:$0xff]
        %v1753 = vld [vmem:[%s1730 + $0xb0] sm:$0xff]
        %v1754 = vld [vmem:[%s1730 + $0xb8] sm:$0xff]
        %v1755 = vld [vmem:[%s1730 + $0xc0] sm:$0xff]
        %v1756 = vld [vmem:[%s1730 + $0xc8] sm:$0xff]
        %v1757 = vld [vmem:[%s1730 + $0xd0] sm:$0xff]
        %v1758 = vld [vmem:[%s1730 + $0xd8] sm:$0xff]
        %v1759 = vld [vmem:[%s1730 + $0xe0] sm:$0xff]
        %v1760 = vld [vmem:[%s1730 + $0xe8] sm:$0xff]
        %v1761 = vld [vmem:[%s1730 + $0xf0] sm:$0xff]
        %v1762 = vld [vmem:[%s1730 + $0xf8] sm:$0xff]
        %v1763 = vld [vmem:[%s1730 + $0x100] sm:$0xff]
        %v1764 = vld [vmem:[%s1730 + $0x108] sm:$0xff]
        %v1765 = vld [vmem:[%s1730 + $0x110] sm:$0xff]
        %v1766 = vld [vmem:[%s1730 + $0x118] sm:$0xff]
        %v1767 = vld [vmem:[%s1730 + $0x120] sm:$0xff]
        %v1768 = vld [vmem:[%s1730 + $0x128] sm:$0xff]
        %v1769 = vld [vmem:[%s1730 + $0x130] sm:$0xff]
        %v1770 = vld [vmem:[%s1730 + $0x138] sm:$0xff]
        %v1771 = vld [vmem:[%s1730 + $0x140] sm:$0xff]
        %v1772 = vld [vmem:[%s1730 + $0x148] sm:$0xff]
        %v1773 = vld [vmem:[%s1730 + $0x150] sm:$0xff]
        %v1774 = vld [vmem:[%s1730 + $0x158] sm:$0xff]
        %v1775 = vld [vmem:[%s1730 + $0x160] sm:$0xff]
        %v1776 = vld [vmem:[%s1730 + $0x168] sm:$0xff]
        %v1777 = vld [vmem:[%s1730 + $0x170] sm:$0xff]
        %v1778 = vld [vmem:[%s1730 + $0x178] sm:$0xff]
        %v1779 = vld [vmem:[%s1730 + $0x180] sm:$0xff]
        %v1780 = vld [vmem:[%s1730 + $0x188] sm:$0xff]
        %v1781 = vld [vmem:[%s1730 + $0x190] sm:$0xff]
        %v1782 = vld [vmem:[%s1730 + $0x198] sm:$0xff]
        %v1783 = vld [vmem:[%s1730 + $0x1a0] sm:$0xff]
        %v1784 = vld [vmem:[%s1730 + $0x1a8] sm:$0xff]
        %v1785 = vld [vmem:[%s1730 + $0x1b0] sm:$0xff]
        %v1786 = vld [vmem:[%s1730 + $0x1b8] sm:$0xff]
        %v1787 = vld [vmem:[%s1730 + $0x1c0] sm:$0xff]
        %v1788 = vld [vmem:[%s1730 + $0x1c8] sm:$0xff]
        %v1789 = vld [vmem:[%s1730 + $0x1d0] sm:$0xff]
        %v1790 = vld [vmem:[%s1730 + $0x1d8] sm:$0xff]
        %v1791 = vld [vmem:[%s1730 + $0x1e0] sm:$0xff]
        %v1792 = vld [vmem:[%s1730 + $0x1e8] sm:$0xff]
        %v1793 = vld [vmem:[%s1730 + $0x1f0] sm:$0xff]
        %v1794 = vld [vmem:[%s1730 + $0x1f8] sm:$0xff]
        %v1795 = vld [vmem:[%s1730 + $0x200] sm:$0xff]
        %v1796 = vld [vmem:[%s1730 + $0x208] sm:$0xff]
        %v1797 = vld [vmem:[%s1730 + $0x210] sm:$0xff]
        %v1798 = vld [vmem:[%s1730 + $0x218] sm:$0xff]
        %v1799 = vld [vmem:[%s1730 + $0x220] sm:$0xff]
        %v1800 = vld [vmem:[%s1730 + $0x228] sm:$0xff]
        %v1801 = vld [vmem:[%s1730 + $0x230] sm:$0xff]
        %v1802 = vld [vmem:[%s1730 + $0x238] sm:$0xff]
        %vm1803 = vcmask 261120
        %v1805 = vsel %vm1803, %v1728, 0
        %1807 = vmatpush.msra.mxu0 %v1761
        %1808 = vmatpush.msra.mxu0 %v1759
        %1809 = vmatpush.msra.mxu0 %v1757
        %1810 = vmatpush.msra.mxu0 %v1755
        %1811 = vmatpush.msra.mxu0 %v1753
        %1812 = vmatpush.msra.mxu0 %v1751
        %1813 = vmatpush.msra.mxu0 %v1749
        %1814 = vmatpush.msra.mxu0 %v1747
        %1815 = vmatpush.msra.mxu0 %v1745
        %1816 = vmatpush.msra.mxu0 %v1743
        %1817 = vmatpush.msra.mxu0 %v1741
        %1818 = vmatpush.msra.mxu0 %v1739
        %1819 = vmatpush.msra.mxu0 %v1737
        %1820 = vmatpush.msra.mxu0 %v1735
        %1821 = vmatpush.msra.mxu0 %v1733
        %1822 = vmatpush.msra.mxu0 %v1731
        %1823 = vmatmul.f32.gmra.mxu0 %v1688
        %v1824 = vpop.f32.mrf.mxu0
        %v1825 = vadd.f32 0.0, %v1824
        %1826 = vdwg.mxu0
        %1827 = vmatpush.msra.mxu0 %v1793
        %1828 = vmatpush.msra.mxu0 %v1791
        %1829 = vmatpush.msra.mxu0 %v1789
        %1830 = vmatpush.msra.mxu0 %v1787
        %1831 = vmatpush.msra.mxu0 %v1785
        %1832 = vmatpush.msra.mxu0 %v1783
        %1833 = vmatpush.msra.mxu0 %v1781
        %1834 = vmatpush.msra.mxu0 %v1779
        %1835 = vmatpush.msra.mxu0 %v1777
        %1836 = vmatpush.msra.mxu0 %v1775
        %1837 = vmatpush.msra.mxu0 %v1773
        %1838 = vmatpush.msra.mxu0 %v1771
        %1839 = vmatpush.msra.mxu0 %v1769
        %1840 = vmatpush.msra.mxu0 %v1767
        %1841 = vmatpush.msra.mxu0 %v1765
        %1842 = vmatpush.msra.mxu0 %v1763
        %1843 = vmatmul.f32.gmra.mxu0 %v1708
        %v1844 = vpop.f32.mrf.mxu0
        %v1845 = vadd.f32 %v1825, %v1844
        %1846 = vdwg.mxu0
        %1847 = vmatpush.msra.mxu0 0.0
        %1848 = vmatpush.msra.mxu0 0.0
        %1849 = vmatpush.msra.mxu0 0.0
        %1850 = vmatpush.msra.mxu0 0.0
        %1851 = vmatpush.msra.mxu0 0.0
        %1852 = vmatpush.msra.mxu0 0.0
        %1853 = vmatpush.msra.mxu0 0.0
        %1854 = vmatpush.msra.mxu0 0.0
        %1855 = vmatpush.msra.mxu0 0.0
        %1856 = vmatpush.msra.mxu0 0.0
        %1857 = vmatpush.msra.mxu0 0.0
        %1858 = vmatpush.msra.mxu0 0.0
        %1859 = vmatpush.msra.mxu0 %v1801
        %1860 = vmatpush.msra.mxu0 %v1799
        %1861 = vmatpush.msra.mxu0 %v1797
        %1862 = vmatpush.msra.mxu0 %v1795
        %1863 = vmatmul.f32.gmra.mxu0 %v1805
        %v1864 = vpop.f32.mrf.mxu0
        %v1865 = vadd.f32 %v1845, %v1864
        %1866 = vdwg.mxu0
        %1867 = vmatpush.msra.mxu0 %v1762
        %1868 = vmatpush.msra.mxu0 %v1760
        %1869 = vmatpush.msra.mxu0 %v1758
        %1870 = vmatpush.msra.mxu0 %v1756
        %1871 = vmatpush.msra.mxu0 %v1754
        %1872 = vmatpush.msra.mxu0 %v1752
        %1873 = vmatpush.msra.mxu0 %v1750
        %1874 = vmatpush.msra.mxu0 %v1748
        %1875 = vmatpush.msra.mxu0 %v1746
        %1876 = vmatpush.msra.mxu0 %v1744
        %1877 = vmatpush.msra.mxu0 %v1742
        %1878 = vmatpush.msra.mxu0 %v1740
        %1879 = vmatpush.msra.mxu0 %v1738
        %1880 = vmatpush.msra.mxu0 %v1736
        %1881 = vmatpush.msra.mxu0 %v1734
        %1882 = vmatpush.msra.mxu0 %v1732
        %1883 = vmatmul.f32.gmra.mxu0 %v1688
        %v1884 = vpop.f32.mrf.mxu0
        %v1885 = vadd.f32 0.0, %v1884
        %1886 = vdwg.mxu0
        %1887 = vmatpush.msra.mxu0 %v1794
        %1888 = vmatpush.msra.mxu0 %v1792
        %1889 = vmatpush.msra.mxu0 %v1790
        %1890 = vmatpush.msra.mxu0 %v1788
        %1891 = vmatpush.msra.mxu0 %v1786
        %1892 = vmatpush.msra.mxu0 %v1784
        %1893 = vmatpush.msra.mxu0 %v1782
        %1894 = vmatpush.msra.mxu0 %v1780
        %1895 = vmatpush.msra.mxu0 %v1778
        %1896 = vmatpush.msra.mxu0 %v1776
        %1897 = vmatpush.msra.mxu0 %v1774
        %1898 = vmatpush.msra.mxu0 %v1772
        %1899 = vmatpush.msra.mxu0 %v1770
        %1900 = vmatpush.msra.mxu0 %v1768
        %1901 = vmatpush.msra.mxu0 %v1766
        %1902 = vmatpush.msra.mxu0 %v1764
        %1903 = vmatmul.f32.gmra.mxu0 %v1708
        %v1904 = vpop.f32.mrf.mxu0
        %v1905 = vadd.f32 %v1885, %v1904
        %1906 = vdwg.mxu0
        %1907 = vmatpush.msra.mxu0 0.0
        %1908 = vmatpush.msra.mxu0 0.0
        %1909 = vmatpush.msra.mxu0 0.0
        %1910 = vmatpush.msra.mxu0 0.0
        %1911 = vmatpush.msra.mxu0 0.0
        %1912 = vmatpush.msra.mxu0 0.0
        %1913 = vmatpush.msra.mxu0 0.0
        %1914 = vmatpush.msra.mxu0 0.0
        %1915 = vmatpush.msra.mxu0 0.0
        %1916 = vmatpush.msra.mxu0 0.0
        %1917 = vmatpush.msra.mxu0 0.0
        %1918 = vmatpush.msra.mxu0 0.0
        %1919 = vmatpush.msra.mxu0 %v1802
        %1920 = vmatpush.msra.mxu0 %v1800
        %1921 = vmatpush.msra.mxu0 %v1798
        %1922 = vmatpush.msra.mxu0 %v1796
        %1923 = vmatmul.f32.gmra.mxu0 %v1805
        %v1924 = vpop.f32.mrf.mxu0
        %v1925 = vadd.f32 %v1905, %v1924
        %1926 = vdwg.mxu0
        %v1928 = vsel %vm1803, %v1591, 0
        %1930 = vmatpush.msra.mxu0 %v1623
        %1931 = vmatpush.msra.mxu0 %v1621
        %1932 = vmatpush.msra.mxu0 %v1619
        %1933 = vmatpush.msra.mxu0 %v1617
        %1934 = vmatpush.msra.mxu0 %v1615
        %1935 = vmatpush.msra.mxu0 %v1613
        %1936 = vmatpush.msra.mxu0 %v1611
        %1937 = vmatpush.msra.mxu0 %v1609
        %1938 = vmatpush.msra.mxu0 %v1607
        %1939 = vmatpush.msra.mxu0 %v1605
        %1940 = vmatpush.msra.mxu0 %v1603
        %1941 = vmatpush.msra.mxu0 %v1601
        %1942 = vmatpush.msra.mxu0 %v1599
        %1943 = vmatpush.msra.mxu0 %v1597
        %1944 = vmatpush.msra.mxu0 %v1595
        %1945 = vmatpush.msra.mxu0 %v1593
        %1946 = vmatmul.f32.gmra.mxu0 %v1551
        %v1947 = vpop.f32.mrf.mxu0
        %v1948 = vadd.f32 %v1865, %v1947
        %1949 = vdwg.mxu0
        %1950 = vmatpush.msra.mxu0 %v1655
        %1951 = vmatpush.msra.mxu0 %v1653
        %1952 = vmatpush.msra.mxu0 %v1651
        %1953 = vmatpush.msra.mxu0 %v1649
        %1954 = vmatpush.msra.mxu0 %v1647
        %1955 = vmatpush.msra.mxu0 %v1645
        %1956 = vmatpush.msra.mxu0 %v1643
        %1957 = vmatpush.msra.mxu0 %v1641
        %1958 = vmatpush.msra.mxu0 %v1639
        %1959 = vmatpush.msra.mxu0 %v1637
        %1960 = vmatpush.msra.mxu0 %v1635
        %1961 = vmatpush.msra.mxu0 %v1633
        %1962 = vmatpush.msra.mxu0 %v1631
        %1963 = vmatpush.msra.mxu0 %v1629
        %1964 = vmatpush.msra.mxu0 %v1627
        %1965 = vmatpush.msra.mxu0 %v1625
        %1966 = vmatmul.f32.gmra.mxu0 %v1571
        %v1967 = vpop.f32.mrf.mxu0
        %v1968 = vadd.f32 %v1948, %v1967
        %1969 = vdwg.mxu0
        %1970 = vmatpush.msra.mxu0 0.0
        %1971 = vmatpush.msra.mxu0 0.0
        %1972 = vmatpush.msra.mxu0 0.0
        %1973 = vmatpush.msra.mxu0 0.0
        %1974 = vmatpush.msra.mxu0 0.0
        %1975 = vmatpush.msra.mxu0 0.0
        %1976 = vmatpush.msra.mxu0 0.0
        %1977 = vmatpush.msra.mxu0 0.0
        %1978 = vmatpush.msra.mxu0 0.0
        %1979 = vmatpush.msra.mxu0 0.0
        %1980 = vmatpush.msra.mxu0 0.0
        %1981 = vmatpush.msra.mxu0 0.0
        %1982 = vmatpush.msra.mxu0 %v1663
        %1983 = vmatpush.msra.mxu0 %v1661
        %1984 = vmatpush.msra.mxu0 %v1659
        %1985 = vmatpush.msra.mxu0 %v1657
        %1986 = vmatmul.f32.gmra.mxu0 %v1928
        %v1987 = vpop.f32.mrf.mxu0
        %v1988 = vadd.f32 %v1968, %v1987
        %1989 = vdwg.mxu0
        %1990 = vmatpush.msra.mxu0 %v1624
        %1991 = vmatpush.msra.mxu0 %v1622
        %1992 = vmatpush.msra.mxu0 %v1620
        %1993 = vmatpush.msra.mxu0 %v1618
        %1994 = vmatpush.msra.mxu0 %v1616
        %1995 = vmatpush.msra.mxu0 %v1614
        %1996 = vmatpush.msra.mxu0 %v1612
        %1997 = vmatpush.msra.mxu0 %v1610
        %1998 = vmatpush.msra.mxu0 %v1608
        %1999 = vmatpush.msra.mxu0 %v1606
        %2000 = vmatpush.msra.mxu0 %v1604
        %2001 = vmatpush.msra.mxu0 %v1602
        %2002 = vmatpush.msra.mxu0 %v1600
        %2003 = vmatpush.msra.mxu0 %v1598
        %2004 = vmatpush.msra.mxu0 %v1596
        %2005 = vmatpush.msra.mxu0 %v1594
        %2006 = vmatmul.f32.gmra.mxu0 %v1551
        %v2007 = vpop.f32.mrf.mxu0
        %v2008 = vadd.f32 %v1925, %v2007
        %2009 = vdwg.mxu0
        %2010 = vmatpush.msra.mxu0 %v1656
        %2011 = vmatpush.msra.mxu0 %v1654
        %2012 = vmatpush.msra.mxu0 %v1652
        %2013 = vmatpush.msra.mxu0 %v1650
        %2014 = vmatpush.msra.mxu0 %v1648
        %2015 = vmatpush.msra.mxu0 %v1646
        %2016 = vmatpush.msra.mxu0 %v1644
        %2017 = vmatpush.msra.mxu0 %v1642
        %2018 = vmatpush.msra.mxu0 %v1640
        %2019 = vmatpush.msra.mxu0 %v1638
        %2020 = vmatpush.msra.mxu0 %v1636
        %2021 = vmatpush.msra.mxu0 %v1634
        %2022 = vmatpush.msra.mxu0 %v1632
        %2023 = vmatpush.msra.mxu0 %v1630
        %2024 = vmatpush.msra.mxu0 %v1628
        %2025 = vmatpush.msra.mxu0 %v1626
        %2026 = vmatmul.f32.gmra.mxu0 %v1571
        %v2027 = vpop.f32.mrf.mxu0
        %v2028 = vadd.f32 %v2008, %v2027
        %2029 = vdwg.mxu0
        %2030 = vmatpush.msra.mxu0 0.0
        %2031 = vmatpush.msra.mxu0 0.0
        %2032 = vmatpush.msra.mxu0 0.0
        %2033 = vmatpush.msra.mxu0 0.0
        %2034 = vmatpush.msra.mxu0 0.0
        %2035 = vmatpush.msra.mxu0 0.0
        %2036 = vmatpush.msra.mxu0 0.0
        %2037 = vmatpush.msra.mxu0 0.0
        %2038 = vmatpush.msra.mxu0 0.0
        %2039 = vmatpush.msra.mxu0 0.0
        %2040 = vmatpush.msra.mxu0 0.0
        %2041 = vmatpush.msra.mxu0 0.0
        %2042 = vmatpush.msra.mxu0 %v1664
        %2043 = vmatpush.msra.mxu0 %v1662
        %2044 = vmatpush.msra.mxu0 %v1660
        %2045 = vmatpush.msra.mxu0 %v1658
        %2046 = vmatmul.f32.gmra.mxu0 %v1928
        %v2047 = vpop.f32.mrf.mxu0
        %v2048 = vadd.f32 %v2028, %v2047
        %2049 = vdwg.mxu0
        %s2050 = scalar_lea.vmem [#allocation5], 16
        %v2051 = vld [vmem:[%s2050] sm:$0x7f]
        %v2053 = vsel %vm1519, %v2051, 0
        %2055 = vmatpush.msra.mxu0 0.0
        %2056 = vmatpush.msra.mxu0 0.0
        %2057 = vmatpush.msra.mxu0 0.0
        %2058 = vmatpush.msra.mxu0 0.0
        %2059 = vmatpush.msra.mxu0 0.0
        %2060 = vmatpush.msra.mxu0 0.0
        %2061 = vmatpush.msra.mxu0 0.0
        %2062 = vmatpush.msra.mxu0 0.0
        %2063 = vmatpush.msra.mxu0 0.0
        %2064 = vmatpush.msra.mxu0 0.0
        %2065 = vmatpush.msra.mxu0 0.0
        %2066 = vmatpush.msra.mxu0 0.0
        %2067 = vmatpush.msra.mxu0 0.0
        %2068 = vmatpush.msra.mxu0 %v1525
        %2069 = vmatpush.msra.mxu0 %v1512
        %2070 = vmatpush.msra.mxu0 %v1509
        %2071 = vmatmul.f32.gmra.mxu0 %v2053
        %v2072 = vpop.f32.mrf.mxu0
        %v2073 = vadd.f32 0.0, %v2072
        %2074 = vdwg.mxu0
        %2075 = vmatpush.msra.mxu0 0.0
        %2076 = vmatpush.msra.mxu0 0.0
        %2077 = vmatpush.msra.mxu0 0.0
        %2078 = vmatpush.msra.mxu0 0.0
        %2079 = vmatpush.msra.mxu0 0.0
        %2080 = vmatpush.msra.mxu0 0.0
        %2081 = vmatpush.msra.mxu0 0.0
        %2082 = vmatpush.msra.mxu0 0.0
        %2083 = vmatpush.msra.mxu0 0.0
        %2084 = vmatpush.msra.mxu0 0.0
        %2085 = vmatpush.msra.mxu0 0.0
        %2086 = vmatpush.msra.mxu0 0.0
        %2087 = vmatpush.msra.mxu0 0.0
        %2088 = vmatpush.msra.mxu0 %v1528
        %2089 = vmatpush.msra.mxu0 %v1513
        %2090 = vmatpush.msra.mxu0 %v1510
        %2091 = vmatmul.f32.gmra.mxu0 %v2053
        %v2092 = vpop.f32.mrf.mxu0
        %v2093 = vadd.f32 0.0, %v2092
        %2094 = vdwg.mxu0
        %2095 = vmatpush.msra.mxu0 0.0
        %2096 = vmatpush.msra.mxu0 0.0
        %2097 = vmatpush.msra.mxu0 0.0
        %2098 = vmatpush.msra.mxu0 0.0
        %2099 = vmatpush.msra.mxu0 0.0
        %2100 = vmatpush.msra.mxu0 0.0
        %2101 = vmatpush.msra.mxu0 0.0
        %2102 = vmatpush.msra.mxu0 0.0
        %2103 = vmatpush.msra.mxu0 0.0
        %2104 = vmatpush.msra.mxu0 0.0
        %2105 = vmatpush.msra.mxu0 0.0
        %2106 = vmatpush.msra.mxu0 0.0
        %2107 = vmatpush.msra.mxu0 0.0
        %2108 = vmatpush.msra.mxu0 %v1531
        %2109 = vmatpush.msra.mxu0 %v1514
        %2110 = vmatpush.msra.mxu0 %v1511
        %2111 = vmatmul.f32.gmra.mxu0 %v2053
        %v2112 = vpop.f32.mrf.mxu0
        %v2113 = vadd.f32 0.0, %v2112
        %2114 = vdwg.mxu0
        %s2115 = scalar_lea.vmem %s6, 1152
        %v2116 = vld [vmem:[%s2115] sm:$0xff]
        %v2117 = vld [vmem:[%s2115 + $0x8] sm:$0xff]
        %v2118 = vld [vmem:[%s2115 + $0x10] sm:$0xff]
        %v2119 = vld [vmem:[%s2115 + $0x18] sm:$0xff]
        %v2120 = vld [vmem:[%s2115 + $0x20] sm:$0xff]
        %v2121 = vld [vmem:[%s2115 + $0x28] sm:$0xff]
        %v2122 = vld [vmem:[%s2115 + $0x30] sm:$0xff]
        %v2123 = vld [vmem:[%s2115 + $0x38] sm:$0xff]
        %v2124 = vld [vmem:[%s2115 + $0x40] sm:$0xff]
        %v2125 = vld [vmem:[%s2115 + $0x48] sm:$0xff]
        %v2126 = vld [vmem:[%s2115 + $0x50] sm:$0xff]
        %v2127 = vld [vmem:[%s2115 + $0x58] sm:$0xff]
        %v2128 = vld [vmem:[%s2115 + $0x60] sm:$0xff]
        %v2129 = vld [vmem:[%s2115 + $0x68] sm:$0xff]
        %v2130 = vld [vmem:[%s2115 + $0x70] sm:$0xff]
        %v2131 = vld [vmem:[%s2115 + $0x78] sm:$0xff]
        %v2132 = vld [vmem:[%s2115 + $0x80] sm:$0xff]
        %v2133 = vld [vmem:[%s2115 + $0x88] sm:$0xff]
        %v2134 = vld [vmem:[%s2115 + $0x90] sm:$0xff]
        %v2135 = vld [vmem:[%s2115 + $0x98] sm:$0xff]
        %v2136 = vld [vmem:[%s2115 + $0xa0] sm:$0xff]
        %v2137 = vld [vmem:[%s2115 + $0xa8] sm:$0xff]
        %v2138 = vld [vmem:[%s2115 + $0xb0] sm:$0xff]
        %v2139 = vld [vmem:[%s2115 + $0xb8] sm:$0xff]
        %v2140 = vld [vmem:[%s2115 + $0xc0] sm:$0xff]
        %v2141 = vld [vmem:[%s2115 + $0xc8] sm:$0xff]
        %v2142 = vld [vmem:[%s2115 + $0xd0] sm:$0xff]
        %v2143 = vld [vmem:[%s2115 + $0xd8] sm:$0xff]
        %v2144 = vld [vmem:[%s2115 + $0xe0] sm:$0xff]
        %v2145 = vld [vmem:[%s2115 + $0xe8] sm:$0xff]
        %v2146 = vld [vmem:[%s2115 + $0xf0] sm:$0xff]
        %v2147 = vld [vmem:[%s2115 + $0xf8] sm:$0xff]
        %v2148 = vld [vmem:[%s2115 + $0x100] sm:$0xff]
        %v2149 = vld [vmem:[%s2115 + $0x108] sm:$0xff]
        %v2150 = vld [vmem:[%s2115 + $0x110] sm:$0xff]
        %v2151 = vld [vmem:[%s2115 + $0x118] sm:$0xff]
        %v2152 = vld [vmem:[%s2115 + $0x120] sm:$0xff]
        %v2153 = vld [vmem:[%s2115 + $0x128] sm:$0xff]
        %v2154 = vld [vmem:[%s2115 + $0x130] sm:$0xff]
        %v2155 = vld [vmem:[%s2115 + $0x138] sm:$0xff]
        %v2156 = vld [vmem:[%s2115 + $0x140] sm:$0xff]
        %v2157 = vld [vmem:[%s2115 + $0x148] sm:$0xff]
        %v2158 = vld [vmem:[%s2115 + $0x150] sm:$0xff]
        %v2159 = vld [vmem:[%s2115 + $0x158] sm:$0xff]
        %v2160 = vld [vmem:[%s2115 + $0x160] sm:$0xff]
        %v2161 = vld [vmem:[%s2115 + $0x168] sm:$0xff]
        %v2162 = vld [vmem:[%s2115 + $0x170] sm:$0xff]
        %v2163 = vld [vmem:[%s2115 + $0x178] sm:$0xff]
        %v2164 = vld [vmem:[%s2115 + $0x180] sm:$0xff]
        %v2165 = vld [vmem:[%s2115 + $0x188] sm:$0xff]
        %v2166 = vld [vmem:[%s2115 + $0x190] sm:$0xff]
        %v2167 = vld [vmem:[%s2115 + $0x198] sm:$0xff]
        %v2168 = vld [vmem:[%s2115 + $0x1a0] sm:$0xff]
        %v2169 = vld [vmem:[%s2115 + $0x1a8] sm:$0xff]
        %v2170 = vld [vmem:[%s2115 + $0x1b0] sm:$0xff]
        %v2171 = vld [vmem:[%s2115 + $0x1b8] sm:$0xff]
        %v2172 = vld [vmem:[%s2115 + $0x1c0] sm:$0xff]
        %v2173 = vld [vmem:[%s2115 + $0x1c8] sm:$0xff]
        %v2174 = vld [vmem:[%s2115 + $0x1d0] sm:$0xff]
        %v2175 = vld [vmem:[%s2115 + $0x1d8] sm:$0xff]
        %v2176 = vld [vmem:[%s2115 + $0x1e0] sm:$0xff]
        %v2177 = vld [vmem:[%s2115 + $0x1e8] sm:$0xff]
        %v2178 = vld [vmem:[%s2115 + $0x1f0] sm:$0xff]
        %v2179 = vld [vmem:[%s2115 + $0x1f8] sm:$0xff]
        %v2180 = vld [vmem:[%s2115 + $0x200] sm:$0xff]
        %v2181 = vld [vmem:[%s2115 + $0x208] sm:$0xff]
        %v2182 = vld [vmem:[%s2115 + $0x210] sm:$0xff]
        %v2183 = vld [vmem:[%s2115 + $0x218] sm:$0xff]
        %v2184 = vld [vmem:[%s2115 + $0x220] sm:$0xff]
        %v2185 = vld [vmem:[%s2115 + $0x228] sm:$0xff]
        %v2186 = vld [vmem:[%s2115 + $0x230] sm:$0xff]
        %v2187 = vld [vmem:[%s2115 + $0x238] sm:$0xff]
        %v2189 = vsel %vm1803, %v2113, 0
        %2191 = vmatpush.msra.mxu0 %v2146
        %2192 = vmatpush.msra.mxu0 %v2144
        %2193 = vmatpush.msra.mxu0 %v2142
        %2194 = vmatpush.msra.mxu0 %v2140
        %2195 = vmatpush.msra.mxu0 %v2138
        %2196 = vmatpush.msra.mxu0 %v2136
        %2197 = vmatpush.msra.mxu0 %v2134
        %2198 = vmatpush.msra.mxu0 %v2132
        %2199 = vmatpush.msra.mxu0 %v2130
        %2200 = vmatpush.msra.mxu0 %v2128
        %2201 = vmatpush.msra.mxu0 %v2126
        %2202 = vmatpush.msra.mxu0 %v2124
        %2203 = vmatpush.msra.mxu0 %v2122
        %2204 = vmatpush.msra.mxu0 %v2120
        %2205 = vmatpush.msra.mxu0 %v2118
        %2206 = vmatpush.msra.mxu0 %v2116
        %2207 = vmatmul.f32.gmra.mxu0 %v2073
        %v2208 = vpop.f32.mrf.mxu0
        %v2209 = vadd.f32 0.0, %v2208
        %2210 = vdwg.mxu0
        %2211 = vmatpush.msra.mxu0 %v2178
        %2212 = vmatpush.msra.mxu0 %v2176
        %2213 = vmatpush.msra.mxu0 %v2174
        %2214 = vmatpush.msra.mxu0 %v2172
        %2215 = vmatpush.msra.mxu0 %v2170
        %2216 = vmatpush.msra.mxu0 %v2168
        %2217 = vmatpush.msra.mxu0 %v2166
        %2218 = vmatpush.msra.mxu0 %v2164
        %2219 = vmatpush.msra.mxu0 %v2162
        %2220 = vmatpush.msra.mxu0 %v2160
        %2221 = vmatpush.msra.mxu0 %v2158
        %2222 = vmatpush.msra.mxu0 %v2156
        %2223 = vmatpush.msra.mxu0 %v2154
        %2224 = vmatpush.msra.mxu0 %v2152
        %2225 = vmatpush.msra.mxu0 %v2150
        %2226 = vmatpush.msra.mxu0 %v2148
        %2227 = vmatmul.f32.gmra.mxu0 %v2093
        %v2228 = vpop.f32.mrf.mxu0
        %v2229 = vadd.f32 %v2209, %v2228
        %2230 = vdwg.mxu0
        %2231 = vmatpush.msra.mxu0 0.0
        %2232 = vmatpush.msra.mxu0 0.0
        %2233 = vmatpush.msra.mxu0 0.0
        %2234 = vmatpush.msra.mxu0 0.0
        %2235 = vmatpush.msra.mxu0 0.0
        %2236 = vmatpush.msra.mxu0 0.0
        %2237 = vmatpush.msra.mxu0 0.0
        %2238 = vmatpush.msra.mxu0 0.0
        %2239 = vmatpush.msra.mxu0 0.0
        %2240 = vmatpush.msra.mxu0 0.0
        %2241 = vmatpush.msra.mxu0 0.0
        %2242 = vmatpush.msra.mxu0 0.0
        %2243 = vmatpush.msra.mxu0 %v2186
        %2244 = vmatpush.msra.mxu0 %v2184
        %2245 = vmatpush.msra.mxu0 %v2182
        %2246 = vmatpush.msra.mxu0 %v2180
        %2247 = vmatmul.f32.gmra.mxu0 %v2189
        %v2248 = vpop.f32.mrf.mxu0
        %v2249 = vadd.f32 %v2229, %v2248
        %2250 = vdwg.mxu0
        %2251 = vmatpush.msra.mxu0 %v2147
        %2252 = vmatpush.msra.mxu0 %v2145
        %2253 = vmatpush.msra.mxu0 %v2143
        %2254 = vmatpush.msra.mxu0 %v2141
        %2255 = vmatpush.msra.mxu0 %v2139
        %2256 = vmatpush.msra.mxu0 %v2137
        %2257 = vmatpush.msra.mxu0 %v2135
        %2258 = vmatpush.msra.mxu0 %v2133
        %2259 = vmatpush.msra.mxu0 %v2131
        %2260 = vmatpush.msra.mxu0 %v2129
        %2261 = vmatpush.msra.mxu0 %v2127
        %2262 = vmatpush.msra.mxu0 %v2125
        %2263 = vmatpush.msra.mxu0 %v2123
        %2264 = vmatpush.msra.mxu0 %v2121
        %2265 = vmatpush.msra.mxu0 %v2119
        %2266 = vmatpush.msra.mxu0 %v2117
        %2267 = vmatmul.f32.gmra.mxu0 %v2073
        %v2268 = vpop.f32.mrf.mxu0
        %v2269 = vadd.f32 0.0, %v2268
        %2270 = vdwg.mxu0
        %2271 = vmatpush.msra.mxu0 %v2179
        %2272 = vmatpush.msra.mxu0 %v2177
        %2273 = vmatpush.msra.mxu0 %v2175
        %2274 = vmatpush.msra.mxu0 %v2173
        %2275 = vmatpush.msra.mxu0 %v2171
        %2276 = vmatpush.msra.mxu0 %v2169
        %2277 = vmatpush.msra.mxu0 %v2167
        %2278 = vmatpush.msra.mxu0 %v2165
        %2279 = vmatpush.msra.mxu0 %v2163
        %2280 = vmatpush.msra.mxu0 %v2161
        %2281 = vmatpush.msra.mxu0 %v2159
        %2282 = vmatpush.msra.mxu0 %v2157
        %2283 = vmatpush.msra.mxu0 %v2155
        %2284 = vmatpush.msra.mxu0 %v2153
        %2285 = vmatpush.msra.mxu0 %v2151
        %2286 = vmatpush.msra.mxu0 %v2149
        %2287 = vmatmul.f32.gmra.mxu0 %v2093
        %v2288 = vpop.f32.mrf.mxu0
        %v2289 = vadd.f32 %v2269, %v2288
        %2290 = vdwg.mxu0
        %2291 = vmatpush.msra.mxu0 0.0
        %2292 = vmatpush.msra.mxu0 0.0
        %2293 = vmatpush.msra.mxu0 0.0
        %2294 = vmatpush.msra.mxu0 0.0
        %2295 = vmatpush.msra.mxu0 0.0
        %2296 = vmatpush.msra.mxu0 0.0
        %2297 = vmatpush.msra.mxu0 0.0
        %2298 = vmatpush.msra.mxu0 0.0
        %2299 = vmatpush.msra.mxu0 0.0
        %2300 = vmatpush.msra.mxu0 0.0
        %2301 = vmatpush.msra.mxu0 0.0
        %2302 = vmatpush.msra.mxu0 0.0
        %2303 = vmatpush.msra.mxu0 %v2187
        %2304 = vmatpush.msra.mxu0 %v2185
        %2305 = vmatpush.msra.mxu0 %v2183
        %2306 = vmatpush.msra.mxu0 %v2181
        %2307 = vmatmul.f32.gmra.mxu0 %v2189
        %v2308 = vpop.f32.mrf.mxu0
        %v2309 = vadd.f32 %v2289, %v2308
        %2310 = vdwg.mxu0
        %v2311 = vadd.f32 %v1988, %v2249
        %v2312 = vadd.f32 %v2048, %v2309
        %s2313 = scalar_lea.vmem [#allocation5], 24
        %v2314 = vld [vmem:[%s2313] sm:$0x7f]
        %v2316 = vsel %vm1519, %v2314, 0
        %2318 = vmatpush.msra.mxu0 0.0
        %2319 = vmatpush.msra.mxu0 0.0
        %2320 = vmatpush.msra.mxu0 0.0
        %2321 = vmatpush.msra.mxu0 0.0
        %2322 = vmatpush.msra.mxu0 0.0
        %2323 = vmatpush.msra.mxu0 0.0
        %2324 = vmatpush.msra.mxu0 0.0
        %2325 = vmatpush.msra.mxu0 0.0
        %2326 = vmatpush.msra.mxu0 0.0
        %2327 = vmatpush.msra.mxu0 0.0
        %2328 = vmatpush.msra.mxu0 0.0
        %2329 = vmatpush.msra.mxu0 0.0
        %2330 = vmatpush.msra.mxu0 0.0
        %2331 = vmatpush.msra.mxu0 %v1525
        %2332 = vmatpush.msra.mxu0 %v1512
        %2333 = vmatpush.msra.mxu0 %v1509
        %2334 = vmatmul.f32.gmra.mxu0 %v2316
        %v2335 = vpop.f32.mrf.mxu0
        %v2336 = vadd.f32 0.0, %v2335
        %2337 = vdwg.mxu0
        %2338 = vmatpush.msra.mxu0 0.0
        %2339 = vmatpush.msra.mxu0 0.0
        %2340 = vmatpush.msra.mxu0 0.0
        %2341 = vmatpush.msra.mxu0 0.0
        %2342 = vmatpush.msra.mxu0 0.0
        %2343 = vmatpush.msra.mxu0 0.0
        %2344 = vmatpush.msra.mxu0 0.0
        %2345 = vmatpush.msra.mxu0 0.0
        %2346 = vmatpush.msra.mxu0 0.0
        %2347 = vmatpush.msra.mxu0 0.0
        %2348 = vmatpush.msra.mxu0 0.0
        %2349 = vmatpush.msra.mxu0 0.0
        %2350 = vmatpush.msra.mxu0 0.0
        %2351 = vmatpush.msra.mxu0 %v1528
        %2352 = vmatpush.msra.mxu0 %v1513
        %2353 = vmatpush.msra.mxu0 %v1510
        %2354 = vmatmul.f32.gmra.mxu0 %v2316
        %v2355 = vpop.f32.mrf.mxu0
        %v2356 = vadd.f32 0.0, %v2355
        %2357 = vdwg.mxu0
        %2358 = vmatpush.msra.mxu0 0.0
        %2359 = vmatpush.msra.mxu0 0.0
        %2360 = vmatpush.msra.mxu0 0.0
        %2361 = vmatpush.msra.mxu0 0.0
        %2362 = vmatpush.msra.mxu0 0.0
        %2363 = vmatpush.msra.mxu0 0.0
        %2364 = vmatpush.msra.mxu0 0.0
        %2365 = vmatpush.msra.mxu0 0.0
        %2366 = vmatpush.msra.mxu0 0.0
        %2367 = vmatpush.msra.mxu0 0.0
        %2368 = vmatpush.msra.mxu0 0.0
        %2369 = vmatpush.msra.mxu0 0.0
        %2370 = vmatpush.msra.mxu0 0.0
        %2371 = vmatpush.msra.mxu0 %v1531
        %2372 = vmatpush.msra.mxu0 %v1514
        %2373 = vmatpush.msra.mxu0 %v1511
        %2374 = vmatmul.f32.gmra.mxu0 %v2316
        %v2375 = vpop.f32.mrf.mxu0
        %v2376 = vadd.f32 0.0, %v2375
        %2377 = vdwg.mxu0
        %s2378 = scalar_lea.vmem %s6, 1728
        %v2379 = vld [vmem:[%s2378] sm:$0xff]
        %v2380 = vld [vmem:[%s2378 + $0x8] sm:$0xff]
        %v2381 = vld [vmem:[%s2378 + $0x10] sm:$0xff]
        %v2382 = vld [vmem:[%s2378 + $0x18] sm:$0xff]
        %v2383 = vld [vmem:[%s2378 + $0x20] sm:$0xff]
        %v2384 = vld [vmem:[%s2378 + $0x28] sm:$0xff]
        %v2385 = vld [vmem:[%s2378 + $0x30] sm:$0xff]
        %v2386 = vld [vmem:[%s2378 + $0x38] sm:$0xff]
        %v2387 = vld [vmem:[%s2378 + $0x40] sm:$0xff]
        %v2388 = vld [vmem:[%s2378 + $0x48] sm:$0xff]
        %v2389 = vld [vmem:[%s2378 + $0x50] sm:$0xff]
        %v2390 = vld [vmem:[%s2378 + $0x58] sm:$0xff]
        %v2391 = vld [vmem:[%s2378 + $0x60] sm:$0xff]
        %v2392 = vld [vmem:[%s2378 + $0x68] sm:$0xff]
        %v2393 = vld [vmem:[%s2378 + $0x70] sm:$0xff]
        %v2394 = vld [vmem:[%s2378 + $0x78] sm:$0xff]
        %v2395 = vld [vmem:[%s2378 + $0x80] sm:$0xff]
        %v2396 = vld [vmem:[%s2378 + $0x88] sm:$0xff]
        %v2397 = vld [vmem:[%s2378 + $0x90] sm:$0xff]
        %v2398 = vld [vmem:[%s2378 + $0x98] sm:$0xff]
        %v2399 = vld [vmem:[%s2378 + $0xa0] sm:$0xff]
        %v2400 = vld [vmem:[%s2378 + $0xa8] sm:$0xff]
        %v2401 = vld [vmem:[%s2378 + $0xb0] sm:$0xff]
        %v2402 = vld [vmem:[%s2378 + $0xb8] sm:$0xff]
        %v2403 = vld [vmem:[%s2378 + $0xc0] sm:$0xff]
        %v2404 = vld [vmem:[%s2378 + $0xc8] sm:$0xff]
        %v2405 = vld [vmem:[%s2378 + $0xd0] sm:$0xff]
        %v2406 = vld [vmem:[%s2378 + $0xd8] sm:$0xff]
        %v2407 = vld [vmem:[%s2378 + $0xe0] sm:$0xff]
        %v2408 = vld [vmem:[%s2378 + $0xe8] sm:$0xff]
        %v2409 = vld [vmem:[%s2378 + $0xf0] sm:$0xff]
        %v2410 = vld [vmem:[%s2378 + $0xf8] sm:$0xff]
        %v2411 = vld [vmem:[%s2378 + $0x100] sm:$0xff]
        %v2412 = vld [vmem:[%s2378 + $0x108] sm:$0xff]
        %v2413 = vld [vmem:[%s2378 + $0x110] sm:$0xff]
        %v2414 = vld [vmem:[%s2378 + $0x118] sm:$0xff]
        %v2415 = vld [vmem:[%s2378 + $0x120] sm:$0xff]
        %v2416 = vld [vmem:[%s2378 + $0x128] sm:$0xff]
        %v2417 = vld [vmem:[%s2378 + $0x130] sm:$0xff]
        %v2418 = vld [vmem:[%s2378 + $0x138] sm:$0xff]
        %v2419 = vld [vmem:[%s2378 + $0x140] sm:$0xff]
        %v2420 = vld [vmem:[%s2378 + $0x148] sm:$0xff]
        %v2421 = vld [vmem:[%s2378 + $0x150] sm:$0xff]
        %v2422 = vld [vmem:[%s2378 + $0x158] sm:$0xff]
        %v2423 = vld [vmem:[%s2378 + $0x160] sm:$0xff]
        %v2424 = vld [vmem:[%s2378 + $0x168] sm:$0xff]
        %v2425 = vld [vmem:[%s2378 + $0x170] sm:$0xff]
        %v2426 = vld [vmem:[%s2378 + $0x178] sm:$0xff]
        %v2427 = vld [vmem:[%s2378 + $0x180] sm:$0xff]
        %v2428 = vld [vmem:[%s2378 + $0x188] sm:$0xff]
        %v2429 = vld [vmem:[%s2378 + $0x190] sm:$0xff]
        %v2430 = vld [vmem:[%s2378 + $0x198] sm:$0xff]
        %v2431 = vld [vmem:[%s2378 + $0x1a0] sm:$0xff]
        %v2432 = vld [vmem:[%s2378 + $0x1a8] sm:$0xff]
        %v2433 = vld [vmem:[%s2378 + $0x1b0] sm:$0xff]
        %v2434 = vld [vmem:[%s2378 + $0x1b8] sm:$0xff]
        %v2435 = vld [vmem:[%s2378 + $0x1c0] sm:$0xff]
        %v2436 = vld [vmem:[%s2378 + $0x1c8] sm:$0xff]
        %v2437 = vld [vmem:[%s2378 + $0x1d0] sm:$0xff]
        %v2438 = vld [vmem:[%s2378 + $0x1d8] sm:$0xff]
        %v2439 = vld [vmem:[%s2378 + $0x1e0] sm:$0xff]
        %v2440 = vld [vmem:[%s2378 + $0x1e8] sm:$0xff]
        %v2441 = vld [vmem:[%s2378 + $0x1f0] sm:$0xff]
        %v2442 = vld [vmem:[%s2378 + $0x1f8] sm:$0xff]
        %v2443 = vld [vmem:[%s2378 + $0x200] sm:$0xff]
        %v2444 = vld [vmem:[%s2378 + $0x208] sm:$0xff]
        %v2445 = vld [vmem:[%s2378 + $0x210] sm:$0xff]
        %v2446 = vld [vmem:[%s2378 + $0x218] sm:$0xff]
        %v2447 = vld [vmem:[%s2378 + $0x220] sm:$0xff]
        %v2448 = vld [vmem:[%s2378 + $0x228] sm:$0xff]
        %v2449 = vld [vmem:[%s2378 + $0x230] sm:$0xff]
        %v2450 = vld [vmem:[%s2378 + $0x238] sm:$0xff]
        %v2452 = vsel %vm1803, %v2376, 0
        %2454 = vmatpush.msra.mxu0 %v2409
        %2455 = vmatpush.msra.mxu0 %v2407
        %2456 = vmatpush.msra.mxu0 %v2405
        %2457 = vmatpush.msra.mxu0 %v2403
        %2458 = vmatpush.msra.mxu0 %v2401
        %2459 = vmatpush.msra.mxu0 %v2399
        %2460 = vmatpush.msra.mxu0 %v2397
        %2461 = vmatpush.msra.mxu0 %v2395
        %2462 = vmatpush.msra.mxu0 %v2393
        %2463 = vmatpush.msra.mxu0 %v2391
        %2464 = vmatpush.msra.mxu0 %v2389
        %2465 = vmatpush.msra.mxu0 %v2387
        %2466 = vmatpush.msra.mxu0 %v2385
        %2467 = vmatpush.msra.mxu0 %v2383
        %2468 = vmatpush.msra.mxu0 %v2381
        %2469 = vmatpush.msra.mxu0 %v2379
        %2470 = vmatmul.f32.gmra.mxu0 %v2336
        %v2471 = vpop.f32.mrf.mxu0
        %v2472 = vadd.f32 0.0, %v2471
        %2473 = vdwg.mxu0
        %2474 = vmatpush.msra.mxu0 %v2441
        %2475 = vmatpush.msra.mxu0 %v2439
        %2476 = vmatpush.msra.mxu0 %v2437
        %2477 = vmatpush.msra.mxu0 %v2435
        %2478 = vmatpush.msra.mxu0 %v2433
        %2479 = vmatpush.msra.mxu0 %v2431
        %2480 = vmatpush.msra.mxu0 %v2429
        %2481 = vmatpush.msra.mxu0 %v2427
        %2482 = vmatpush.msra.mxu0 %v2425
        %2483 = vmatpush.msra.mxu0 %v2423
        %2484 = vmatpush.msra.mxu0 %v2421
        %2485 = vmatpush.msra.mxu0 %v2419
        %2486 = vmatpush.msra.mxu0 %v2417
        %2487 = vmatpush.msra.mxu0 %v2415
        %2488 = vmatpush.msra.mxu0 %v2413
        %2489 = vmatpush.msra.mxu0 %v2411
        %2490 = vmatmul.f32.gmra.mxu0 %v2356
        %v2491 = vpop.f32.mrf.mxu0
        %v2492 = vadd.f32 %v2472, %v2491
        %2493 = vdwg.mxu0
        %2494 = vmatpush.msra.mxu0 0.0
        %2495 = vmatpush.msra.mxu0 0.0
        %2496 = vmatpush.msra.mxu0 0.0
        %2497 = vmatpush.msra.mxu0 0.0
        %2498 = vmatpush.msra.mxu0 0.0
        %2499 = vmatpush.msra.mxu0 0.0
        %2500 = vmatpush.msra.mxu0 0.0
        %2501 = vmatpush.msra.mxu0 0.0
        %2502 = vmatpush.msra.mxu0 0.0
        %2503 = vmatpush.msra.mxu0 0.0
        %2504 = vmatpush.msra.mxu0 0.0
        %2505 = vmatpush.msra.mxu0 0.0
        %2506 = vmatpush.msra.mxu0 %v2449
        %2507 = vmatpush.msra.mxu0 %v2447
        %2508 = vmatpush.msra.mxu0 %v2445
        %2509 = vmatpush.msra.mxu0 %v2443
        %2510 = vmatmul.f32.gmra.mxu0 %v2452
        %v2511 = vpop.f32.mrf.mxu0
        %v2512 = vadd.f32 %v2492, %v2511
        %2513 = vdwg.mxu0
        %2514 = vmatpush.msra.mxu0 %v2410
        %2515 = vmatpush.msra.mxu0 %v2408
        %2516 = vmatpush.msra.mxu0 %v2406
        %2517 = vmatpush.msra.mxu0 %v2404
        %2518 = vmatpush.msra.mxu0 %v2402
        %2519 = vmatpush.msra.mxu0 %v2400
        %2520 = vmatpush.msra.mxu0 %v2398
        %2521 = vmatpush.msra.mxu0 %v2396
        %2522 = vmatpush.msra.mxu0 %v2394
        %2523 = vmatpush.msra.mxu0 %v2392
        %2524 = vmatpush.msra.mxu0 %v2390
        %2525 = vmatpush.msra.mxu0 %v2388
        %2526 = vmatpush.msra.mxu0 %v2386
        %2527 = vmatpush.msra.mxu0 %v2384
        %2528 = vmatpush.msra.mxu0 %v2382
        %2529 = vmatpush.msra.mxu0 %v2380
        %2530 = vmatmul.f32.gmra.mxu0 %v2336
        %v2531 = vpop.f32.mrf.mxu0
        %v2532 = vadd.f32 0.0, %v2531
        %2533 = vdwg.mxu0
        %2534 = vmatpush.msra.mxu0 %v2442
        %2535 = vmatpush.msra.mxu0 %v2440
        %2536 = vmatpush.msra.mxu0 %v2438
        %2537 = vmatpush.msra.mxu0 %v2436
        %2538 = vmatpush.msra.mxu0 %v2434
        %2539 = vmatpush.msra.mxu0 %v2432
        %2540 = vmatpush.msra.mxu0 %v2430
        %2541 = vmatpush.msra.mxu0 %v2428
        %2542 = vmatpush.msra.mxu0 %v2426
        %2543 = vmatpush.msra.mxu0 %v2424
        %2544 = vmatpush.msra.mxu0 %v2422
        %2545 = vmatpush.msra.mxu0 %v2420
        %2546 = vmatpush.msra.mxu0 %v2418
        %2547 = vmatpush.msra.mxu0 %v2416
        %2548 = vmatpush.msra.mxu0 %v2414
        %2549 = vmatpush.msra.mxu0 %v2412
        %2550 = vmatmul.f32.gmra.mxu0 %v2356
        %v2551 = vpop.f32.mrf.mxu0
        %v2552 = vadd.f32 %v2532, %v2551
        %2553 = vdwg.mxu0
        %2554 = vmatpush.msra.mxu0 0.0
        %2555 = vmatpush.msra.mxu0 0.0
        %2556 = vmatpush.msra.mxu0 0.0
        %2557 = vmatpush.msra.mxu0 0.0
        %2558 = vmatpush.msra.mxu0 0.0
        %2559 = vmatpush.msra.mxu0 0.0
        %2560 = vmatpush.msra.mxu0 0.0
        %2561 = vmatpush.msra.mxu0 0.0
        %2562 = vmatpush.msra.mxu0 0.0
        %2563 = vmatpush.msra.mxu0 0.0
        %2564 = vmatpush.msra.mxu0 0.0
        %2565 = vmatpush.msra.mxu0 0.0
        %2566 = vmatpush.msra.mxu0 %v2450
        %2567 = vmatpush.msra.mxu0 %v2448
        %2568 = vmatpush.msra.mxu0 %v2446
        %2569 = vmatpush.msra.mxu0 %v2444
        %2570 = vmatmul.f32.gmra.mxu0 %v2452
        %v2571 = vpop.f32.mrf.mxu0
        %v2572 = vadd.f32 %v2552, %v2571
        %2573 = vdwg.mxu0
        %v2574 = vadd.f32 %v2311, %v2512
        %v2575 = vadd.f32 %v2312, %v2572
        %s2576 = scalar_lea.vmem [#allocation5], 32
        %v2577 = vld [vmem:[%s2576] sm:$0x7f]
        %v2579 = vsel %vm1519, %v2577, 0
        %2581 = vmatpush.msra.mxu0 0.0
        %2582 = vmatpush.msra.mxu0 0.0
        %2583 = vmatpush.msra.mxu0 0.0
        %2584 = vmatpush.msra.mxu0 0.0
        %2585 = vmatpush.msra.mxu0 0.0
        %2586 = vmatpush.msra.mxu0 0.0
        %2587 = vmatpush.msra.mxu0 0.0
        %2588 = vmatpush.msra.mxu0 0.0
        %2589 = vmatpush.msra.mxu0 0.0
        %2590 = vmatpush.msra.mxu0 0.0
        %2591 = vmatpush.msra.mxu0 0.0
        %2592 = vmatpush.msra.mxu0 0.0
        %2593 = vmatpush.msra.mxu0 0.0
        %2594 = vmatpush.msra.mxu0 %v1525
        %2595 = vmatpush.msra.mxu0 %v1512
        %2596 = vmatpush.msra.mxu0 %v1509
        %2597 = vmatmul.f32.gmra.mxu0 %v2579
        %v2598 = vpop.f32.mrf.mxu0
        %v2599 = vadd.f32 0.0, %v2598
        %2600 = vdwg.mxu0
        %2601 = vmatpush.msra.mxu0 0.0
        %2602 = vmatpush.msra.mxu0 0.0
        %2603 = vmatpush.msra.mxu0 0.0
        %2604 = vmatpush.msra.mxu0 0.0
        %2605 = vmatpush.msra.mxu0 0.0
        %2606 = vmatpush.msra.mxu0 0.0
        %2607 = vmatpush.msra.mxu0 0.0
        %2608 = vmatpush.msra.mxu0 0.0
        %2609 = vmatpush.msra.mxu0 0.0
        %2610 = vmatpush.msra.mxu0 0.0
        %2611 = vmatpush.msra.mxu0 0.0
        %2612 = vmatpush.msra.mxu0 0.0
        %2613 = vmatpush.msra.mxu0 0.0
        %2614 = vmatpush.msra.mxu0 %v1528
        %2615 = vmatpush.msra.mxu0 %v1513
        %2616 = vmatpush.msra.mxu0 %v1510
        %2617 = vmatmul.f32.gmra.mxu0 %v2579
        %v2618 = vpop.f32.mrf.mxu0
        %v2619 = vadd.f32 0.0, %v2618
        %2620 = vdwg.mxu0
        %2621 = vmatpush.msra.mxu0 0.0
        %2622 = vmatpush.msra.mxu0 0.0
        %2623 = vmatpush.msra.mxu0 0.0
        %2624 = vmatpush.msra.mxu0 0.0
        %2625 = vmatpush.msra.mxu0 0.0
        %2626 = vmatpush.msra.mxu0 0.0
        %2627 = vmatpush.msra.mxu0 0.0
        %2628 = vmatpush.msra.mxu0 0.0
        %2629 = vmatpush.msra.mxu0 0.0
        %2630 = vmatpush.msra.mxu0 0.0
        %2631 = vmatpush.msra.mxu0 0.0
        %2632 = vmatpush.msra.mxu0 0.0
        %2633 = vmatpush.msra.mxu0 0.0
        %2634 = vmatpush.msra.mxu0 %v1531
        %2635 = vmatpush.msra.mxu0 %v1514
        %2636 = vmatpush.msra.mxu0 %v1511
        %2637 = vmatmul.f32.gmra.mxu0 %v2579
        %v2638 = vpop.f32.mrf.mxu0
        %v2639 = vadd.f32 0.0, %v2638
        %2640 = vdwg.mxu0
        %s2641 = scalar_lea.vmem %s6, 2304
        %v2642 = vld [vmem:[%s2641] sm:$0xff]
        %v2643 = vld [vmem:[%s2641 + $0x8] sm:$0xff]
        %v2644 = vld [vmem:[%s2641 + $0x10] sm:$0xff]
        %v2645 = vld [vmem:[%s2641 + $0x18] sm:$0xff]
        %v2646 = vld [vmem:[%s2641 + $0x20] sm:$0xff]
        %v2647 = vld [vmem:[%s2641 + $0x28] sm:$0xff]
        %v2648 = vld [vmem:[%s2641 + $0x30] sm:$0xff]
        %v2649 = vld [vmem:[%s2641 + $0x38] sm:$0xff]
        %v2650 = vld [vmem:[%s2641 + $0x40] sm:$0xff]
        %v2651 = vld [vmem:[%s2641 + $0x48] sm:$0xff]
        %v2652 = vld [vmem:[%s2641 + $0x50] sm:$0xff]
        %v2653 = vld [vmem:[%s2641 + $0x58] sm:$0xff]
        %v2654 = vld [vmem:[%s2641 + $0x60] sm:$0xff]
        %v2655 = vld [vmem:[%s2641 + $0x68] sm:$0xff]
        %v2656 = vld [vmem:[%s2641 + $0x70] sm:$0xff]
        %v2657 = vld [vmem:[%s2641 + $0x78] sm:$0xff]
        %v2658 = vld [vmem:[%s2641 + $0x80] sm:$0xff]
        %v2659 = vld [vmem:[%s2641 + $0x88] sm:$0xff]
        %v2660 = vld [vmem:[%s2641 + $0x90] sm:$0xff]
        %v2661 = vld [vmem:[%s2641 + $0x98] sm:$0xff]
        %v2662 = vld [vmem:[%s2641 + $0xa0] sm:$0xff]
        %v2663 = vld [vmem:[%s2641 + $0xa8] sm:$0xff]
        %v2664 = vld [vmem:[%s2641 + $0xb0] sm:$0xff]
        %v2665 = vld [vmem:[%s2641 + $0xb8] sm:$0xff]
        %v2666 = vld [vmem:[%s2641 + $0xc0] sm:$0xff]
        %v2667 = vld [vmem:[%s2641 + $0xc8] sm:$0xff]
        %v2668 = vld [vmem:[%s2641 + $0xd0] sm:$0xff]
        %v2669 = vld [vmem:[%s2641 + $0xd8] sm:$0xff]
        %v2670 = vld [vmem:[%s2641 + $0xe0] sm:$0xff]
        %v2671 = vld [vmem:[%s2641 + $0xe8] sm:$0xff]
        %v2672 = vld [vmem:[%s2641 + $0xf0] sm:$0xff]
        %v2673 = vld [vmem:[%s2641 + $0xf8] sm:$0xff]
        %v2674 = vld [vmem:[%s2641 + $0x100] sm:$0xff]
        %v2675 = vld [vmem:[%s2641 + $0x108] sm:$0xff]
        %v2676 = vld [vmem:[%s2641 + $0x110] sm:$0xff]
        %v2677 = vld [vmem:[%s2641 + $0x118] sm:$0xff]
        %v2678 = vld [vmem:[%s2641 + $0x120] sm:$0xff]
        %v2679 = vld [vmem:[%s2641 + $0x128] sm:$0xff]
        %v2680 = vld [vmem:[%s2641 + $0x130] sm:$0xff]
        %v2681 = vld [vmem:[%s2641 + $0x138] sm:$0xff]
        %v2682 = vld [vmem:[%s2641 + $0x140] sm:$0xff]
        %v2683 = vld [vmem:[%s2641 + $0x148] sm:$0xff]
        %v2684 = vld [vmem:[%s2641 + $0x150] sm:$0xff]
        %v2685 = vld [vmem:[%s2641 + $0x158] sm:$0xff]
        %v2686 = vld [vmem:[%s2641 + $0x160] sm:$0xff]
        %v2687 = vld [vmem:[%s2641 + $0x168] sm:$0xff]
        %v2688 = vld [vmem:[%s2641 + $0x170] sm:$0xff]
        %v2689 = vld [vmem:[%s2641 + $0x178] sm:$0xff]
        %v2690 = vld [vmem:[%s2641 + $0x180] sm:$0xff]
        %v2691 = vld [vmem:[%s2641 + $0x188] sm:$0xff]
        %v2692 = vld [vmem:[%s2641 + $0x190] sm:$0xff]
        %v2693 = vld [vmem:[%s2641 + $0x198] sm:$0xff]
        %v2694 = vld [vmem:[%s2641 + $0x1a0] sm:$0xff]
        %v2695 = vld [vmem:[%s2641 + $0x1a8] sm:$0xff]
        %v2696 = vld [vmem:[%s2641 + $0x1b0] sm:$0xff]
        %v2697 = vld [vmem:[%s2641 + $0x1b8] sm:$0xff]
        %v2698 = vld [vmem:[%s2641 + $0x1c0] sm:$0xff]
        %v2699 = vld [vmem:[%s2641 + $0x1c8] sm:$0xff]
        %v2700 = vld [vmem:[%s2641 + $0x1d0] sm:$0xff]
        %v2701 = vld [vmem:[%s2641 + $0x1d8] sm:$0xff]
        %v2702 = vld [vmem:[%s2641 + $0x1e0] sm:$0xff]
        %v2703 = vld [vmem:[%s2641 + $0x1e8] sm:$0xff]
        %v2704 = vld [vmem:[%s2641 + $0x1f0] sm:$0xff]
        %v2705 = vld [vmem:[%s2641 + $0x1f8] sm:$0xff]
        %v2706 = vld [vmem:[%s2641 + $0x200] sm:$0xff]
        %v2707 = vld [vmem:[%s2641 + $0x208] sm:$0xff]
        %v2708 = vld [vmem:[%s2641 + $0x210] sm:$0xff]
        %v2709 = vld [vmem:[%s2641 + $0x218] sm:$0xff]
        %v2710 = vld [vmem:[%s2641 + $0x220] sm:$0xff]
        %v2711 = vld [vmem:[%s2641 + $0x228] sm:$0xff]
        %v2712 = vld [vmem:[%s2641 + $0x230] sm:$0xff]
        %v2713 = vld [vmem:[%s2641 + $0x238] sm:$0xff]
        %v2715 = vsel %vm1803, %v2639, 0
        %2717 = vmatpush.msra.mxu0 %v2672
        %2718 = vmatpush.msra.mxu0 %v2670
        %2719 = vmatpush.msra.mxu0 %v2668
        %2720 = vmatpush.msra.mxu0 %v2666
        %2721 = vmatpush.msra.mxu0 %v2664
        %2722 = vmatpush.msra.mxu0 %v2662
        %2723 = vmatpush.msra.mxu0 %v2660
        %2724 = vmatpush.msra.mxu0 %v2658
        %2725 = vmatpush.msra.mxu0 %v2656
        %2726 = vmatpush.msra.mxu0 %v2654
        %2727 = vmatpush.msra.mxu0 %v2652
        %2728 = vmatpush.msra.mxu0 %v2650
        %2729 = vmatpush.msra.mxu0 %v2648
        %2730 = vmatpush.msra.mxu0 %v2646
        %2731 = vmatpush.msra.mxu0 %v2644
        %2732 = vmatpush.msra.mxu0 %v2642
        %2733 = vmatmul.f32.gmra.mxu0 %v2599
        %v2734 = vpop.f32.mrf.mxu0
        %v2735 = vadd.f32 0.0, %v2734
        %2736 = vdwg.mxu0
        %2737 = vmatpush.msra.mxu0 %v2704
        %2738 = vmatpush.msra.mxu0 %v2702
        %2739 = vmatpush.msra.mxu0 %v2700
        %2740 = vmatpush.msra.mxu0 %v2698
        %2741 = vmatpush.msra.mxu0 %v2696
        %2742 = vmatpush.msra.mxu0 %v2694
        %2743 = vmatpush.msra.mxu0 %v2692
        %2744 = vmatpush.msra.mxu0 %v2690
        %2745 = vmatpush.msra.mxu0 %v2688
        %2746 = vmatpush.msra.mxu0 %v2686
        %2747 = vmatpush.msra.mxu0 %v2684
        %2748 = vmatpush.msra.mxu0 %v2682
        %2749 = vmatpush.msra.mxu0 %v2680
        %2750 = vmatpush.msra.mxu0 %v2678
        %2751 = vmatpush.msra.mxu0 %v2676
        %2752 = vmatpush.msra.mxu0 %v2674
        %2753 = vmatmul.f32.gmra.mxu0 %v2619
        %v2754 = vpop.f32.mrf.mxu0
        %v2755 = vadd.f32 %v2735, %v2754
        %2756 = vdwg.mxu0
        %2757 = vmatpush.msra.mxu0 0.0
        %2758 = vmatpush.msra.mxu0 0.0
        %2759 = vmatpush.msra.mxu0 0.0
        %2760 = vmatpush.msra.mxu0 0.0
        %2761 = vmatpush.msra.mxu0 0.0
        %2762 = vmatpush.msra.mxu0 0.0
        %2763 = vmatpush.msra.mxu0 0.0
        %2764 = vmatpush.msra.mxu0 0.0
        %2765 = vmatpush.msra.mxu0 0.0
        %2766 = vmatpush.msra.mxu0 0.0
        %2767 = vmatpush.msra.mxu0 0.0
        %2768 = vmatpush.msra.mxu0 0.0
        %2769 = vmatpush.msra.mxu0 %v2712
        %2770 = vmatpush.msra.mxu0 %v2710
        %2771 = vmatpush.msra.mxu0 %v2708
        %2772 = vmatpush.msra.mxu0 %v2706
        %2773 = vmatmul.f32.gmra.mxu0 %v2715
        %v2774 = vpop.f32.mrf.mxu0
        %v2775 = vadd.f32 %v2755, %v2774
        %2776 = vdwg.mxu0
        %2777 = vmatpush.msra.mxu0 %v2673
        %2778 = vmatpush.msra.mxu0 %v2671
        %2779 = vmatpush.msra.mxu0 %v2669
        %2780 = vmatpush.msra.mxu0 %v2667
        %2781 = vmatpush.msra.mxu0 %v2665
        %2782 = vmatpush.msra.mxu0 %v2663
        %2783 = vmatpush.msra.mxu0 %v2661
        %2784 = vmatpush.msra.mxu0 %v2659
        %2785 = vmatpush.msra.mxu0 %v2657
        %2786 = vmatpush.msra.mxu0 %v2655
        %2787 = vmatpush.msra.mxu0 %v2653
        %2788 = vmatpush.msra.mxu0 %v2651
        %2789 = vmatpush.msra.mxu0 %v2649
        %2790 = vmatpush.msra.mxu0 %v2647
        %2791 = vmatpush.msra.mxu0 %v2645
        %2792 = vmatpush.msra.mxu0 %v2643
        %2793 = vmatmul.f32.gmra.mxu0 %v2599
        %v2794 = vpop.f32.mrf.mxu0
        %v2795 = vadd.f32 0.0, %v2794
        %2796 = vdwg.mxu0
        %2797 = vmatpush.msra.mxu0 %v2705
        %2798 = vmatpush.msra.mxu0 %v2703
        %2799 = vmatpush.msra.mxu0 %v2701
        %2800 = vmatpush.msra.mxu0 %v2699
        %2801 = vmatpush.msra.mxu0 %v2697
        %2802 = vmatpush.msra.mxu0 %v2695
        %2803 = vmatpush.msra.mxu0 %v2693
        %2804 = vmatpush.msra.mxu0 %v2691
        %2805 = vmatpush.msra.mxu0 %v2689
        %2806 = vmatpush.msra.mxu0 %v2687
        %2807 = vmatpush.msra.mxu0 %v2685
        %2808 = vmatpush.msra.mxu0 %v2683
        %2809 = vmatpush.msra.mxu0 %v2681
        %2810 = vmatpush.msra.mxu0 %v2679
        %2811 = vmatpush.msra.mxu0 %v2677
        %2812 = vmatpush.msra.mxu0 %v2675
        %2813 = vmatmul.f32.gmra.mxu0 %v2619
        %v2814 = vpop.f32.mrf.mxu0
        %v2815 = vadd.f32 %v2795, %v2814
        %2816 = vdwg.mxu0
        %2817 = vmatpush.msra.mxu0 0.0
        %2818 = vmatpush.msra.mxu0 0.0
        %2819 = vmatpush.msra.mxu0 0.0
        %2820 = vmatpush.msra.mxu0 0.0
        %2821 = vmatpush.msra.mxu0 0.0
        %2822 = vmatpush.msra.mxu0 0.0
        %2823 = vmatpush.msra.mxu0 0.0
        %2824 = vmatpush.msra.mxu0 0.0
        %2825 = vmatpush.msra.mxu0 0.0
        %2826 = vmatpush.msra.mxu0 0.0
        %2827 = vmatpush.msra.mxu0 0.0
        %2828 = vmatpush.msra.mxu0 0.0
        %2829 = vmatpush.msra.mxu0 %v2713
        %2830 = vmatpush.msra.mxu0 %v2711
        %2831 = vmatpush.msra.mxu0 %v2709
        %2832 = vmatpush.msra.mxu0 %v2707
        %2833 = vmatmul.f32.gmra.mxu0 %v2715
        %v2834 = vpop.f32.mrf.mxu0
        %v2835 = vadd.f32 %v2815, %v2834
        %2836 = vdwg.mxu0
        %v2837 = vadd.f32 %v2574, %v2775
        %v2838 = vadd.f32 %v2575, %v2835
        %v2839 = vld [vmem:[%s7] sm:$0x3]
        %v2841 = vperm.slane %v2839, 0
        %v2842 = vperm.slane %v2839, 1
        %v2845 = vadd.f32 %v2837, %v2841
        %v2846 = vadd.f32 %v2838, %v2842
        %v2847 = vmax.f32 %v2845, 0.0
        %v2848 = vmax.f32 %v2846, 0.0
        %v2849 = vld [vmem:[%s8] sm:$0x3]
        %vm2850 = vcmask 56320
        %v2852 = vsel %vm2850, %v2849, 0
        %vm2854 = vcmask 1046528
        %v2856 = vsel %vm2854, %v2847, 0
        %v2859 = vsel %vm2854, %v2848, 0
        %2861 = vmatpush.msra.mxu0 0.0
        %2862 = vmatpush.msra.mxu0 0.0
        %2863 = vmatpush.msra.mxu0 0.0
        %2864 = vmatpush.msra.mxu0 0.0
        %2865 = vmatpush.msra.mxu0 0.0
        %2866 = vmatpush.msra.mxu0 0.0
        %2867 = vmatpush.msra.mxu0 0.0
        %2868 = vmatpush.msra.mxu0 0.0
        %2869 = vmatpush.msra.mxu0 0.0
        %2870 = vmatpush.msra.mxu0 0.0
        %2871 = vmatpush.msra.mxu0 0.0
        %2872 = vmatpush.msra.mxu0 0.0
        %2873 = vmatpush.msra.mxu0 0.0
        %2874 = vmatpush.msra.mxu0 0.0
        %2875 = vmatpush.msra.mxu0 0.0
        %2876 = vmatpush.msra.mxu0 %v2856
        %2877 = vmatmul.f32.gmra.mxu0 %v2852
        %v2878 = vpop.f32.mrf.mxu0
        %v2879 = vadd.f32 0.0, %v2878
        %2880 = vdwg.mxu0
        %2881 = vmatpush.msra.mxu0 0.0
        %2882 = vmatpush.msra.mxu0 0.0
        %2883 = vmatpush.msra.mxu0 0.0
        %2884 = vmatpush.msra.mxu0 0.0
        %2885 = vmatpush.msra.mxu0 0.0
        %2886 = vmatpush.msra.mxu0 0.0
        %2887 = vmatpush.msra.mxu0 0.0
        %2888 = vmatpush.msra.mxu0 0.0
        %2889 = vmatpush.msra.mxu0 0.0
        %2890 = vmatpush.msra.mxu0 0.0
        %2891 = vmatpush.msra.mxu0 0.0
        %2892 = vmatpush.msra.mxu0 0.0
        %2893 = vmatpush.msra.mxu0 0.0
        %2894 = vmatpush.msra.mxu0 0.0
        %2895 = vmatpush.msra.mxu0 0.0
        %2896 = vmatpush.msra.mxu0 %v2859
        %2897 = vmatmul.f32.gmra.mxu0 %v2852
        %v2898 = vpop.f32.mrf.mxu0
        %v2899 = vadd.f32 0.0, %v2898
        %2900 = vdwg.mxu0
        %v2901 = vld [vmem:[#allocation7] sm:$0xff]
        %v2902 = vld [vmem:[#allocation7 + $0x8] sm:$0xff]
        %v2903 = vld [vmem:[#allocation7 + $0x10] sm:$0xff]
        %v2904 = vld [vmem:[#allocation7 + $0x18] sm:$0xff]
        %v2905 = vld [vmem:[#allocation7 + $0x20] sm:$0xff]
        %v2906 = vld [vmem:[#allocation7 + $0x28] sm:$0xff]
        %v2907 = vld [vmem:[#allocation7 + $0x30] sm:$0xff]
        %v2908 = vld [vmem:[#allocation7 + $0x38] sm:$0xff]
        %v2909 = vld [vmem:[#allocation7 + $0x40] sm:$0xff]
        %v2910 = vld [vmem:[#allocation7 + $0x48] sm:$0xff]
        %v2911 = vld [vmem:[#allocation7 + $0x50] sm:$0xff]
        %v2912 = vld [vmem:[#allocation7 + $0x58] sm:$0xff]
        %v2913 = vld [vmem:[#allocation7 + $0x60] sm:$0xff]
        %v2914 = vld [vmem:[#allocation7 + $0x68] sm:$0xff]
        %v2915 = vld [vmem:[#allocation7 + $0x70] sm:$0xff]
        %v2916 = vld [vmem:[#allocation7 + $0x78] sm:$0xff]
        %v2917 = vld [vmem:[#allocation7 + $0x80] sm:$0xff]
        %v2918 = vld [vmem:[#allocation7 + $0x88] sm:$0xff]
        %v2919 = vld [vmem:[#allocation7 + $0x90] sm:$0xff]
        %v2920 = vld [vmem:[#allocation7 + $0x98] sm:$0xff]
        %v2921 = vld [vmem:[#allocation7 + $0xa0] sm:$0xff]
        %v2922 = vld [vmem:[#allocation7 + $0xa8] sm:$0xff]
        %v2923 = vld [vmem:[#allocation7 + $0xb0] sm:$0xff]
        %v2924 = vld [vmem:[#allocation7 + $0xb8] sm:$0xff]
        %v2925 = vld [vmem:[#allocation7 + $0xc0] sm:$0xff]
        %v2926 = vld [vmem:[#allocation7 + $0xc8] sm:$0xff]
        %v2927 = vld [vmem:[#allocation7 + $0xd0] sm:$0xff]
        %v2928 = vld [vmem:[#allocation7 + $0xd8] sm:$0xff]
        %s2929 = scalar_lea.vmem %s8, 2
        %v2930 = vld [vmem:[%s2929] sm:$0x3]
        %v2932 = vsel %vm2850, %v2930, 0
        %2934 = vmatpush.msra.mxu0 0.0
        %2935 = vmatpush.msra.mxu0 0.0
        %2936 = vmatpush.msra.mxu0 0.0
        %2937 = vmatpush.msra.mxu0 0.0
        %2938 = vmatpush.msra.mxu0 0.0
        %2939 = vmatpush.msra.mxu0 0.0
        %2940 = vmatpush.msra.mxu0 0.0
        %2941 = vmatpush.msra.mxu0 0.0
        %2942 = vmatpush.msra.mxu0 0.0
        %2943 = vmatpush.msra.mxu0 0.0
        %2944 = vmatpush.msra.mxu0 0.0
        %2945 = vmatpush.msra.mxu0 0.0
        %2946 = vmatpush.msra.mxu0 0.0
        %2947 = vmatpush.msra.mxu0 0.0
        %2948 = vmatpush.msra.mxu0 0.0
        %2949 = vmatpush.msra.mxu0 %v2856
        %2950 = vmatmul.f32.gmra.mxu0 %v2932
        %v2951 = vpop.f32.mrf.mxu0
        %v2952 = vadd.f32 0.0, %v2951
        %2953 = vdwg.mxu0
        %2954 = vmatpush.msra.mxu0 0.0
        %2955 = vmatpush.msra.mxu0 0.0
        %2956 = vmatpush.msra.mxu0 0.0
        %2957 = vmatpush.msra.mxu0 0.0
        %2958 = vmatpush.msra.mxu0 0.0
        %2959 = vmatpush.msra.mxu0 0.0
        %2960 = vmatpush.msra.mxu0 0.0
        %2961 = vmatpush.msra.mxu0 0.0
        %2962 = vmatpush.msra.mxu0 0.0
        %2963 = vmatpush.msra.mxu0 0.0
        %2964 = vmatpush.msra.mxu0 0.0
        %2965 = vmatpush.msra.mxu0 0.0
        %2966 = vmatpush.msra.mxu0 0.0
        %2967 = vmatpush.msra.mxu0 0.0
        %2968 = vmatpush.msra.mxu0 0.0
        %2969 = vmatpush.msra.mxu0 %v2859
        %2970 = vmatmul.f32.gmra.mxu0 %v2932
        %v2971 = vpop.f32.mrf.mxu0
        %v2972 = vadd.f32 0.0, %v2971
        %2973 = vdwg.mxu0
        %s2974 = scalar_lea.vmem [#allocation7], 224
        %v2975 = vld [vmem:[%s2974] sm:$0xff]
        %v2976 = vld [vmem:[%s2974 + $0x8] sm:$0xff]
        %v2977 = vld [vmem:[%s2974 + $0x10] sm:$0xff]
        %v2978 = vld [vmem:[%s2974 + $0x18] sm:$0xff]
        %v2979 = vld [vmem:[%s2974 + $0x20] sm:$0xff]
        %v2980 = vld [vmem:[%s2974 + $0x28] sm:$0xff]
        %v2981 = vld [vmem:[%s2974 + $0x30] sm:$0xff]
        %v2982 = vld [vmem:[%s2974 + $0x38] sm:$0xff]
        %v2983 = vld [vmem:[%s2974 + $0x40] sm:$0xff]
        %v2984 = vld [vmem:[%s2974 + $0x48] sm:$0xff]
        %v2985 = vld [vmem:[%s2974 + $0x50] sm:$0xff]
        %v2986 = vld [vmem:[%s2974 + $0x58] sm:$0xff]
        %v2987 = vld [vmem:[%s2974 + $0x60] sm:$0xff]
        %v2988 = vld [vmem:[%s2974 + $0x68] sm:$0xff]
        %v2989 = vld [vmem:[%s2974 + $0x70] sm:$0xff]
        %v2990 = vld [vmem:[%s2974 + $0x78] sm:$0xff]
        %v2991 = vld [vmem:[%s2974 + $0x80] sm:$0xff]
        %v2992 = vld [vmem:[%s2974 + $0x88] sm:$0xff]
        %v2993 = vld [vmem:[%s2974 + $0x90] sm:$0xff]
        %v2994 = vld [vmem:[%s2974 + $0x98] sm:$0xff]
        %v2995 = vld [vmem:[%s2974 + $0xa0] sm:$0xff]
        %v2996 = vld [vmem:[%s2974 + $0xa8] sm:$0xff]
        %v2997 = vld [vmem:[%s2974 + $0xb0] sm:$0xff]
        %v2998 = vld [vmem:[%s2974 + $0xb8] sm:$0xff]
        %v2999 = vld [vmem:[%s2974 + $0xc0] sm:$0xff]
        %v3000 = vld [vmem:[%s2974 + $0xc8] sm:$0xff]
        %v3001 = vld [vmem:[%s2974 + $0xd0] sm:$0xff]
        %v3002 = vld [vmem:[%s2974 + $0xd8] sm:$0xff]
        %vm3003 = vcmask 785408
        %v3005 = vsel %vm3003, %v2972, 0
        %3007 = vmatpush.msra.mxu0 %v2990
        %3008 = vmatpush.msra.mxu0 %v2989
        %3009 = vmatpush.msra.mxu0 %v2988
        %3010 = vmatpush.msra.mxu0 %v2987
        %3011 = vmatpush.msra.mxu0 %v2986
        %3012 = vmatpush.msra.mxu0 %v2985
        %3013 = vmatpush.msra.mxu0 %v2984
        %3014 = vmatpush.msra.mxu0 %v2983
        %3015 = vmatpush.msra.mxu0 %v2982
        %3016 = vmatpush.msra.mxu0 %v2981
        %3017 = vmatpush.msra.mxu0 %v2980
        %3018 = vmatpush.msra.mxu0 %v2979
        %3019 = vmatpush.msra.mxu0 %v2978
        %3020 = vmatpush.msra.mxu0 %v2977
        %3021 = vmatpush.msra.mxu0 %v2976
        %3022 = vmatpush.msra.mxu0 %v2975
        %3023 = vmatmul.f32.gmra.mxu0 %v2952
        %v3024 = vpop.f32.mrf.mxu0
        %v3025 = vadd.f32 0.0, %v3024
        %3026 = vdwg.mxu0
        %3027 = vmatpush.msra.mxu0 0.0
        %3028 = vmatpush.msra.mxu0 0.0
        %3029 = vmatpush.msra.mxu0 0.0
        %3030 = vmatpush.msra.mxu0 0.0
        %3031 = vmatpush.msra.mxu0 %v3002
        %3032 = vmatpush.msra.mxu0 %v3001
        %3033 = vmatpush.msra.mxu0 %v3000
        %3034 = vmatpush.msra.mxu0 %v2999
        %3035 = vmatpush.msra.mxu0 %v2998
        %3036 = vmatpush.msra.mxu0 %v2997
        %3037 = vmatpush.msra.mxu0 %v2996
        %3038 = vmatpush.msra.mxu0 %v2995
        %3039 = vmatpush.msra.mxu0 %v2994
        %3040 = vmatpush.msra.mxu0 %v2993
        %3041 = vmatpush.msra.mxu0 %v2992
        %3042 = vmatpush.msra.mxu0 %v2991
        %3043 = vmatmul.f32.gmra.mxu0 %v3005
        %v3044 = vpop.f32.mrf.mxu0
        %v3045 = vadd.f32 %v3025, %v3044
        %3046 = vdwg.mxu0
        %v3048 = vsel %vm3003, %v2899, 0
        %3050 = vmatpush.msra.mxu0 %v2916
        %3051 = vmatpush.msra.mxu0 %v2915
        %3052 = vmatpush.msra.mxu0 %v2914
        %3053 = vmatpush.msra.mxu0 %v2913
        %3054 = vmatpush.msra.mxu0 %v2912
        %3055 = vmatpush.msra.mxu0 %v2911
        %3056 = vmatpush.msra.mxu0 %v2910
        %3057 = vmatpush.msra.mxu0 %v2909
        %3058 = vmatpush.msra.mxu0 %v2908
        %3059 = vmatpush.msra.mxu0 %v2907
        %3060 = vmatpush.msra.mxu0 %v2906
        %3061 = vmatpush.msra.mxu0 %v2905
        %3062 = vmatpush.msra.mxu0 %v2904
        %3063 = vmatpush.msra.mxu0 %v2903
        %3064 = vmatpush.msra.mxu0 %v2902
        %3065 = vmatpush.msra.mxu0 %v2901
        %3066 = vmatmul.f32.gmra.mxu0 %v2879
        %v3067 = vpop.f32.mrf.mxu0
        %v3068 = vadd.f32 %v3045, %v3067
        %3069 = vdwg.mxu0
        %3070 = vmatpush.msra.mxu0 0.0
        %3071 = vmatpush.msra.mxu0 0.0
        %3072 = vmatpush.msra.mxu0 0.0
        %3073 = vmatpush.msra.mxu0 0.0
        %3074 = vmatpush.msra.mxu0 %v2928
        %3075 = vmatpush.msra.mxu0 %v2927
        %3076 = vmatpush.msra.mxu0 %v2926
        %3077 = vmatpush.msra.mxu0 %v2925
        %3078 = vmatpush.msra.mxu0 %v2924
        %3079 = vmatpush.msra.mxu0 %v2923
        %3080 = vmatpush.msra.mxu0 %v2922
        %3081 = vmatpush.msra.mxu0 %v2921
        %3082 = vmatpush.msra.mxu0 %v2920
        %3083 = vmatpush.msra.mxu0 %v2919
        %3084 = vmatpush.msra.mxu0 %v2918
        %3085 = vmatpush.msra.mxu0 %v2917
        %3086 = vmatmul.f32.gmra.mxu0 %v3048
        %v3087 = vpop.f32.mrf.mxu0
        %v3088 = vadd.f32 %v3068, %v3087
        %3089 = vdwg.mxu0
        %s3090 = scalar_lea.vmem %s8, 4
        %v3091 = vld [vmem:[%s3090] sm:$0x3]
        %v3093 = vsel %vm2850, %v3091, 0
        %3095 = vmatpush.msra.mxu0 0.0
        %3096 = vmatpush.msra.mxu0 0.0
        %3097 = vmatpush.msra.mxu0 0.0
        %3098 = vmatpush.msra.mxu0 0.0
        %3099 = vmatpush.msra.mxu0 0.0
        %3100 = vmatpush.msra.mxu0 0.0
        %3101 = vmatpush.msra.mxu0 0.0
        %3102 = vmatpush.msra.mxu0 0.0
        %3103 = vmatpush.msra.mxu0 0.0
        %3104 = vmatpush.msra.mxu0 0.0
        %3105 = vmatpush.msra.mxu0 0.0
        %3106 = vmatpush.msra.mxu0 0.0
        %3107 = vmatpush.msra.mxu0 0.0
        %3108 = vmatpush.msra.mxu0 0.0
        %3109 = vmatpush.msra.mxu0 0.0
        %3110 = vmatpush.msra.mxu0 %v2856
        %3111 = vmatmul.f32.gmra.mxu0 %v3093
        %v3112 = vpop.f32.mrf.mxu0
        %v3113 = vadd.f32 0.0, %v3112
        %3114 = vdwg.mxu0
        %3115 = vmatpush.msra.mxu0 0.0
        %3116 = vmatpush.msra.mxu0 0.0
        %3117 = vmatpush.msra.mxu0 0.0
        %3118 = vmatpush.msra.mxu0 0.0
        %3119 = vmatpush.msra.mxu0 0.0
        %3120 = vmatpush.msra.mxu0 0.0
        %3121 = vmatpush.msra.mxu0 0.0
        %3122 = vmatpush.msra.mxu0 0.0
        %3123 = vmatpush.msra.mxu0 0.0
        %3124 = vmatpush.msra.mxu0 0.0
        %3125 = vmatpush.msra.mxu0 0.0
        %3126 = vmatpush.msra.mxu0 0.0
        %3127 = vmatpush.msra.mxu0 0.0
        %3128 = vmatpush.msra.mxu0 0.0
        %3129 = vmatpush.msra.mxu0 0.0
        %3130 = vmatpush.msra.mxu0 %v2859
        %3131 = vmatmul.f32.gmra.mxu0 %v3093
        %v3132 = vpop.f32.mrf.mxu0
        %v3133 = vadd.f32 0.0, %v3132
        %3134 = vdwg.mxu0
        %s3135 = scalar_lea.vmem [#allocation7], 448
        %v3136 = vld [vmem:[%s3135] sm:$0xff]
        %v3137 = vld [vmem:[%s3135 + $0x8] sm:$0xff]
        %v3138 = vld [vmem:[%s3135 + $0x10] sm:$0xff]
        %v3139 = vld [vmem:[%s3135 + $0x18] sm:$0xff]
        %v3140 = vld [vmem:[%s3135 + $0x20] sm:$0xff]
        %v3141 = vld [vmem:[%s3135 + $0x28] sm:$0xff]
        %v3142 = vld [vmem:[%s3135 + $0x30] sm:$0xff]
        %v3143 = vld [vmem:[%s3135 + $0x38] sm:$0xff]
        %v3144 = vld [vmem:[%s3135 + $0x40] sm:$0xff]
        %v3145 = vld [vmem:[%s3135 + $0x48] sm:$0xff]
        %v3146 = vld [vmem:[%s3135 + $0x50] sm:$0xff]
        %v3147 = vld [vmem:[%s3135 + $0x58] sm:$0xff]
        %v3148 = vld [vmem:[%s3135 + $0x60] sm:$0xff]
        %v3149 = vld [vmem:[%s3135 + $0x68] sm:$0xff]
        %v3150 = vld [vmem:[%s3135 + $0x70] sm:$0xff]
        %v3151 = vld [vmem:[%s3135 + $0x78] sm:$0xff]
        %v3152 = vld [vmem:[%s3135 + $0x80] sm:$0xff]
        %v3153 = vld [vmem:[%s3135 + $0x88] sm:$0xff]
        %v3154 = vld [vmem:[%s3135 + $0x90] sm:$0xff]
        %v3155 = vld [vmem:[%s3135 + $0x98] sm:$0xff]
        %v3156 = vld [vmem:[%s3135 + $0xa0] sm:$0xff]
        %v3157 = vld [vmem:[%s3135 + $0xa8] sm:$0xff]
        %v3158 = vld [vmem:[%s3135 + $0xb0] sm:$0xff]
        %v3159 = vld [vmem:[%s3135 + $0xb8] sm:$0xff]
        %v3160 = vld [vmem:[%s3135 + $0xc0] sm:$0xff]
        %v3161 = vld [vmem:[%s3135 + $0xc8] sm:$0xff]
        %v3162 = vld [vmem:[%s3135 + $0xd0] sm:$0xff]
        %v3163 = vld [vmem:[%s3135 + $0xd8] sm:$0xff]
        %v3165 = vsel %vm3003, %v3133, 0
        %3167 = vmatpush.msra.mxu0 %v3151
        %3168 = vmatpush.msra.mxu0 %v3150
        %3169 = vmatpush.msra.mxu0 %v3149
        %3170 = vmatpush.msra.mxu0 %v3148
        %3171 = vmatpush.msra.mxu0 %v3147
        %3172 = vmatpush.msra.mxu0 %v3146
        %3173 = vmatpush.msra.mxu0 %v3145
        %3174 = vmatpush.msra.mxu0 %v3144
        %3175 = vmatpush.msra.mxu0 %v3143
        %3176 = vmatpush.msra.mxu0 %v3142
        %3177 = vmatpush.msra.mxu0 %v3141
        %3178 = vmatpush.msra.mxu0 %v3140
        %3179 = vmatpush.msra.mxu0 %v3139
        %3180 = vmatpush.msra.mxu0 %v3138
        %3181 = vmatpush.msra.mxu0 %v3137
        %3182 = vmatpush.msra.mxu0 %v3136
        %3183 = vmatmul.f32.gmra.mxu0 %v3113
        %v3184 = vpop.f32.mrf.mxu0
        %v3185 = vadd.f32 0.0, %v3184
        %3186 = vdwg.mxu0
        %3187 = vmatpush.msra.mxu0 0.0
        %3188 = vmatpush.msra.mxu0 0.0
        %3189 = vmatpush.msra.mxu0 0.0
        %3190 = vmatpush.msra.mxu0 0.0
        %3191 = vmatpush.msra.mxu0 %v3163
        %3192 = vmatpush.msra.mxu0 %v3162
        %3193 = vmatpush.msra.mxu0 %v3161
        %3194 = vmatpush.msra.mxu0 %v3160
        %3195 = vmatpush.msra.mxu0 %v3159
        %3196 = vmatpush.msra.mxu0 %v3158
        %3197 = vmatpush.msra.mxu0 %v3157
        %3198 = vmatpush.msra.mxu0 %v3156
        %3199 = vmatpush.msra.mxu0 %v3155
        %3200 = vmatpush.msra.mxu0 %v3154
        %3201 = vmatpush.msra.mxu0 %v3153
        %3202 = vmatpush.msra.mxu0 %v3152
        %3203 = vmatmul.f32.gmra.mxu0 %v3165
        %v3204 = vpop.f32.mrf.mxu0
        %v3205 = vadd.f32 %v3185, %v3204
        %3206 = vdwg.mxu0
        %v3207 = vadd.f32 %v3088, %v3205
        %s3208 = scalar_lea.vmem %s8, 6
        %v3209 = vld [vmem:[%s3208] sm:$0x3]
        %v3211 = vsel %vm2850, %v3209, 0
        %3213 = vmatpush.msra.mxu0 0.0
        %3214 = vmatpush.msra.mxu0 0.0
        %3215 = vmatpush.msra.mxu0 0.0
        %3216 = vmatpush.msra.mxu0 0.0
        %3217 = vmatpush.msra.mxu0 0.0
        %3218 = vmatpush.msra.mxu0 0.0
        %3219 = vmatpush.msra.mxu0 0.0
        %3220 = vmatpush.msra.mxu0 0.0
        %3221 = vmatpush.msra.mxu0 0.0
        %3222 = vmatpush.msra.mxu0 0.0
        %3223 = vmatpush.msra.mxu0 0.0
        %3224 = vmatpush.msra.mxu0 0.0
        %3225 = vmatpush.msra.mxu0 0.0
        %3226 = vmatpush.msra.mxu0 0.0
        %3227 = vmatpush.msra.mxu0 0.0
        %3228 = vmatpush.msra.mxu0 %v2856
        %3229 = vmatmul.f32.gmra.mxu0 %v3211
        %v3230 = vpop.f32.mrf.mxu0
        %v3231 = vadd.f32 0.0, %v3230
        %3232 = vdwg.mxu0
        %3233 = vmatpush.msra.mxu0 0.0
        %3234 = vmatpush.msra.mxu0 0.0
        %3235 = vmatpush.msra.mxu0 0.0
        %3236 = vmatpush.msra.mxu0 0.0
        %3237 = vmatpush.msra.mxu0 0.0
        %3238 = vmatpush.msra.mxu0 0.0
        %3239 = vmatpush.msra.mxu0 0.0
        %3240 = vmatpush.msra.mxu0 0.0
        %3241 = vmatpush.msra.mxu0 0.0
        %3242 = vmatpush.msra.mxu0 0.0
        %3243 = vmatpush.msra.mxu0 0.0
        %3244 = vmatpush.msra.mxu0 0.0
        %3245 = vmatpush.msra.mxu0 0.0
        %3246 = vmatpush.msra.mxu0 0.0
        %3247 = vmatpush.msra.mxu0 0.0
        %3248 = vmatpush.msra.mxu0 %v2859
        %3249 = vmatmul.f32.gmra.mxu0 %v3211
        %v3250 = vpop.f32.mrf.mxu0
        %v3251 = vadd.f32 0.0, %v3250
        %3252 = vdwg.mxu0
        %s3253 = scalar_lea.vmem [#allocation7], 672
        %v3254 = vld [vmem:[%s3253] sm:$0xff]
        %v3255 = vld [vmem:[%s3253 + $0x8] sm:$0xff]
        %v3256 = vld [vmem:[%s3253 + $0x10] sm:$0xff]
        %v3257 = vld [vmem:[%s3253 + $0x18] sm:$0xff]
        %v3258 = vld [vmem:[%s3253 + $0x20] sm:$0xff]
        %v3259 = vld [vmem:[%s3253 + $0x28] sm:$0xff]
        %v3260 = vld [vmem:[%s3253 + $0x30] sm:$0xff]
        %v3261 = vld [vmem:[%s3253 + $0x38] sm:$0xff]
        %v3262 = vld [vmem:[%s3253 + $0x40] sm:$0xff]
        %v3263 = vld [vmem:[%s3253 + $0x48] sm:$0xff]
        %v3264 = vld [vmem:[%s3253 + $0x50] sm:$0xff]
        %v3265 = vld [vmem:[%s3253 + $0x58] sm:$0xff]
        %v3266 = vld [vmem:[%s3253 + $0x60] sm:$0xff]
        %v3267 = vld [vmem:[%s3253 + $0x68] sm:$0xff]
        %v3268 = vld [vmem:[%s3253 + $0x70] sm:$0xff]
        %v3269 = vld [vmem:[%s3253 + $0x78] sm:$0xff]
        %v3270 = vld [vmem:[%s3253 + $0x80] sm:$0xff]
        %v3271 = vld [vmem:[%s3253 + $0x88] sm:$0xff]
        %v3272 = vld [vmem:[%s3253 + $0x90] sm:$0xff]
        %v3273 = vld [vmem:[%s3253 + $0x98] sm:$0xff]
        %v3274 = vld [vmem:[%s3253 + $0xa0] sm:$0xff]
        %v3275 = vld [vmem:[%s3253 + $0xa8] sm:$0xff]
        %v3276 = vld [vmem:[%s3253 + $0xb0] sm:$0xff]
        %v3277 = vld [vmem:[%s3253 + $0xb8] sm:$0xff]
        %v3278 = vld [vmem:[%s3253 + $0xc0] sm:$0xff]
        %v3279 = vld [vmem:[%s3253 + $0xc8] sm:$0xff]
        %v3280 = vld [vmem:[%s3253 + $0xd0] sm:$0xff]
        %v3281 = vld [vmem:[%s3253 + $0xd8] sm:$0xff]
        %v3283 = vsel %vm3003, %v3251, 0
        %3285 = vmatpush.msra.mxu0 %v3269
        %3286 = vmatpush.msra.mxu0 %v3268
        %3287 = vmatpush.msra.mxu0 %v3267
        %3288 = vmatpush.msra.mxu0 %v3266
        %3289 = vmatpush.msra.mxu0 %v3265
        %3290 = vmatpush.msra.mxu0 %v3264
        %3291 = vmatpush.msra.mxu0 %v3263
        %3292 = vmatpush.msra.mxu0 %v3262
        %3293 = vmatpush.msra.mxu0 %v3261
        %3294 = vmatpush.msra.mxu0 %v3260
        %3295 = vmatpush.msra.mxu0 %v3259
        %3296 = vmatpush.msra.mxu0 %v3258
        %3297 = vmatpush.msra.mxu0 %v3257
        %3298 = vmatpush.msra.mxu0 %v3256
        %3299 = vmatpush.msra.mxu0 %v3255
        %3300 = vmatpush.msra.mxu0 %v3254
        %3301 = vmatmul.f32.gmra.mxu0 %v3231
        %v3302 = vpop.f32.mrf.mxu0
        %v3303 = vadd.f32 0.0, %v3302
        %3304 = vdwg.mxu0
        %3305 = vmatpush.msra.mxu0 0.0
        %3306 = vmatpush.msra.mxu0 0.0
        %3307 = vmatpush.msra.mxu0 0.0
        %3308 = vmatpush.msra.mxu0 0.0
        %3309 = vmatpush.msra.mxu0 %v3281
        %3310 = vmatpush.msra.mxu0 %v3280
        %3311 = vmatpush.msra.mxu0 %v3279
        %3312 = vmatpush.msra.mxu0 %v3278
        %3313 = vmatpush.msra.mxu0 %v3277
        %3314 = vmatpush.msra.mxu0 %v3276
        %3315 = vmatpush.msra.mxu0 %v3275
        %3316 = vmatpush.msra.mxu0 %v3274
        %3317 = vmatpush.msra.mxu0 %v3273
        %3318 = vmatpush.msra.mxu0 %v3272
        %3319 = vmatpush.msra.mxu0 %v3271
        %3320 = vmatpush.msra.mxu0 %v3270
        %3321 = vmatmul.f32.gmra.mxu0 %v3283
        %v3322 = vpop.f32.mrf.mxu0
        %v3323 = vadd.f32 %v3303, %v3322
        %3324 = vdwg.mxu0
        %v3325 = vadd.f32 %v3207, %v3323
        %s3326 = scalar_lea.vmem %s8, 8
        %v3327 = vld [vmem:[%s3326] sm:$0x3]
        %v3329 = vsel %vm2850, %v3327, 0
        %3331 = vmatpush.msra.mxu0 0.0
        %3332 = vmatpush.msra.mxu0 0.0
        %3333 = vmatpush.msra.mxu0 0.0
        %3334 = vmatpush.msra.mxu0 0.0
        %3335 = vmatpush.msra.mxu0 0.0
        %3336 = vmatpush.msra.mxu0 0.0
        %3337 = vmatpush.msra.mxu0 0.0
        %3338 = vmatpush.msra.mxu0 0.0
        %3339 = vmatpush.msra.mxu0 0.0
        %3340 = vmatpush.msra.mxu0 0.0
        %3341 = vmatpush.msra.mxu0 0.0
        %3342 = vmatpush.msra.mxu0 0.0
        %3343 = vmatpush.msra.mxu0 0.0
        %3344 = vmatpush.msra.mxu0 0.0
        %3345 = vmatpush.msra.mxu0 0.0
        %3346 = vmatpush.msra.mxu0 %v2856
        %3347 = vmatmul.f32.gmra.mxu0 %v3329
        %v3348 = vpop.f32.mrf.mxu0
        %v3349 = vadd.f32 0.0, %v3348
        %3350 = vdwg.mxu0
        %3351 = vmatpush.msra.mxu0 0.0
        %3352 = vmatpush.msra.mxu0 0.0
        %3353 = vmatpush.msra.mxu0 0.0
        %3354 = vmatpush.msra.mxu0 0.0
        %3355 = vmatpush.msra.mxu0 0.0
        %3356 = vmatpush.msra.mxu0 0.0
        %3357 = vmatpush.msra.mxu0 0.0
        %3358 = vmatpush.msra.mxu0 0.0
        %3359 = vmatpush.msra.mxu0 0.0
        %3360 = vmatpush.msra.mxu0 0.0
        %3361 = vmatpush.msra.mxu0 0.0
        %3362 = vmatpush.msra.mxu0 0.0
        %3363 = vmatpush.msra.mxu0 0.0
        %3364 = vmatpush.msra.mxu0 0.0
        %3365 = vmatpush.msra.mxu0 0.0
        %3366 = vmatpush.msra.mxu0 %v2859
        %3367 = vmatmul.f32.gmra.mxu0 %v3329
        %v3368 = vpop.f32.mrf.mxu0
        %v3369 = vadd.f32 0.0, %v3368
        %3370 = vdwg.mxu0
        %s3371 = scalar_lea.vmem [#allocation7], 896
        %v3372 = vld [vmem:[%s3371] sm:$0xff]
        %v3373 = vld [vmem:[%s3371 + $0x8] sm:$0xff]
        %v3374 = vld [vmem:[%s3371 + $0x10] sm:$0xff]
        %v3375 = vld [vmem:[%s3371 + $0x18] sm:$0xff]
        %v3376 = vld [vmem:[%s3371 + $0x20] sm:$0xff]
        %v3377 = vld [vmem:[%s3371 + $0x28] sm:$0xff]
        %v3378 = vld [vmem:[%s3371 + $0x30] sm:$0xff]
        %v3379 = vld [vmem:[%s3371 + $0x38] sm:$0xff]
        %v3380 = vld [vmem:[%s3371 + $0x40] sm:$0xff]
        %v3381 = vld [vmem:[%s3371 + $0x48] sm:$0xff]
        %v3382 = vld [vmem:[%s3371 + $0x50] sm:$0xff]
        %v3383 = vld [vmem:[%s3371 + $0x58] sm:$0xff]
        %v3384 = vld [vmem:[%s3371 + $0x60] sm:$0xff]
        %v3385 = vld [vmem:[%s3371 + $0x68] sm:$0xff]
        %v3386 = vld [vmem:[%s3371 + $0x70] sm:$0xff]
        %v3387 = vld [vmem:[%s3371 + $0x78] sm:$0xff]
        %v3388 = vld [vmem:[%s3371 + $0x80] sm:$0xff]
        %v3389 = vld [vmem:[%s3371 + $0x88] sm:$0xff]
        %v3390 = vld [vmem:[%s3371 + $0x90] sm:$0xff]
        %v3391 = vld [vmem:[%s3371 + $0x98] sm:$0xff]
        %v3392 = vld [vmem:[%s3371 + $0xa0] sm:$0xff]
        %v3393 = vld [vmem:[%s3371 + $0xa8] sm:$0xff]
        %v3394 = vld [vmem:[%s3371 + $0xb0] sm:$0xff]
        %v3395 = vld [vmem:[%s3371 + $0xb8] sm:$0xff]
        %v3396 = vld [vmem:[%s3371 + $0xc0] sm:$0xff]
        %v3397 = vld [vmem:[%s3371 + $0xc8] sm:$0xff]
        %v3398 = vld [vmem:[%s3371 + $0xd0] sm:$0xff]
        %v3399 = vld [vmem:[%s3371 + $0xd8] sm:$0xff]
        %v3401 = vsel %vm3003, %v3369, 0
        %3403 = vmatpush.msra.mxu0 %v3387
        %3404 = vmatpush.msra.mxu0 %v3386
        %3405 = vmatpush.msra.mxu0 %v3385
        %3406 = vmatpush.msra.mxu0 %v3384
        %3407 = vmatpush.msra.mxu0 %v3383
        %3408 = vmatpush.msra.mxu0 %v3382
        %3409 = vmatpush.msra.mxu0 %v3381
        %3410 = vmatpush.msra.mxu0 %v3380
        %3411 = vmatpush.msra.mxu0 %v3379
        %3412 = vmatpush.msra.mxu0 %v3378
        %3413 = vmatpush.msra.mxu0 %v3377
        %3414 = vmatpush.msra.mxu0 %v3376
        %3415 = vmatpush.msra.mxu0 %v3375
        %3416 = vmatpush.msra.mxu0 %v3374
        %3417 = vmatpush.msra.mxu0 %v3373
        %3418 = vmatpush.msra.mxu0 %v3372
        %3419 = vmatmul.f32.gmra.mxu0 %v3349
        %v3420 = vpop.f32.mrf.mxu0
        %v3421 = vadd.f32 0.0, %v3420
        %3422 = vdwg.mxu0
        %3423 = vmatpush.msra.mxu0 0.0
        %3424 = vmatpush.msra.mxu0 0.0
        %3425 = vmatpush.msra.mxu0 0.0
        %3426 = vmatpush.msra.mxu0 0.0
        %3427 = vmatpush.msra.mxu0 %v3399
        %3428 = vmatpush.msra.mxu0 %v3398
        %3429 = vmatpush.msra.mxu0 %v3397
        %3430 = vmatpush.msra.mxu0 %v3396
        %3431 = vmatpush.msra.mxu0 %v3395
        %3432 = vmatpush.msra.mxu0 %v3394
        %3433 = vmatpush.msra.mxu0 %v3393
        %3434 = vmatpush.msra.mxu0 %v3392
        %3435 = vmatpush.msra.mxu0 %v3391
        %3436 = vmatpush.msra.mxu0 %v3390
        %3437 = vmatpush.msra.mxu0 %v3389
        %3438 = vmatpush.msra.mxu0 %v3388
        %3439 = vmatmul.f32.gmra.mxu0 %v3401
        %v3440 = vpop.f32.mrf.mxu0
        %v3441 = vadd.f32 %v3421, %v3440
        %3442 = vdwg.mxu0
        %v3443 = vadd.f32 %v3325, %v3441
        %v3444 = vld [vmem:[%s10] sm:$0x1]
        %v3446 = vperm.slane %v3444, 0
        %v3448 = vadd.f32 %v3443, %v3446
        %v3449 = vmax.f32 %v3448, 0.0
        %v3450 = vld [vmem:[%s13] sm:$0x1]
        %v3451 = vld [vmem:[%s599] sm:$0x1]
        %v3452 = vld [vmem:[%s12] sm:$0x1]
        %3454 = vset.pattern.permute.xlu0 0
        %3455 = vperm.xlu0 %3454, %v3451
        %v3456 = vpop.permute.xlu0 %3455
        %v3458 = vperm.slane %v3456, 0
        %v3459 = vmul.f32 %v3458, %v3452
        %v3460 = vadd.f32 %v3450, %v3459
        %v3461 = vld [vmem:[%s11] sm:$0xff]
        %v3462 = vld [vmem:[%s11 + $0x8] sm:$0xff]
        %v3463 = vld [vmem:[%s11 + $0x10] sm:$0xff]
        %v3464 = vld [vmem:[%s11 + $0x18] sm:$0xff]
        %v3465 = vld [vmem:[%s11 + $0x20] sm:$0xff]
        %v3466 = vld [vmem:[%s11 + $0x28] sm:$0xff]
        %v3467 = vld [vmem:[%s11 + $0x30] sm:$0xff]
        %v3468 = vld [vmem:[%s11 + $0x38] sm:$0xff]
        %v3469 = vld [vmem:[%s11 + $0x40] sm:$0xff]
        %v3470 = vld [vmem:[%s11 + $0x48] sm:$0xff]
        %v3471 = vld [vmem:[%s11 + $0x50] sm:$0xff]
        %v3472 = vld [vmem:[%s11 + $0x58] sm:$0xff]
        %v3473 = vld [vmem:[%s11 + $0x60] sm:$0xff]
        %v3474 = vld [vmem:[%s11 + $0x68] sm:$0xff]
        %v3475 = vld [vmem:[%s11 + $0x70] sm:$0xff]
        %v3476 = vld [vmem:[%s11 + $0x78] sm:$0xff]
        %3477 = vmatpush.msra.mxu0 %v3476
        %3478 = vmatpush.msra.mxu0 %v3475
        %3479 = vmatpush.msra.mxu0 %v3474
        %3480 = vmatpush.msra.mxu0 %v3473
        %3481 = vmatpush.msra.mxu0 %v3472
        %3482 = vmatpush.msra.mxu0 %v3471
        %3483 = vmatpush.msra.mxu0 %v3470
        %3484 = vmatpush.msra.mxu0 %v3469
        %3485 = vmatpush.msra.mxu0 %v3468
        %3486 = vmatpush.msra.mxu0 %v3467
        %3487 = vmatpush.msra.mxu0 %v3466
        %3488 = vmatpush.msra.mxu0 %v3465
        %3489 = vmatpush.msra.mxu0 %v3464
        %3490 = vmatpush.msra.mxu0 %v3463
        %3491 = vmatpush.msra.mxu0 %v3462
        %3492 = vmatpush.msra.mxu0 %v3461
        %3493 = vmatmul.f32.gmra.mxu0 %v3449
        %v3494 = vpop.f32.mrf.mxu0
        %v3495 = vadd.f32 0.0, %v3494
        %3496 = vdwg.mxu0
        %v3497 = vadd.f32 %v3460, %v3495
        %s3498 = scalar_lea.vmem %s11, 128
        %v3499 = vld [vmem:[%s3498] sm:$0xff]
        %v3500 = vld [vmem:[%s3498 + $0x8] sm:$0xff]
        %v3501 = vld [vmem:[%s3498 + $0x10] sm:$0xff]
        %v3502 = vld [vmem:[%s3498 + $0x18] sm:$0xff]
        %v3503 = vld [vmem:[%s3498 + $0x20] sm:$0xff]
        %v3504 = vld [vmem:[%s3498 + $0x28] sm:$0xff]
        %v3505 = vld [vmem:[%s3498 + $0x30] sm:$0xff]
        %v3506 = vld [vmem:[%s3498 + $0x38] sm:$0xff]
        %v3507 = vld [vmem:[%s3498 + $0x40] sm:$0xff]
        %v3508 = vld [vmem:[%s3498 + $0x48] sm:$0xff]
        %v3509 = vld [vmem:[%s3498 + $0x50] sm:$0xff]
        %v3510 = vld [vmem:[%s3498 + $0x58] sm:$0xff]
        %v3511 = vld [vmem:[%s3498 + $0x60] sm:$0xff]
        %v3512 = vld [vmem:[%s3498 + $0x68] sm:$0xff]
        %v3513 = vld [vmem:[%s3498 + $0x70] sm:$0xff]
        %v3514 = vld [vmem:[%s3498 + $0x78] sm:$0xff]
        %v3516 = vrot.slane %v3449, 1
        %3518 = vmatpush.msra.mxu0 %v3514
        %3519 = vmatpush.msra.mxu0 %v3513
        %3520 = vmatpush.msra.mxu0 %v3512
        %3521 = vmatpush.msra.mxu0 %v3511
        %3522 = vmatpush.msra.mxu0 %v3510
        %3523 = vmatpush.msra.mxu0 %v3509
        %3524 = vmatpush.msra.mxu0 %v3508
        %3525 = vmatpush.msra.mxu0 %v3507
        %3526 = vmatpush.msra.mxu0 %v3506
        %3527 = vmatpush.msra.mxu0 %v3505
        %3528 = vmatpush.msra.mxu0 %v3504
        %3529 = vmatpush.msra.mxu0 %v3503
        %3530 = vmatpush.msra.mxu0 %v3502
        %3531 = vmatpush.msra.mxu0 %v3501
        %3532 = vmatpush.msra.mxu0 %v3500
        %3533 = vmatpush.msra.mxu0 %v3499
        %3534 = vmatmul.f32.gmra.mxu0 %v3516
        %v3535 = vpop.f32.mrf.mxu0
        %v3536 = vadd.f32 0.0, %v3535
        %3537 = vdwg.mxu0
        %v3538 = vadd.f32 %v3497, %v3536
        %v3539 = vmax.f32 %v3538, 0.0
        %v3540 = vld [vmem:[#allocation8] sm:$0xff]
        %v3541 = vld [vmem:[#allocation8 + $0x8] sm:$0xff]
        %v3542 = vld [vmem:[#allocation8 + $0x10] sm:$0xff]
        %v3543 = vld [vmem:[#allocation8 + $0x18] sm:$0xff]
        %v3544 = vld [vmem:[#allocation8 + $0x20] sm:$0xff]
        %v3545 = vld [vmem:[#allocation8 + $0x28] sm:$0xff]
        %v3546 = vld [vmem:[#allocation8 + $0x30] sm:$0xff]
        %v3547 = vld [vmem:[#allocation8 + $0x38] sm:$0xff]
        %v3548 = vld [vmem:[#allocation8 + $0x40] sm:$0xff]
        %v3549 = vld [vmem:[#allocation8 + $0x48] sm:$0xff]
        %v3550 = vld [vmem:[#allocation8 + $0x50] sm:$0xff]
        %v3551 = vld [vmem:[#allocation8 + $0x58] sm:$0xff]
        %v3552 = vld [vmem:[#allocation8 + $0x60] sm:$0xff]
        %v3553 = vld [vmem:[#allocation8 + $0x68] sm:$0xff]
        %v3554 = vld [vmem:[#allocation8 + $0x70] sm:$0xff]
        %v3555 = vld [vmem:[#allocation8 + $0x78] sm:$0xff]
        %v3556 = vld [vmem:[%s15] sm:$0x1]
        %3557 = vmatpush.msra.mxu0 %v3555
        %3558 = vmatpush.msra.mxu0 %v3554
        %3559 = vmatpush.msra.mxu0 %v3553
        %3560 = vmatpush.msra.mxu0 %v3552
        %3561 = vmatpush.msra.mxu0 %v3551
        %3562 = vmatpush.msra.mxu0 %v3550
        %3563 = vmatpush.msra.mxu0 %v3549
        %3564 = vmatpush.msra.mxu0 %v3548
        %3565 = vmatpush.msra.mxu0 %v3547
        %3566 = vmatpush.msra.mxu0 %v3546
        %3567 = vmatpush.msra.mxu0 %v3545
        %3568 = vmatpush.msra.mxu0 %v3544
        %3569 = vmatpush.msra.mxu0 %v3543
        %3570 = vmatpush.msra.mxu0 %v3542
        %3571 = vmatpush.msra.mxu0 %v3541
        %3572 = vmatpush.msra.mxu0 %v3540
        %3573 = vmatmul.f32.gmra.mxu0 %v3539
        %v3574 = vpop.f32.mrf.mxu0
        %v3575 = vadd.f32 %v3556, %v3574
        %3576 = vdwg.mxu0
        %3577 = vst [vmem:[%s591] sm:$0x1] %v3575
        %s3578 = sand.u32 %s387, 1
        %s3579 = scalar_lea.sflag [#allocation4], %s3578
        %s3580 = sand.u32 %s387, 1
        %s3581 = scalar_lea.vmem [#allocation10], %s3580
        // Predicated region
        $region101: #{tpu_custom_call.1} parent=83 // pred_check
          %p3582 = pneg %p397
        $region102: #{tpu_custom_call.1} parent=83 // pred_check_branch
          %3584 = sbr.rel (%p3582) target = $region104
        $region103: #{tpu_custom_call.1} parent=83 // pred_region
          %3586 = vsyncadd %s3579, 0
          %s3587 = scalar_lea.hbm %s16, %s33
          %s3589 = sshll.u32 %s3581, 4
          %s3590 = int_to_ptr.vmem [resolvable:$true] %s3589
          %s3591 = sshll.u32 %s3587, 4
          %s3592 = int_to_ptr.hbm [resolvable:$true] %s3591
          %3594 = dma.vmem_to_hbm [thread:$0]  %s3590, 16, %s3592, %s3579
        $region104: #{tpu_custom_call.1} parent=83 // pred_fallthru
          _
      $region84: #{tpu_custom_call.1} parent=5 // pred_fallthru
        _
      %p3595 = scmp.le.s32.totalorder 2, %s28
      // Predicated region
      $region105: #{tpu_custom_call.1} parent=5 // pred_check
        %p3596 = pneg %p3595
      $region106: #{tpu_custom_call.1} parent=5 // pred_check_branch
        %3598 = sbr.rel (%p3596) target = $region108
      $region107: #{tpu_custom_call.1} parent=5 // pred_region
        %s3599 = ssub.s32 %s28, 2
        // Predicated region
        $region109: #{tpu_custom_call.1} parent=107 // pred_check
          %p3600 = pneg %p403
        $region110: #{tpu_custom_call.1} parent=107 // pred_check_branch
          %3602 = sbr.rel (%p3600) target = $region112
        $region111: #{tpu_custom_call.1} parent=107 // pred_region
          %s3603 = sand.u32 %s388, 1
          %s3604 = scalar_lea.sflag [#allocation4], %s3603
          %s3605 = sand.u32 %s388, 1
          %s3606 = scalar_lea.vmem [#allocation10], %s3605
          %3608 = dma.done %s3604, 16
        $region112: #{tpu_custom_call.1} parent=107 // pred_fallthru
          _
      $region108: #{tpu_custom_call.1} parent=5 // pred_fallthru
        _
    $region6: #{tpu_custom_call.1} parent=1 // loop_footer
      %s32 = sadd.s32 1, %s28
    $region7: #{tpu_custom_call.1} parent=1 // loop_footer_branch
      %27 = sbr.rel target = $region3
    $region8: #{tpu_custom_call.1} parent=1 // loop_exit
      _
    %3609 = vsyncpa [#allocation3], 1
    %s3610 = scalar_lea.sflag [#allocation3], 1
    %3611 = vsyncpa %s3610, 1
    %3612 = vsyncpa [#allocation6], 1
    %3613 = vsyncpa [#allocation9], 1
    %3614 = vsyncpa [#allocation4], 1
    %s3615 = scalar_lea.sflag [#allocation4], 1
    %3616 = vsyncpa %s3615, 1

</llo_original>
